<compile_context>
chip_gen: v6e
topology: v6e:2x2x1
jax: 0.10.0
libtpu: 0.0.40
codegen_flags: <defaults>
</compile_context>

<pallas_src>
import math
import functools

import jax
import jax.numpy as jnp
from jax import lax
from jax.experimental import pallas as pl
from jax.experimental.pallas import tpu as pltpu


# ----------------------------------------------------------------------------
# Kernel 1: fused Q/K/V projections (scale folded into q, K/V stacked)
# ----------------------------------------------------------------------------
def _qkv_proj_kernel(q_ref, k_ref, v_ref, wq_ref, bq_ref, wk_ref, bk_ref,
                     wv_ref, bv_ref, qo_ref, kvo_ref, *, scale):
    q = q_ref[0]                                           # (L, D)
    k = k_ref[0]                                           # (S, D)
    v = v_ref[0]                                           # (S, D)

    qp = jnp.dot(q, wq_ref[...], preferred_element_type=jnp.float32) + bq_ref[...]
    qo_ref[0] = (qp * scale).astype(qo_ref.dtype)          # fold 1/sqrt(hr) here

    kp = jnp.dot(k, wk_ref[...], preferred_element_type=jnp.float32) + bk_ref[...]
    kvo_ref[0, 0] = kp.astype(kvo_ref.dtype)

    vp = jnp.dot(v, wv_ref[...], preferred_element_type=jnp.float32) + bv_ref[...]
    kvo_ref[0, 1] = vp.astype(kvo_ref.dtype)


def qkv_projection(Q, K, V, wq, bq, wk, bk, wv, bv, scale):
    bs, L, D = Q.shape
    S = K.shape[1]
    return pl.pallas_call(
        functools.partial(_qkv_proj_kernel, scale=scale),
        out_shape=(
            jax.ShapeDtypeStruct((bs, L, D), Q.dtype),
            jax.ShapeDtypeStruct((bs, 2, S, D), Q.dtype),
        ),
        grid=(bs,),
        in_specs=[
            pl.BlockSpec((1, L, D), lambda b: (b, 0, 0)),
            pl.BlockSpec((1, S, D), lambda b: (b, 0, 0)),
            pl.BlockSpec((1, S, D), lambda b: (b, 0, 0)),
            pl.BlockSpec((D, D), lambda b: (0, 0)),
            pl.BlockSpec((1, D), lambda b: (0, 0)),
            pl.BlockSpec((D, D), lambda b: (0, 0)),
            pl.BlockSpec((1, D), lambda b: (0, 0)),
            pl.BlockSpec((D, D), lambda b: (0, 0)),
            pl.BlockSpec((1, D), lambda b: (0, 0)),
        ],
        out_specs=(
            pl.BlockSpec((1, L, D), lambda b: (b, 0, 0)),
            pl.BlockSpec((1, 2, S, D), lambda b: (b, 0, 0, 0)),
        ),
        compiler_params=pltpu.CompilerParams(dimension_semantics=("parallel",)),
    )(Q, K, V, wq, bq.reshape(1, D), wk, bk.reshape(1, D), wv, bv.reshape(1, D))


# ----------------------------------------------------------------------------
# Kernel 2: cross attention, all heads of one batch element per grid step
# ----------------------------------------------------------------------------
def _cross_attn_kernel(qt_ref, kv_ref, f2_ref, o_ref, *, a_h):
    qt = qt_ref[0]            # (a_h, Lr, hr)     -- already scaled by 1/sqrt(hr)
    kv = kv_ref[0]            # (2*a_h, hr, k_r)  -- K and V stacked on batch dim
    f2 = f2_ref[...]          # (2*a_h, k_r, rank)

    # single stacked matmul projects both K and V by the factor tensor
    kvp = jnp.einsum("bhk,bkr->bhr", kv, f2,
                     preferred_element_type=jnp.float32)   # (2*a_h, hr, rank)
    kp = kvp[:a_h]                                          # (a_h, hr, rank)
    vp = kvp[a_h:]                                          # (a_h, hr, rank)

    # scores: contract over hr (canonical batched matmul)
    s = jnp.einsum("alh,ahr->alr", qt, kp,
                   preferred_element_type=jnp.float32)      # (a_h, Lr, rank)
    s = s - jnp.max(s, axis=-1, keepdims=True)
    e = jnp.exp(s)
    attn = e * pl.reciprocal(jnp.sum(e, axis=-1, keepdims=True), approx=True)

    # attn @ vp^T per head (rhs-transposed batched matmul)
    out = jnp.einsum("alr,ahr->alh", attn, vp,
                     preferred_element_type=jnp.float32)    # (a_h, Lr, hr)
    o_ref[0] = out.astype(o_ref.dtype)


def cross_attention(qt, kv4, factor2):
    bs, a_h, Lr, hr = qt.shape
    two_ah = kv4.shape[1]
    k_r = kv4.shape[3]
    rank = factor2.shape[-1]
    return pl.pallas_call(
        functools.partial(_cross_attn_kernel, a_h=a_h),
        out_shape=jax.ShapeDtypeStruct((bs, a_h, Lr, hr), qt.dtype),
        grid=(bs,),
        in_specs=[
            pl.BlockSpec((1, a_h, Lr, hr), lambda b: (b, 0, 0, 0)),
            pl.BlockSpec((1, two_ah, hr, k_r), lambda b: (b, 0, 0, 0)),
            pl.BlockSpec((two_ah, k_r, rank), lambda b: (0, 0, 0)),
        ],
        out_specs=pl.BlockSpec((1, a_h, Lr, hr), lambda b: (b, 0, 0, 0)),
        compiler_params=pltpu.CompilerParams(dimension_semantics=("parallel",)),
    )(qt, kv4, factor2)


# ----------------------------------------------------------------------------
# Kernel 3: fused FeedForward + residual add + LayerNorm (L-tiled)
# ----------------------------------------------------------------------------
def _ffn_ln_kernel(x_ref, r_ref, w1_ref, b1_ref, w2_ref, b2_ref, g_ref, be_ref,
                   o_ref, *, eps):
    x = x_ref[0]                                            # (TL, D)
    h = jnp.dot(x, w1_ref[...], preferred_element_type=jnp.float32) + b1_ref[...]
    h = jnp.maximum(h, 0.0)                                 # ReLU
    y = jnp.dot(h, w2_ref[...], preferred_element_type=jnp.float32) + b2_ref[...]
    z = y + r_ref[0]                                        # residual add
    mean = jnp.mean(z, axis=-1, keepdims=True)
    c = z - mean
    var = jnp.mean(c * c, axis=-1, keepdims=True)
    o_ref[0] = (c * lax.rsqrt(var + eps) * g_ref[...] + be_ref[...]).astype(o_ref.dtype)


def ffn_residual_layernorm(x, residual, w1, b1, w2, b2, gamma, beta, eps=1e-5):
    bs, L, D = x.shape
    H = w1.shape[1]
    TL = 256 if (L > 256 and L % 256 == 0) else L           # L-tiling for large L
    nt = pl.cdiv(L, TL)
    return pl.pallas_call(
        functools.partial(_ffn_ln_kernel, eps=eps),
        out_shape=jax.ShapeDtypeStruct((bs, L, D), x.dtype),
        grid=(bs, nt),
        in_specs=[
            pl.BlockSpec((1, TL, D), lambda b, t: (b, t, 0)),
            pl.BlockSpec((1, TL, D), lambda b, t: (b, t, 0)),
            pl.BlockSpec((D, H), lambda b, t: (0, 0)),
            pl.BlockSpec((1, H), lambda b, t: (0, 0)),
            pl.BlockSpec((H, D), lambda b, t: (0, 0)),
            pl.BlockSpec((1, D), lambda b, t: (0, 0)),
            pl.BlockSpec((1, D), lambda b, t: (0, 0)),
            pl.BlockSpec((1, D), lambda b, t: (0, 0)),
        ],
        out_specs=pl.BlockSpec((1, TL, D), lambda b, t: (b, t, 0)),
        compiler_params=pltpu.CompilerParams(
            dimension_semantics=("parallel", "parallel")),
    )(x, residual, w1, b1.reshape(1, H), w2, b2.reshape(1, D),
      gamma.reshape(1, D), beta.reshape(1, D))


# ----------------------------------------------------------------------------
# Block_Cross forward (only free reshapes + one small transpose between kernels)
# ----------------------------------------------------------------------------
def block_cross_forward(params, Q, K, V, *, head, rank, k_dim):
    bs, L, D = Q.shape
    a_h = D // head
    hr = head * rank
    k_r = k_dim // rank
    Lr = (L * D) // (a_h * hr)                              # == L // rank
    scale = 1.0 / math.sqrt(hr)

    q_p, kv_p = qkv_projection(Q, K, V,
                               params["wq"], params["bq"],
                               params["wk"], params["bk"],
                               params["wv"], params["bv"], scale)

    # torch .view semantics == row-major reshape (free).  The per-head
    # (hr, Lr) -> (Lr, hr) swap is the one remaining XLA transpose.
    qt = q_p.reshape(bs, a_h, hr, Lr).swapaxes(2, 3)        # (bs, a_h, Lr, hr)
    kv4 = kv_p.reshape(bs, 2 * a_h, hr, k_r)                # free reshape
    factor2 = jnp.concatenate([params["factor"], params["factor"]], axis=0)

    attn4 = cross_attention(qt, kv4, factor2)               # (bs, a_h, Lr, hr)
    attn = attn4.reshape(bs, L, D)                          # free reshape

    return ffn_residual_layernorm(attn, Q,
                                  params["w1"], params["b1"],
                                  params["w2"], params["b2"],
                                  params["gamma"], params["beta"])


# ----------------------------------------------------------------------------
# Pure-JAX reference (mirrors the PyTorch forward, eval mode)
# ----------------------------------------------------------------------------
def block_cross_reference(params, Q, K, V, *, head, rank, k_dim):
    bs, L, D = Q.shape
    a_h = D // head
    hr = head * rank
    k_r = k_dim // rank

    def lin(x, w, b):
        return x @ w + b

    q = lin(Q, params["wq"], params["bq"]).reshape(bs, a_h, hr, -1)
    k = jnp.matmul(lin(K, params["wk"], params["bk"]).reshape(bs, a_h, hr, k_r),
                   params["factor"][None])
    v = jnp.matmul(lin(V, params["wv"], params["bv"]).reshape(bs, a_h, hr, k_r),
                   params["factor"][None])
    scores = jnp.matmul(jnp.swapaxes(q, -2, -1), k) / math.sqrt(hr)
    attn = jax.nn.softmax(scores, axis=-1)
    out = jnp.matmul(attn, jnp.swapaxes(v, -2, -1)).reshape(bs, -1, D)

    h = jnp.maximum(out @ params["w1"] + params["b1"], 0.0)
    y = h @ params["w2"] + params["b2"]

    x = y + Q
    mean = x.mean(-1, keepdims=True)
    var = ((x - mean) ** 2).mean(-1, keepdims=True)
    return (x - mean) / jnp.sqrt(var + 1e-5) * params["gamma"] + params["beta"]


# ----------------------------------------------------------------------------
# Parameter init (deterministic, mimics the PyTorch module's shapes)
# ----------------------------------------------------------------------------
def init_params(key, attn_dim, k_dim, head, rank):
    a_h = attn_dim // head
    k_r = k_dim // rank
    ks = jax.random.split(key, 8)

    def init_linear(k, din, dout):
        kw, kb = jax.random.split(k)
        bound = 1.0 / math.sqrt(din)
        w = jax.random.uniform(kw, (din, dout), jnp.float32, -bound, bound)
        b = jax.random.uniform(kb, (dout,), jnp.float32, -bound, bound)
        return w, b

    wq, bq = init_linear(ks[0], attn_dim, attn_dim)
    wk, bk = init_linear(ks[1], attn_dim, attn_dim)
    wv, bv = init_linear(ks[2], attn_dim, attn_dim)
    w1, b1 = init_linear(ks[3], attn_dim, 2 * attn_dim)
    w2, b2 = init_linear(ks[4], 2 * attn_dim, attn_dim)

    # xavier_normal_ for factor of shape (1, a_h, k_r, rank)
    std = math.sqrt(2.0 / (k_r + rank))
    factor = std * jax.random.normal(ks[5], (a_h, k_r, rank), jnp.float32)

    return {
        "wq": wq, "bq": bq, "wk": wk, "bk": bk, "wv": wv, "bv": bv,
        "factor": factor,
        "w1": w1, "b1": b1, "w2": w2, "b2": b2,
        "gamma": jnp.ones((attn_dim,), jnp.float32),
        "beta": jnp.zeros((attn_dim,), jnp.float32),
    }


if __name__ == "__main__":
    # small, consistent shapes:
    #   attn_dim=32, head=4 -> a_h=8 ; rank=4, k_dim=16 -> k_r=4
    #   Q: (bs, L, attn_dim) with L divisible by rank
    #   K, V: (bs, k_dim, attn_dim)  (sequence length forced by the .view)
    attn_dim, k_dim, head, rank = 32, 16, 4, 4
    bs, L = 2, 8
    S = k_dim  # 16

    root = jax.random.PRNGKey(0)
    kparam, kq, kk, kv = jax.random.split(root, 4)
    params = init_params(kparam, attn_dim, k_dim, head, rank)

    Q = jax.random.normal(kq, (bs, L, attn_dim), jnp.float32)
    K = jax.random.normal(kk, (bs, S, attn_dim), jnp.float32)
    V = jax.random.normal(kv, (bs, S, attn_dim), jnp.float32)

    fwd = jax.jit(functools.partial(block_cross_forward,
                                    head=head, rank=rank, k_dim=k_dim))
    out = jax.block_until_ready(fwd(params, Q, K, V))
    ref = jax.block_until_ready(
        block_cross_reference(params, Q, K, V, head=head, rank=rank, k_dim=k_dim))

    assert out.shape == (bs, L, attn_dim)
    max_err = float(jnp.max(jnp.abs(out - ref)))
    assert jnp.allclose(out, ref, atol=2e-2, rtol=2e-2), max_err
    print("KERNEL_OK")
</pallas_src>

<mosaic_0001>
module attributes {stable_mosaic.version = 11 : i64} {
  func.func @_qkv_proj_kernel(%arg0: i32, %arg1: memref<1x8x32xf32, #tpu.memory_space<vmem>>, %arg2: memref<1x16x32xf32, #tpu.memory_space<vmem>>, %arg3: memref<1x16x32xf32, #tpu.memory_space<vmem>>, %arg4: memref<32x32xf32, #tpu.memory_space<vmem>>, %arg5: memref<1x32xf32, #tpu.memory_space<vmem>>, %arg6: memref<32x32xf32, #tpu.memory_space<vmem>>, %arg7: memref<1x32xf32, #tpu.memory_space<vmem>>, %arg8: memref<32x32xf32, #tpu.memory_space<vmem>>, %arg9: memref<1x32xf32, #tpu.memory_space<vmem>>, %arg10: memref<1x8x32xf32, #tpu.memory_space<vmem>>, %arg11: memref<1x2x16x32xf32, #tpu.memory_space<vmem>>) attributes {dimension_semantics = [#tpu.dimension_semantics<parallel>], iteration_bounds = array<i64: 2>, scalar_prefetch = 0 : i64, scratch_operands = 0 : i64, tpu.core_type = #tpu.core_type<tc>, window_params = [{transform_indices = @transform_0, window_bounds = array<i64: 1, 8, 32>}, {transform_indices = @transform_1, window_bounds = array<i64: 1, 16, 32>}, {transform_indices = @transform_2, window_bounds = array<i64: 1, 16, 32>}, {pipeline_mode = #tpu.pipeline_mode<synchronous>, transform_indices = @transform_3, window_bounds = array<i64: 32, 32>}, {pipeline_mode = #tpu.pipeline_mode<synchronous>, transform_indices = @transform_4, window_bounds = array<i64: 1, 32>}, {pipeline_mode = #tpu.pipeline_mode<synchronous>, transform_indices = @transform_5, window_bounds = array<i64: 32, 32>}, {pipeline_mode = #tpu.pipeline_mode<synchronous>, transform_indices = @transform_6, window_bounds = array<i64: 1, 32>}, {pipeline_mode = #tpu.pipeline_mode<synchronous>, transform_indices = @transform_7, window_bounds = array<i64: 32, 32>}, {pipeline_mode = #tpu.pipeline_mode<synchronous>, transform_indices = @transform_8, window_bounds = array<i64: 1, 32>}, {transform_indices = @transform_9, window_bounds = array<i64: 1, 8, 32>}, {transform_indices = @transform_10, window_bounds = array<i64: 1, 2, 16, 32>}]} {
    %c0 = arith.constant 0 : index
    %c0_0 = arith.constant 0 : index
    %c0_1 = arith.constant 0 : index
    %0 = vector.load %arg1[%c0, %c0_0, %c0_1] : memref<1x8x32xf32, #tpu.memory_space<vmem>>, vector<1x8x32xf32>
    %1 = vector.shape_cast %0 : vector<1x8x32xf32> to vector<8x32xf32>
    %c0_2 = arith.constant 0 : index
    %c0_3 = arith.constant 0 : index
    %c0_4 = arith.constant 0 : index
    %2 = vector.load %arg2[%c0_2, %c0_3, %c0_4] : memref<1x16x32xf32, #tpu.memory_space<vmem>>, vector<1x16x32xf32>
    %3 = vector.shape_cast %2 : vector<1x16x32xf32> to vector<16x32xf32>
    %c0_5 = arith.constant 0 : index
    %c0_6 = arith.constant 0 : index
    %c0_7 = arith.constant 0 : index
    %4 = vector.load %arg3[%c0_5, %c0_6, %c0_7] : memref<1x16x32xf32, #tpu.memory_space<vmem>>, vector<1x16x32xf32>
    %5 = vector.shape_cast %4 : vector<1x16x32xf32> to vector<16x32xf32>
    %c0_8 = arith.constant 0 : index
    %c0_9 = arith.constant 0 : index
    %6 = vector.load %arg4[%c0_8, %c0_9] : memref<32x32xf32, #tpu.memory_space<vmem>>, vector<32x32xf32>
    %cst = arith.constant dense<0.000000e+00> : vector<8x32xf32>
    %7 = tpu.matmul %1, %6, %cst {dimension_numbers = #tpu.dot_dimension_numbers<[1], [0], [0], [1], [0, 0, 1, 1], [], []>} : vector<8x32xf32>, vector<32x32xf32>, vector<8x32xf32> -> vector<8x32xf32>
    %c0_10 = arith.constant 0 : index
    %c0_11 = arith.constant 0 : index
    %8 = vector.load %arg5[%c0_10, %c0_11] : memref<1x32xf32, #tpu.memory_space<vmem>>, vector<1x32xf32>
    %9 = vector.broadcast %8 : vector<1x32xf32> to vector<8x32xf32>
    %10 = arith.addf %7, %9 : vector<8x32xf32>
    %cst_12 = arith.constant 2.500000e-01 : f32
    %11 = vector.broadcast %cst_12 : f32 to vector<8x32xf32>
    %12 = arith.mulf %10, %11 : vector<8x32xf32>
    %c0_13 = arith.constant 0 : index
    %c0_14 = arith.constant 0 : index
    %c0_15 = arith.constant 0 : index
    %13 = vector.load %arg10[%c0_13, %c0_14, %c0_15] : memref<1x8x32xf32, #tpu.memory_space<vmem>>, vector<1x8x32xf32>
    %14 = vector.shape_cast %13 : vector<1x8x32xf32> to vector<8x32xf32>
    %15 = vector.shape_cast %12 : vector<8x32xf32> to vector<1x8x32xf32>
    tpu.vector_store %arg10[%c0_13, %c0_14, %c0_15], %15 {strides = array<i32>} : memref<1x8x32xf32, #tpu.memory_space<vmem>>, vector<1x8x32xf32>,
    %c0_16 = arith.constant 0 : index
    %c0_17 = arith.constant 0 : index
    %16 = vector.load %arg6[%c0_16, %c0_17] : memref<32x32xf32, #tpu.memory_space<vmem>>, vector<32x32xf32>
    %cst_18 = arith.constant dense<0.000000e+00> : vector<16x32xf32>
    %17 = tpu.matmul %3, %16, %cst_18 {dimension_numbers = #tpu.dot_dimension_numbers<[1], [0], [0], [1], [0, 0, 1, 1], [], []>} : vector<16x32xf32>, vector<32x32xf32>, vector<16x32xf32> -> vector<16x32xf32>
    %c0_19 = arith.constant 0 : index
    %c0_20 = arith.constant 0 : index
    %18 = vector.load %arg7[%c0_19, %c0_20] : memref<1x32xf32, #tpu.memory_space<vmem>>, vector<1x32xf32>
    %19 = vector.broadcast %18 : vector<1x32xf32> to vector<16x32xf32>
    %20 = arith.addf %17, %19 : vector<16x32xf32>
    %c0_21 = arith.constant 0 : index
    %c0_22 = arith.constant 0 : index
    %c0_23 = arith.constant 0 : index
    %c0_24 = arith.constant 0 : index
    %21 = vector.load %arg11[%c0_21, %c0_22, %c0_23, %c0_24] : memref<1x2x16x32xf32, #tpu.memory_space<vmem>>, vector<1x1x16x32xf32>
    %22 = vector.shape_cast %21 : vector<1x1x16x32xf32> to vector<16x32xf32>
    %23 = vector.shape_cast %20 : vector<16x32xf32> to vector<1x1x16x32xf32>
    tpu.vector_store %arg11[%c0_21, %c0_22, %c0_23, %c0_24], %23 {strides = array<i32>} : memref<1x2x16x32xf32, #tpu.memory_space<vmem>>, vector<1x1x16x32xf32>,
    %c0_25 = arith.constant 0 : index
    %c0_26 = arith.constant 0 : index
    %24 = vector.load %arg8[%c0_25, %c0_26] : memref<32x32xf32, #tpu.memory_space<vmem>>, vector<32x32xf32>
    %cst_27 = arith.constant dense<0.000000e+00> : vector<16x32xf32>
    %25 = tpu.matmul %5, %24, %cst_27 {dimension_numbers = #tpu.dot_dimension_numbers<[1], [0], [0], [1], [0, 0, 1, 1], [], []>} : vector<16x32xf32>, vector<32x32xf32>, vector<16x32xf32> -> vector<16x32xf32>
    %c0_28 = arith.constant 0 : index
    %c0_29 = arith.constant 0 : index
    %26 = vector.load %arg9[%c0_28, %c0_29] : memref<1x32xf32, #tpu.memory_space<vmem>>, vector<1x32xf32>
    %27 = vector.broadcast %26 : vector<1x32xf32> to vector<16x32xf32>
    %28 = arith.addf %25, %27 : vector<16x32xf32>
    %c0_30 = arith.constant 0 : index
    %c1 = arith.constant 1 : index
    %c0_31 = arith.constant 0 : index
    %c0_32 = arith.constant 0 : index
    %29 = vector.load %arg11[%c0_30, %c1, %c0_31, %c0_32] : memref<1x2x16x32xf32, #tpu.memory_space<vmem>>, vector<1x1x16x32xf32>
    %30 = vector.shape_cast %29 : vector<1x1x16x32xf32> to vector<16x32xf32>
    %31 = vector.shape_cast %28 : vector<16x32xf32> to vector<1x1x16x32xf32>
    tpu.vector_store %arg11[%c0_30, %c1, %c0_31, %c0_32], %31 {strides = array<i32>} : memref<1x2x16x32xf32, #tpu.memory_space<vmem>>, vector<1x1x16x32xf32>,
    return
  }
  func.func @transform_0(%arg0: i32) -> (i32, i32, i32) {
    %c0_i32 = arith.constant 0 : i32
    %c0_i32_0 = arith.constant 0 : i32
    %c0_i32_1 = arith.constant 0 : i32
    return %arg0, %c0_i32, %c0_i32_0 : i32, i32, i32
  }
  func.func @transform_1(%arg0: i32) -> (i32, i32, i32) {
    %c0_i32 = arith.constant 0 : i32
    %c0_i32_0 = arith.constant 0 : i32
    %c0_i32_1 = arith.constant 0 : i32
    return %arg0, %c0_i32, %c0_i32_0 : i32, i32, i32
  }
  func.func @transform_2(%arg0: i32) -> (i32, i32, i32) {
    %c0_i32 = arith.constant 0 : i32
    %c0_i32_0 = arith.constant 0 : i32
    %c0_i32_1 = arith.constant 0 : i32
    return %arg0, %c0_i32, %c0_i32_0 : i32, i32, i32
  }
  func.func @transform_3(%arg0: i32) -> (i32, i32) {
    %c0_i32 = arith.constant 0 : i32
    %c0_i32_0 = arith.constant 0 : i32
    %c0_i32_1 = arith.constant 0 : i32
    return %c0_i32, %c0_i32_0 : i32, i32
  }
  func.func @transform_4(%arg0: i32) -> (i32, i32) {
    %c0_i32 = arith.constant 0 : i32
    %c0_i32_0 = arith.constant 0 : i32
    %c0_i32_1 = arith.constant 0 : i32
    return %c0_i32, %c0_i32_0 : i32, i32
  }
  func.func @transform_5(%arg0: i32) -> (i32, i32) {
    %c0_i32 = arith.constant 0 : i32
    %c0_i32_0 = arith.constant 0 : i32
    %c0_i32_1 = arith.constant 0 : i32
    return %c0_i32, %c0_i32_0 : i32, i32
  }
  func.func @transform_6(%arg0: i32) -> (i32, i32) {
    %c0_i32 = arith.constant 0 : i32
    %c0_i32_0 = arith.constant 0 : i32
    %c0_i32_1 = arith.constant 0 : i32
    return %c0_i32, %c0_i32_0 : i32, i32
  }
  func.func @transform_7(%arg0: i32) -> (i32, i32) {
    %c0_i32 = arith.constant 0 : i32
    %c0_i32_0 = arith.constant 0 : i32
    %c0_i32_1 = arith.constant 0 : i32
    return %c0_i32, %c0_i32_0 : i32, i32
  }
  func.func @transform_8(%arg0: i32) -> (i32, i32) {
    %c0_i32 = arith.constant 0 : i32
    %c0_i32_0 = arith.constant 0 : i32
    %c0_i32_1 = arith.constant 0 : i32
    return %c0_i32, %c0_i32_0 : i32, i32
  }
  func.func @transform_9(%arg0: i32) -> (i32, i32, i32) {
    %c0_i32 = arith.constant 0 : i32
    %c0_i32_0 = arith.constant 0 : i32
    %c0_i32_1 = arith.constant 0 : i32
    return %arg0, %c0_i32, %c0_i32_0 : i32, i32, i32
  }
  func.func @transform_10(%arg0: i32) -> (i32, i32, i32, i32) {
    %c0_i32 = arith.constant 0 : i32
    %c0_i32_0 = arith.constant 0 : i32
    %c0_i32_1 = arith.constant 0 : i32
    %c0_i32_2 = arith.constant 0 : i32
    return %arg0, %c0_i32, %c0_i32_0, %c0_i32_1 : i32, i32, i32, i32
  }
}

module attributes {stable_mosaic.version = 11 : i64} {
  func.func @_cross_attn_kernel(%arg0: i32, %arg1: memref<1x8x2x16xf32, #tpu.memory_space<vmem>>, %arg2: memref<1x16x16x4xf32, #tpu.memory_space<vmem>>, %arg3: memref<16x4x4xf32, #tpu.memory_space<vmem>>, %arg4: memref<1x8x2x16xf32, #tpu.memory_space<vmem>>) attributes {dimension_semantics = [#tpu.dimension_semantics<parallel>], iteration_bounds = array<i64: 2>, scalar_prefetch = 0 : i64, scratch_operands = 0 : i64, tpu.core_type = #tpu.core_type<tc>, window_params = [{transform_indices = @transform_0, window_bounds = array<i64: 1, 8, 2, 16>}, {transform_indices = @transform_1, window_bounds = array<i64: 1, 16, 16, 4>}, {pipeline_mode = #tpu.pipeline_mode<synchronous>, transform_indices = @transform_2, window_bounds = array<i64: 16, 4, 4>}, {transform_indices = @transform_3, window_bounds = array<i64: 1, 8, 2, 16>}]} {
    %c0 = arith.constant 0 : index
    %c0_0 = arith.constant 0 : index
    %c0_1 = arith.constant 0 : index
    %c0_2 = arith.constant 0 : index
    %0 = vector.load %arg1[%c0, %c0_0, %c0_1, %c0_2] : memref<1x8x2x16xf32, #tpu.memory_space<vmem>>, vector<1x8x2x16xf32>
    %1 = vector.shape_cast %0 : vector<1x8x2x16xf32> to vector<8x2x16xf32>
    %c0_3 = arith.constant 0 : index
    %c0_4 = arith.constant 0 : index
    %c0_5 = arith.constant 0 : index
    %c0_6 = arith.constant 0 : index
    %2 = vector.load %arg2[%c0_3, %c0_4, %c0_5, %c0_6] : memref<1x16x16x4xf32, #tpu.memory_space<vmem>>, vector<1x16x16x4xf32>
    %3 = vector.shape_cast %2 : vector<1x16x16x4xf32> to vector<16x16x4xf32>
    %c0_7 = arith.constant 0 : index
    %c0_8 = arith.constant 0 : index
    %c0_9 = arith.constant 0 : index
    %4 = vector.load %arg3[%c0_7, %c0_8, %c0_9] : memref<16x4x4xf32, #tpu.memory_space<vmem>>, vector<16x4x4xf32>
    "tpu.trace_start"() <{level = 10 : i32, message = "bhk,bkr->bhr"}> : () -> ()
    %cst = arith.constant dense<0.000000e+00> : vector<16x16x4xf32>
    %5 = tpu.matmul %3, %4, %cst {dimension_numbers = #tpu.dot_dimension_numbers<[2], [1], [1], [2], [0, 0, 0, 1, 1, 2], [0], [0]>} : vector<16x16x4xf32>, vector<16x4x4xf32>, vector<16x16x4xf32> -> vector<16x16x4xf32>
    "tpu.trace_stop"() : () -> ()
    %6 = vector.extract_strided_slice %5 {offsets = [0, 0, 0], sizes = [8, 16, 4], strides = [1, 1, 1]} : vector<16x16x4xf32> to vector<8x16x4xf32>
    %7 = vector.extract_strided_slice %5 {offsets = [8, 0, 0], sizes = [8, 16, 4], strides = [1, 1, 1]} : vector<16x16x4xf32> to vector<8x16x4xf32>
    "tpu.trace_start"() <{level = 10 : i32, message = "alh,ahr->alr"}> : () -> ()
    %cst_10 = arith.constant dense<0.000000e+00> : vector<8x2x4xf32>
    %8 = tpu.matmul %1, %6, %cst_10 {dimension_numbers = #tpu.dot_dimension_numbers<[2], [1], [1], [2], [0, 0, 0, 1, 1, 2], [0], [0]>} : vector<8x2x16xf32>, vector<8x16x4xf32>, vector<8x2x4xf32> -> vector<8x2x4xf32>
    "tpu.trace_stop"() : () -> ()
    %cst_11 = arith.constant dense<0xFF800000> : vector<8x2xf32>
    %9 = vector.multi_reduction <maximumf>, %8, %cst_11 [2] : vector<8x2x4xf32> to vector<8x2xf32>
    %10 = vector.shape_cast %9 : vector<8x2xf32> to vector<8x2x1xf32>
    %11 = vector.broadcast %10 : vector<8x2x1xf32> to vector<8x2x4xf32>
    %12 = arith.subf %8, %11 : vector<8x2x4xf32>
    %13 = math.exp %12 : vector<8x2x4xf32>
    %cst_12 = arith.constant dense<0.000000e+00> : vector<8x2xf32>
    %14 = vector.multi_reduction <add>, %13, %cst_12 [2] : vector<8x2x4xf32> to vector<8x2xf32>
    %15 = vector.shape_cast %14 : vector<8x2xf32> to vector<8x2x1xf32>
    %16 = tpu.reciprocal %15 {approx = true} : vector<8x2x1xf32> -> vector<8x2x1xf32>
    %17 = vector.broadcast %16 : vector<8x2x1xf32> to vector<8x2x4xf32>
    %18 = arith.mulf %13, %17 : vector<8x2x4xf32>
    "tpu.trace_start"() <{level = 10 : i32, message = "alr,ahr->alh"}> : () -> ()
    %cst_13 = arith.constant dense<0.000000e+00> : vector<8x2x16xf32>
    %19 = tpu.matmul %18, %7, %cst_13 {dimension_numbers = #tpu.dot_dimension_numbers<[2], [2], [1], [1], [0, 0, 0, 1, 1, 1], [0], [0]>} : vector<8x2x4xf32>, vector<8x16x4xf32>, vector<8x2x16xf32> -> vector<8x2x16xf32>
    "tpu.trace_stop"() : () -> ()
    %c0_14 = arith.constant 0 : index
    %c0_15 = arith.constant 0 : index
    %c0_16 = arith.constant 0 : index
    %c0_17 = arith.constant 0 : index
    %20 = vector.load %arg4[%c0_14, %c0_15, %c0_16, %c0_17] : memref<1x8x2x16xf32, #tpu.memory_space<vmem>>, vector<1x8x2x16xf32>
    %21 = vector.shape_cast %20 : vector<1x8x2x16xf32> to vector<8x2x16xf32>
    %22 = vector.shape_cast %19 : vector<8x2x16xf32> to vector<1x8x2x16xf32>
    tpu.vector_store %arg4[%c0_14, %c0_15, %c0_16, %c0_17], %22 {strides = array<i32>} : memref<1x8x2x16xf32, #tpu.memory_space<vmem>>, vector<1x8x2x16xf32>,
    return
  }
  func.func @transform_0(%arg0: i32) -> (i32, i32, i32, i32) {
    %c0_i32 = arith.constant 0 : i32
    %c0_i32_0 = arith.constant 0 : i32
    %c0_i32_1 = arith.constant 0 : i32
    %c0_i32_2 = arith.constant 0 : i32
    return %arg0, %c0_i32, %c0_i32_0, %c0_i32_1 : i32, i32, i32, i32
  }
  func.func @transform_1(%arg0: i32) -> (i32, i32, i32, i32) {
    %c0_i32 = arith.constant 0 : i32
    %c0_i32_0 = arith.constant 0 : i32
    %c0_i32_1 = arith.constant 0 : i32
    %c0_i32_2 = arith.constant 0 : i32
    return %arg0, %c0_i32, %c0_i32_0, %c0_i32_1 : i32, i32, i32, i32
  }
  func.func @transform_2(%arg0: i32) -> (i32, i32, i32) {
    %c0_i32 = arith.constant 0 : i32
    %c0_i32_0 = arith.constant 0 : i32
    %c0_i32_1 = arith.constant 0 : i32
    %c0_i32_2 = arith.constant 0 : i32
    return %c0_i32, %c0_i32_0, %c0_i32_1 : i32, i32, i32
  }
  func.func @transform_3(%arg0: i32) -> (i32, i32, i32, i32) {
    %c0_i32 = arith.constant 0 : i32
    %c0_i32_0 = arith.constant 0 : i32
    %c0_i32_1 = arith.constant 0 : i32
    %c0_i32_2 = arith.constant 0 : i32
    return %arg0, %c0_i32, %c0_i32_0, %c0_i32_1 : i32, i32, i32, i32
  }
}

module attributes {stable_mosaic.version = 11 : i64} {
  func.func @_ffn_ln_kernel(%arg0: i32, %arg1: i32, %arg2: memref<1x8x32xf32, #tpu.memory_space<vmem>>, %arg3: memref<1x8x32xf32, #tpu.memory_space<vmem>>, %arg4: memref<32x64xf32, #tpu.memory_space<vmem>>, %arg5: memref<1x64xf32, #tpu.memory_space<vmem>>, %arg6: memref<64x32xf32, #tpu.memory_space<vmem>>, %arg7: memref<1x32xf32, #tpu.memory_space<vmem>>, %arg8: memref<1x32xf32, #tpu.memory_space<vmem>>, %arg9: memref<1x32xf32, #tpu.memory_space<vmem>>, %arg10: memref<1x8x32xf32, #tpu.memory_space<vmem>>) attributes {dimension_semantics = [#tpu.dimension_semantics<parallel>, #tpu.dimension_semantics<parallel>], iteration_bounds = array<i64: 2, 1>, scalar_prefetch = 0 : i64, scratch_operands = 0 : i64, tpu.core_type = #tpu.core_type<tc>, window_params = [{transform_indices = @transform_0, window_bounds = array<i64: 1, 8, 32>}, {transform_indices = @transform_1, window_bounds = array<i64: 1, 8, 32>}, {pipeline_mode = #tpu.pipeline_mode<synchronous>, transform_indices = @transform_2, window_bounds = array<i64: 32, 64>}, {pipeline_mode = #tpu.pipeline_mode<synchronous>, transform_indices = @transform_3, window_bounds = array<i64: 1, 64>}, {pipeline_mode = #tpu.pipeline_mode<synchronous>, transform_indices = @transform_4, window_bounds = array<i64: 64, 32>}, {pipeline_mode = #tpu.pipeline_mode<synchronous>, transform_indices = @transform_5, window_bounds = array<i64: 1, 32>}, {pipeline_mode = #tpu.pipeline_mode<synchronous>, transform_indices = @transform_6, window_bounds = array<i64: 1, 32>}, {pipeline_mode = #tpu.pipeline_mode<synchronous>, transform_indices = @transform_7, window_bounds = array<i64: 1, 32>}, {transform_indices = @transform_8, window_bounds = array<i64: 1, 8, 32>}]} {
    %c0 = arith.constant 0 : index
    %c0_0 = arith.constant 0 : index
    %c0_1 = arith.constant 0 : index
    %0 = vector.load %arg2[%c0, %c0_0, %c0_1] : memref<1x8x32xf32, #tpu.memory_space<vmem>>, vector<1x8x32xf32>
    %1 = vector.shape_cast %0 : vector<1x8x32xf32> to vector<8x32xf32>
    %c0_2 = arith.constant 0 : index
    %c0_3 = arith.constant 0 : index
    %2 = vector.load %arg4[%c0_2, %c0_3] : memref<32x64xf32, #tpu.memory_space<vmem>>, vector<32x64xf32>
    %cst = arith.constant dense<0.000000e+00> : vector<8x64xf32>
    %3 = tpu.matmul %1, %2, %cst {dimension_numbers = #tpu.dot_dimension_numbers<[1], [0], [0], [1], [0, 0, 1, 1], [], []>} : vector<8x32xf32>, vector<32x64xf32>, vector<8x64xf32> -> vector<8x64xf32>
    %c0_4 = arith.constant 0 : index
    %c0_5 = arith.constant 0 : index
    %4 = vector.load %arg5[%c0_4, %c0_5] : memref<1x64xf32, #tpu.memory_space<vmem>>, vector<1x64xf32>
    %5 = vector.broadcast %4 : vector<1x64xf32> to vector<8x64xf32>
    %6 = arith.addf %3, %5 : vector<8x64xf32>
    %cst_6 = arith.constant 0.000000e+00 : f32
    %7 = vector.broadcast %cst_6 : f32 to vector<8x64xf32>
    %8 = arith.maximumf %6, %7 : vector<8x64xf32>
    %c0_7 = arith.constant 0 : index
    %c0_8 = arith.constant 0 : index
    %9 = vector.load %arg6[%c0_7, %c0_8] : memref<64x32xf32, #tpu.memory_space<vmem>>, vector<64x32xf32>
    %cst_9 = arith.constant dense<0.000000e+00> : vector<8x32xf32>
    %10 = tpu.matmul %8, %9, %cst_9 {dimension_numbers = #tpu.dot_dimension_numbers<[1], [0], [0], [1], [0, 0, 1, 1], [], []>} : vector<8x64xf32>, vector<64x32xf32>, vector<8x32xf32> -> vector<8x32xf32>
    %c0_10 = arith.constant 0 : index
    %c0_11 = arith.constant 0 : index
    %11 = vector.load %arg7[%c0_10, %c0_11] : memref<1x32xf32, #tpu.memory_space<vmem>>, vector<1x32xf32>
    %12 = vector.broadcast %11 : vector<1x32xf32> to vector<8x32xf32>
    %13 = arith.addf %10, %12 : vector<8x32xf32>
    %c0_12 = arith.constant 0 : index
    %c0_13 = arith.constant 0 : index
    %c0_14 = arith.constant 0 : index
    %14 = vector.load %arg3[%c0_12, %c0_13, %c0_14] : memref<1x8x32xf32, #tpu.memory_space<vmem>>, vector<1x8x32xf32>
    %15 = vector.shape_cast %14 : vector<1x8x32xf32> to vector<8x32xf32>
    %16 = arith.addf %13, %15 : vector<8x32xf32>
    %cst_15 = arith.constant dense<0.000000e+00> : vector<8xf32>
    %17 = vector.multi_reduction <add>, %16, %cst_15 [1] : vector<8x32xf32> to vector<8xf32>
    %18 = vector.shape_cast %17 : vector<8xf32> to vector<8x1xf32>
    %cst_16 = arith.constant 3.200000e+01 : f32
    %19 = vector.broadcast %cst_16 : f32 to vector<8x1xf32>
    %20 = arith.divf %18, %19 : vector<8x1xf32>
    %21 = vector.broadcast %20 : vector<8x1xf32> to vector<8x32xf32>
    %22 = arith.subf %16, %21 : vector<8x32xf32>
    %23 = arith.mulf %22, %22 : vector<8x32xf32>
    %cst_17 = arith.constant dense<0.000000e+00> : vector<8xf32>
    %24 = vector.multi_reduction <add>, %23, %cst_17 [1] : vector<8x32xf32> to vector<8xf32>
    %25 = vector.shape_cast %24 : vector<8xf32> to vector<8x1xf32>
    %cst_18 = arith.constant 3.200000e+01 : f32
    %26 = vector.broadcast %cst_18 : f32 to vector<8x1xf32>
    %27 = arith.divf %25, %26 : vector<8x1xf32>
    %cst_19 = arith.constant 9.99999974E-6 : f32
    %28 = vector.broadcast %cst_19 : f32 to vector<8x1xf32>
    %29 = arith.addf %27, %28 : vector<8x1xf32>
    %30 = math.rsqrt %29 : vector<8x1xf32>
    %31 = vector.broadcast %30 : vector<8x1xf32> to vector<8x32xf32>
    %32 = arith.mulf %22, %31 : vector<8x32xf32>
    %c0_20 = arith.constant 0 : index
    %c0_21 = arith.constant 0 : index
    %33 = vector.load %arg8[%c0_20, %c0_21] : memref<1x32xf32, #tpu.memory_space<vmem>>, vector<1x32xf32>
    %34 = vector.broadcast %33 : vector<1x32xf32> to vector<8x32xf32>
    %35 = arith.mulf %32, %34 : vector<8x32xf32>
    %c0_22 = arith.constant 0 : index
    %c0_23 = arith.constant 0 : index
    %36 = vector.load %arg9[%c0_22, %c0_23] : memref<1x32xf32, #tpu.memory_space<vmem>>, vector<1x32xf32>
    %37 = vector.broadcast %36 : vector<1x32xf32> to vector<8x32xf32>
    %38 = arith.addf %35, %37 : vector<8x32xf32>
    %c0_24 = arith.constant 0 : index
    %c0_25 = arith.constant 0 : index
    %c0_26 = arith.constant 0 : index
    %39 = vector.load %arg10[%c0_24, %c0_25, %c0_26] : memref<1x8x32xf32, #tpu.memory_space<vmem>>, vector<1x8x32xf32>
    %40 = vector.shape_cast %39 : vector<1x8x32xf32> to vector<8x32xf32>
    %41 = vector.shape_cast %38 : vector<8x32xf32> to vector<1x8x32xf32>
    tpu.vector_store %arg10[%c0_24, %c0_25, %c0_26], %41 {strides = array<i32>} : memref<1x8x32xf32, #tpu.memory_space<vmem>>, vector<1x8x32xf32>,
    return
  }
  func.func @transform_0(%arg0: i32, %arg1: i32) -> (i32, i32, i32) {
    %c0_i32 = arith.constant 0 : i32
    %c0_i32_0 = arith.constant 0 : i32
    return %arg0, %arg1, %c0_i32 : i32, i32, i32
  }
  func.func @transform_1(%arg0: i32, %arg1: i32) -> (i32, i32, i32) {
    %c0_i32 = arith.constant 0 : i32
    %c0_i32_0 = arith.constant 0 : i32
    return %arg0, %arg1, %c0_i32 : i32, i32, i32
  }
  func.func @transform_2(%arg0: i32, %arg1: i32) -> (i32, i32) {
    %c0_i32 = arith.constant 0 : i32
    %c0_i32_0 = arith.constant 0 : i32
    %c0_i32_1 = arith.constant 0 : i32
    return %c0_i32, %c0_i32_0 : i32, i32
  }
  func.func @transform_3(%arg0: i32, %arg1: i32) -> (i32, i32) {
    %c0_i32 = arith.constant 0 : i32
    %c0_i32_0 = arith.constant 0 : i32
    %c0_i32_1 = arith.constant 0 : i32
    return %c0_i32, %c0_i32_0 : i32, i32
  }
  func.func @transform_4(%arg0: i32, %arg1: i32) -> (i32, i32) {
    %c0_i32 = arith.constant 0 : i32
    %c0_i32_0 = arith.constant 0 : i32
    %c0_i32_1 = arith.constant 0 : i32
    return %c0_i32, %c0_i32_0 : i32, i32
  }
  func.func @transform_5(%arg0: i32, %arg1: i32) -> (i32, i32) {
    %c0_i32 = arith.constant 0 : i32
    %c0_i32_0 = arith.constant 0 : i32
    %c0_i32_1 = arith.constant 0 : i32
    return %c0_i32, %c0_i32_0 : i32, i32
  }
  func.func @transform_6(%arg0: i32, %arg1: i32) -> (i32, i32) {
    %c0_i32 = arith.constant 0 : i32
    %c0_i32_0 = arith.constant 0 : i32
    %c0_i32_1 = arith.constant 0 : i32
    return %c0_i32, %c0_i32_0 : i32, i32
  }
  func.func @transform_7(%arg0: i32, %arg1: i32) -> (i32, i32) {
    %c0_i32 = arith.constant 0 : i32
    %c0_i32_0 = arith.constant 0 : i32
    %c0_i32_1 = arith.constant 0 : i32
    return %c0_i32, %c0_i32_0 : i32, i32
  }
  func.func @transform_8(%arg0: i32, %arg1: i32) -> (i32, i32, i32) {
    %c0_i32 = arith.constant 0 : i32
    %c0_i32_0 = arith.constant 0 : i32
    return %arg0, %arg1, %c0_i32 : i32, i32, i32
  }
}

</mosaic_0001>

<llo_original>
// kernel: block_cross_forward.3
$region0: #{block_cross_forward.3}
  #allocation0 [shape = 'u32[]', space=smem, size = 0x4, offset = 0x4, fixed_abs, tag = 'smem constant byte address 0x4 - core index']
  #allocation1 [shape = 'u32[144,128]{1,0:T(1,128)}', space=vmem, size = 0x12000, scoped, tag = 'internal scratch']
  %s0 = inlined_call_operand.vmem [shape: f32[2,8,32], index: 0, kind: input, shape index: {}]
  %s1 = inlined_call_operand.hbm [shape: f32[2,16,32], index: 1, kind: input, shape index: {}]
  %s2 = inlined_call_operand.hbm [shape: f32[2,16,32], index: 2, kind: input, shape index: {}]
  %s3 = inlined_call_operand.hbm [shape: f32[32,32], index: 3, kind: input, shape index: {}]
  %s4 = inlined_call_operand.vmem [shape: f32[1,32], index: 4, kind: input, shape index: {}]
  %s5 = inlined_call_operand.hbm [shape: f32[32,32], index: 5, kind: input, shape index: {}]
  %s6 = inlined_call_operand.vmem [shape: f32[1,32], index: 6, kind: input, shape index: {}]
  %s7 = inlined_call_operand.hbm [shape: f32[32,32], index: 7, kind: input, shape index: {}]
  %s8 = inlined_call_operand.vmem [shape: f32[1,32], index: 8, kind: input, shape index: {}]
  %s9 = inlined_call_operand.vmem [shape: f32[2,8,32], index: 9, kind: output, shape index: {0}]
  %s10 = inlined_call_operand.vmem [shape: f32[2,2,16,32], index: 10, kind: output, shape index: {1}]
  %11 = xla_tuple %s9, %s10
  %s12 = sld [smem:[#allocation0]]
  $region97: #{block_cross_forward.3} parent=0
    _
  %s14 = ssub.s32 1, %s12
  %s15 = scalar_select 0, %s14, %s12
  $region1: #{block_cross_forward.3} parent=0
    #allocation2 [shape = 'u8[16384]{0}', space=vmem, size = 0x4000, scoped, tag = 'input window, operand 1']
    #allocation3 [shape = 's32[2]{0}', space=sflag, size = 0x8, scoped, tag = 'scoped memory for block_cross_forward.3']
    #allocation4 [shape = 'u8[16384]{0}', space=vmem, size = 0x4000, scoped, tag = 'input window, operand 2']
    #allocation5 [shape = 's32[2]{0}', space=sflag, size = 0x8, scoped, tag = 'scoped memory for block_cross_forward.3']
    #allocation6 [shape = 'u8[16384]{0}', space=vmem, size = 0x4000, scoped, tag = 'input window, operand 3, single buffered']
    #allocation7 [shape = 'u8[16384]{0}', space=vmem, size = 0x4000, scoped, tag = 'input window, operand 5, single buffered']
    #allocation8 [shape = 's32[1]{0}', space=sflag, size = 0x4, scoped, tag = 'scoped memory for block_cross_forward.3']
    #allocation9 [shape = 'u8[16384]{0}', space=vmem, size = 0x4000, scoped, tag = 'input window, operand 7, single buffered']
    %16 = vsyncpa [#allocation3], 0
    %s17 = scalar_lea.sflag [#allocation3], 1
    %18 = vsyncpa %s17, 0
    %19 = vsyncpa [#allocation5], 0
    %s20 = scalar_lea.sflag [#allocation5], 1
    %21 = vsyncpa %s20, 0
    %22 = vsyncpa [#allocation8], 0
    loop: start=0, step=1, limit=4
    $region2: #{block_cross_forward.3} parent=1 // loop_pre_header
      _
    $region3: #{block_cross_forward.3} parent=1 // loop_header
      %s24 = sphi 0, %s28
      %p25 = scmp.ge.s32.totalorder %s24, 4
      %s34 = sphi 0, %s36
      %s37 = sphi 0, %s34
      %s38 = sphi 0, %s37
      %s54 = sphi 0, %s38
      %s60 = sphi 0, %s62
      %s63 = sphi 0, %s60
      %s64 = sphi 0, %s63
      %s80 = sphi 0, %s64
      %s86 = sphi 0, %s88
      %s89 = sphi 0, %s86
      %s90 = sphi 0, %s89
      %s106 = sphi 0, %s90
      %s110 = sphi 0, %s110
      %s112 = sphi 0, %s110
      %s113 = sphi 0, %s112
      %s127 = sphi 0, %s113
      %s131 = sphi 0, %s131
      %s133 = sphi 0, %s131
      %s134 = sphi 0, %s133
      %s148 = sphi 0, %s134
      %s152 = sphi 0, %s152
      %s154 = sphi 0, %s152
      %s155 = sphi 0, %s154
      %s169 = sphi 0, %s155
      %s173 = sphi 0, %s173
      %s175 = sphi 0, %s173
      %s176 = sphi 0, %s175
      %s190 = sphi 0, %s176
      %s194 = sphi 0, %s194
      %s196 = sphi 0, %s194
      %s197 = sphi 0, %s196
      %s211 = sphi 0, %s197
      %s215 = sphi 0, %s215
      %s217 = sphi 0, %s215
      %s218 = sphi 0, %s217
      %s232 = sphi 0, %s218
      %s238 = sphi 0, %s240
      %s241 = sphi 0, %s238
      %s242 = sphi 0, %s241
      %s258 = sphi 0, %s242
      %s264 = sphi 0, %s266
      %s267 = sphi 0, %s264
      %s268 = sphi 0, %s267
      %s284 = sphi 0, %s268
    $region4: #{block_cross_forward.3} parent=1 // loop_header_branch
      %27 = sbr.rel (%p25) target = $region8
    $region5: #{block_cross_forward.3} parent=1 // loop_body
      %s29 = ssub.s32 %s24, 1
      %s30 = ssub.s32 %s24, 2
      %s31 = sadd.s32 %s24, 1
      %s32 = ssub.s32 %s24, %s31
      %p33 = scmp.eq.s32.totalorder %s32, 0
      %s35 = sadd.s32 %s34, 1
      %s36 = scalar_select %p33, %s34, %s35
      %p39 = pneg %p33
      %p40 = scmp.eq.s32.totalorder %s24, 1
      %p41 = por %p39, %p40
      %p42 = scmp.ne.s32.totalorder %s34, %s37
      %p43 = scmp.eq.s32.totalorder %s24, 0
      %p44 = por %p42, %p43
      %p45 = scmp.ne.s32.totalorder %s34, %s37
      %p46 = scmp.eq.s32.totalorder %s29, 1
      %p47 = por %p45, %p46
      %p48 = scmp.ne.s32.totalorder %s37, %s38
      %p49 = scmp.eq.s32.totalorder %s29, 0
      %p50 = por %p48, %p49
      %p51 = scmp.ne.s32.totalorder %s37, %s38
      %p52 = scmp.eq.s32.totalorder %s30, 1
      %p53 = por %p51, %p52
      %p55 = scmp.ne.s32.totalorder %s38, %s54
      %p56 = scmp.eq.s32.totalorder %s30, 0
      %p57 = por %p55, %p56
      %s58 = ssub.s32 %s24, %s31
      %p59 = scmp.eq.s32.totalorder %s58, 0
      %s61 = sadd.s32 %s60, 1
      %s62 = scalar_select %p59, %s60, %s61
      %p65 = pneg %p59
      %p66 = scmp.eq.s32.totalorder %s24, 1
      %p67 = por %p65, %p66
      %p68 = scmp.ne.s32.totalorder %s60, %s63
      %p69 = scmp.eq.s32.totalorder %s24, 0
      %p70 = por %p68, %p69
      %p71 = scmp.ne.s32.totalorder %s60, %s63
      %p72 = scmp.eq.s32.totalorder %s29, 1
      %p73 = por %p71, %p72
      %p74 = scmp.ne.s32.totalorder %s63, %s64
      %p75 = scmp.eq.s32.totalorder %s29, 0
      %p76 = por %p74, %p75
      %p77 = scmp.ne.s32.totalorder %s63, %s64
      %p78 = scmp.eq.s32.totalorder %s30, 1
      %p79 = por %p77, %p78
      %p81 = scmp.ne.s32.totalorder %s64, %s80
      %p82 = scmp.eq.s32.totalorder %s30, 0
      %p83 = por %p81, %p82
      %s84 = ssub.s32 %s24, %s31
      %p85 = scmp.eq.s32.totalorder %s84, 0
      %s87 = sadd.s32 %s86, 1
      %s88 = scalar_select %p85, %s86, %s87
      %p91 = pneg %p85
      %p92 = scmp.eq.s32.totalorder %s24, 1
      %p93 = por %p91, %p92
      %p94 = scmp.ne.s32.totalorder %s86, %s89
      %p95 = scmp.eq.s32.totalorder %s24, 0
      %p96 = por %p94, %p95
      %p97 = scmp.ne.s32.totalorder %s86, %s89
      %p98 = scmp.eq.s32.totalorder %s29, 1
      %p99 = por %p97, %p98
      %p100 = scmp.ne.s32.totalorder %s89, %s90
      %p101 = scmp.eq.s32.totalorder %s29, 0
      %p102 = por %p100, %p101
      %p103 = scmp.ne.s32.totalorder %s89, %s90
      %p104 = scmp.eq.s32.totalorder %s30, 1
      %p105 = por %p103, %p104
      %p107 = scmp.ne.s32.totalorder %s90, %s106
      %p108 = scmp.eq.s32.totalorder %s30, 0
      %p109 = por %p107, %p108
      %s111 = sadd.s32 %s110, 1
      %p114 = scmp.eq.s32.totalorder %s24, 1
      %p115 = scmp.ne.s32.totalorder %s110, %s112
      %p116 = scmp.eq.s32.totalorder %s24, 0
      %p117 = por %p115, %p116
      %p118 = scmp.ne.s32.totalorder %s110, %s112
      %p119 = scmp.eq.s32.totalorder %s29, 1
      %p120 = por %p118, %p119
      %p121 = scmp.ne.s32.totalorder %s112, %s113
      %p122 = scmp.eq.s32.totalorder %s29, 0
      %p123 = por %p121, %p122
      %p124 = scmp.ne.s32.totalorder %s112, %s113
      %p125 = scmp.eq.s32.totalorder %s30, 1
      %p126 = por %p124, %p125
      %p128 = scmp.ne.s32.totalorder %s113, %s127
      %p129 = scmp.eq.s32.totalorder %s30, 0
      %p130 = por %p128, %p129
      %s132 = sadd.s32 %s131, 1
      %p135 = scmp.eq.s32.totalorder %s24, 1
      %p136 = scmp.ne.s32.totalorder %s131, %s133
      %p137 = scmp.eq.s32.totalorder %s24, 0
      %p138 = por %p136, %p137
      %p139 = scmp.ne.s32.totalorder %s131, %s133
      %p140 = scmp.eq.s32.totalorder %s29, 1
      %p141 = por %p139, %p140
      %p142 = scmp.ne.s32.totalorder %s133, %s134
      %p143 = scmp.eq.s32.totalorder %s29, 0
      %p144 = por %p142, %p143
      %p145 = scmp.ne.s32.totalorder %s133, %s134
      %p146 = scmp.eq.s32.totalorder %s30, 1
      %p147 = por %p145, %p146
      %p149 = scmp.ne.s32.totalorder %s134, %s148
      %p150 = scmp.eq.s32.totalorder %s30, 0
      %p151 = por %p149, %p150
      %s153 = sadd.s32 %s152, 1
      %p156 = scmp.eq.s32.totalorder %s24, 1
      %p157 = scmp.ne.s32.totalorder %s152, %s154
      %p158 = scmp.eq.s32.totalorder %s24, 0
      %p159 = por %p157, %p158
      %p160 = scmp.ne.s32.totalorder %s152, %s154
      %p161 = scmp.eq.s32.totalorder %s29, 1
      %p162 = por %p160, %p161
      %p163 = scmp.ne.s32.totalorder %s154, %s155
      %p164 = scmp.eq.s32.totalorder %s29, 0
      %p165 = por %p163, %p164
      %p166 = scmp.ne.s32.totalorder %s154, %s155
      %p167 = scmp.eq.s32.totalorder %s30, 1
      %p168 = por %p166, %p167
      %p170 = scmp.ne.s32.totalorder %s155, %s169
      %p171 = scmp.eq.s32.totalorder %s30, 0
      %p172 = por %p170, %p171
      %s174 = sadd.s32 %s173, 1
      %p177 = scmp.eq.s32.totalorder %s24, 1
      %p178 = scmp.ne.s32.totalorder %s173, %s175
      %p179 = scmp.eq.s32.totalorder %s24, 0
      %p180 = por %p178, %p179
      %p181 = scmp.ne.s32.totalorder %s173, %s175
      %p182 = scmp.eq.s32.totalorder %s29, 1
      %p183 = por %p181, %p182
      %p184 = scmp.ne.s32.totalorder %s175, %s176
      %p185 = scmp.eq.s32.totalorder %s29, 0
      %p186 = por %p184, %p185
      %p187 = scmp.ne.s32.totalorder %s175, %s176
      %p188 = scmp.eq.s32.totalorder %s30, 1
      %p189 = por %p187, %p188
      %p191 = scmp.ne.s32.totalorder %s176, %s190
      %p192 = scmp.eq.s32.totalorder %s30, 0
      %p193 = por %p191, %p192
      %s195 = sadd.s32 %s194, 1
      %p198 = scmp.eq.s32.totalorder %s24, 1
      %p199 = scmp.ne.s32.totalorder %s194, %s196
      %p200 = scmp.eq.s32.totalorder %s24, 0
      %p201 = por %p199, %p200
      %p202 = scmp.ne.s32.totalorder %s194, %s196
      %p203 = scmp.eq.s32.totalorder %s29, 1
      %p204 = por %p202, %p203
      %p205 = scmp.ne.s32.totalorder %s196, %s197
      %p206 = scmp.eq.s32.totalorder %s29, 0
      %p207 = por %p205, %p206
      %p208 = scmp.ne.s32.totalorder %s196, %s197
      %p209 = scmp.eq.s32.totalorder %s30, 1
      %p210 = por %p208, %p209
      %p212 = scmp.ne.s32.totalorder %s197, %s211
      %p213 = scmp.eq.s32.totalorder %s30, 0
      %p214 = por %p212, %p213
      %s216 = sadd.s32 %s215, 1
      %p219 = scmp.eq.s32.totalorder %s24, 1
      %p220 = scmp.ne.s32.totalorder %s215, %s217
      %p221 = scmp.eq.s32.totalorder %s24, 0
      %p222 = por %p220, %p221
      %p223 = scmp.ne.s32.totalorder %s215, %s217
      %p224 = scmp.eq.s32.totalorder %s29, 1
      %p225 = por %p223, %p224
      %p226 = scmp.ne.s32.totalorder %s217, %s218
      %p227 = scmp.eq.s32.totalorder %s29, 0
      %p228 = por %p226, %p227
      %p229 = scmp.ne.s32.totalorder %s217, %s218
      %p230 = scmp.eq.s32.totalorder %s30, 1
      %p231 = por %p229, %p230
      %p233 = scmp.ne.s32.totalorder %s218, %s232
      %p234 = scmp.eq.s32.totalorder %s30, 0
      %p235 = por %p233, %p234
      %s236 = ssub.s32 %s24, %s31
      %p237 = scmp.eq.s32.totalorder %s236, 0
      %s239 = sadd.s32 %s238, 1
      %s240 = scalar_select %p237, %s238, %s239
      %p243 = pneg %p237
      %p244 = scmp.eq.s32.totalorder %s24, 1
      %p245 = por %p243, %p244
      %p246 = scmp.ne.s32.totalorder %s238, %s241
      %p247 = scmp.eq.s32.totalorder %s24, 0
      %p248 = por %p246, %p247
      %p249 = scmp.ne.s32.totalorder %s238, %s241
      %p250 = scmp.eq.s32.totalorder %s29, 1
      %p251 = por %p249, %p250
      %p252 = scmp.ne.s32.totalorder %s241, %s242
      %p253 = scmp.eq.s32.totalorder %s29, 0
      %p254 = por %p252, %p253
      %p255 = scmp.ne.s32.totalorder %s241, %s242
      %p256 = scmp.eq.s32.totalorder %s30, 1
      %p257 = por %p255, %p256
      %p259 = scmp.ne.s32.totalorder %s242, %s258
      %p260 = scmp.eq.s32.totalorder %s30, 0
      %p261 = por %p259, %p260
      %s262 = ssub.s32 %s24, %s31
      %p263 = scmp.eq.s32.totalorder %s262, 0
      %s265 = sadd.s32 %s264, 1
      %s266 = scalar_select %p263, %s264, %s265
      %p269 = pneg %p263
      %p270 = scmp.eq.s32.totalorder %s24, 1
      %p271 = por %p269, %p270
      %p272 = scmp.ne.s32.totalorder %s264, %s267
      %p273 = scmp.eq.s32.totalorder %s24, 0
      %p274 = por %p272, %p273
      %p275 = scmp.ne.s32.totalorder %s264, %s267
      %p276 = scmp.eq.s32.totalorder %s29, 1
      %p277 = por %p275, %p276
      %p278 = scmp.ne.s32.totalorder %s267, %s268
      %p279 = scmp.eq.s32.totalorder %s29, 0
      %p280 = por %p278, %p279
      %p281 = scmp.ne.s32.totalorder %s267, %s268
      %p282 = scmp.eq.s32.totalorder %s30, 1
      %p283 = por %p281, %p282
      %p285 = scmp.ne.s32.totalorder %s268, %s284
      %p286 = scmp.eq.s32.totalorder %s30, 0
      %p287 = por %p285, %p286
      %p288 = scmp.le.s32.totalorder 1, %s24
      %p289 = scmp.lt.s32.totalorder %s24, 3
      %p290 = pnand %p288, %p289
      %p291 = pneg %p290
      // Predicated region
      $region9: #{block_cross_forward.3} parent=5 // pred_check
        _
      $region10: #{block_cross_forward.3} parent=5 // pred_check_branch
        %293 = sbr.rel (%p290) target = $region12
      $region11: #{block_cross_forward.3} parent=5 // pred_region
        %s294 = ssub.s32 %s24, 1
        // Predicated region
        $region13: #{block_cross_forward.3} parent=11 // pred_check
          %p295 = pneg %p123
        $region14: #{block_cross_forward.3} parent=11 // pred_check_branch
          %297 = sbr.rel (%p295) target = $region16
        $region15: #{block_cross_forward.3} parent=11 // pred_region
          %s299 = ssub.s32 512, 512
          %300 = vsyncadd [#allocation5], %s299
          %s301 = sshll.u32 [#allocation6], 4
          %s302 = int_to_ptr.vmem [resolvable:$true] %s301
          %307 = dma.hbm_to_vmem [thread:$0]  %s3, 512, %s302, [#allocation5], 128, 128, 8
        $region16: #{block_cross_forward.3} parent=11 // pred_fallthru
          _
        // Predicated region
        $region17: #{block_cross_forward.3} parent=11 // pred_check
          %p308 = pneg %p144
        $region18: #{block_cross_forward.3} parent=11 // pred_check_branch
          %310 = sbr.rel (%p308) target = $region20
        $region19: #{block_cross_forward.3} parent=11 // pred_region
          _
        $region20: #{block_cross_forward.3} parent=11 // pred_fallthru
          _
        // Predicated region
        $region21: #{block_cross_forward.3} parent=11 // pred_check
          %p311 = pneg %p165
        $region22: #{block_cross_forward.3} parent=11 // pred_check_branch
          %313 = sbr.rel (%p311) target = $region24
        $region23: #{block_cross_forward.3} parent=11 // pred_region
          %s315 = ssub.s32 512, 512
          %316 = vsyncadd [#allocation8], %s315
          %s317 = sshll.u32 [#allocation7], 4
          %s318 = int_to_ptr.vmem [resolvable:$true] %s317
          %323 = dma.hbm_to_vmem [thread:$0]  %s5, 512, %s318, [#allocation8], 128, 128, 8
        $region24: #{block_cross_forward.3} parent=11 // pred_fallthru
          _
        // Predicated region
        $region25: #{block_cross_forward.3} parent=11 // pred_check
          %p324 = pneg %p186
        $region26: #{block_cross_forward.3} parent=11 // pred_check_branch
          %326 = sbr.rel (%p324) target = $region28
        $region27: #{block_cross_forward.3} parent=11 // pred_region
          _
        $region28: #{block_cross_forward.3} parent=11 // pred_fallthru
          _
        // Predicated region
        $region29: #{block_cross_forward.3} parent=11 // pred_check
          %p327 = pneg %p207
        $region30: #{block_cross_forward.3} parent=11 // pred_check_branch
          %329 = sbr.rel (%p327) target = $region32
        $region31: #{block_cross_forward.3} parent=11 // pred_region
          %s331 = ssub.s32 512, 512
          %332 = vsyncadd [#allocation8], %s331
          %s333 = sshll.u32 [#allocation9], 4
          %s334 = int_to_ptr.vmem [resolvable:$true] %s333
          %339 = dma.hbm_to_vmem [thread:$0]  %s7, 512, %s334, [#allocation8], 128, 128, 8
        $region32: #{block_cross_forward.3} parent=11 // pred_fallthru
          _
        // Predicated region
        $region33: #{block_cross_forward.3} parent=11 // pred_check
          %p340 = pneg %p228
        $region34: #{block_cross_forward.3} parent=11 // pred_check_branch
          %342 = sbr.rel (%p340) target = $region36
        $region35: #{block_cross_forward.3} parent=11 // pred_region
          _
        $region36: #{block_cross_forward.3} parent=11 // pred_fallthru
          _
      $region12: #{block_cross_forward.3} parent=5 // pred_fallthru
        _
      %p343 = scmp.lt.s32.totalorder %s24, 2
      // Predicated region
      $region37: #{block_cross_forward.3} parent=5 // pred_check
        %p344 = pneg %p343
      $region38: #{block_cross_forward.3} parent=5 // pred_check_branch
        %346 = sbr.rel (%p344) target = $region40
      $region39: #{block_cross_forward.3} parent=5 // pred_region
        // Predicated region
        $region41: #{block_cross_forward.3} parent=39 // pred_check
          %p347 = pneg %p44
        $region42: #{block_cross_forward.3} parent=39 // pred_check_branch
          %349 = sbr.rel (%p347) target = $region44
        $region43: #{block_cross_forward.3} parent=39 // pred_region
          %p350 = scmp.lt.s32.totalorder %s24, 1
          %s351 = scalar_select %p350, %s24, 1
          %s352 = smul.addr %s351, 8
          %s353 = scalar_lea.vmem %s0, %s352
        $region44: #{block_cross_forward.3} parent=39 // pred_fallthru
          _
        // Predicated region
        $region45: #{block_cross_forward.3} parent=39 // pred_check
          %p354 = pneg %p70
        $region46: #{block_cross_forward.3} parent=39 // pred_check_branch
          %356 = sbr.rel (%p354) target = $region48
        $region47: #{block_cross_forward.3} parent=39 // pred_region
          %s357 = sand.u32 %s60, 1
          %s358 = scalar_lea.sflag [#allocation3], %s357
          %s359 = sand.u32 %s60, 1
          %s360 = smul.addr %s359, 16
          %s361 = scalar_lea.vmem [#allocation2], %s360
          %s363 = ssub.s32 256, 256
          %364 = vsyncadd %s358, %s363
          %s365 = smul.addr %s24, 2
          %s366 = smul.addr %s365, 128
          %s367 = scalar_lea.hbm %s1, %s366
          %s368 = sshll.u32 %s361, 4
          %s369 = int_to_ptr.vmem [resolvable:$true] %s368
          %374 = dma.hbm_to_vmem [thread:$0]  %s367, 256, %s369, %s358, 128, 128, 8
        $region48: #{block_cross_forward.3} parent=39 // pred_fallthru
          _
        // Predicated region
        $region49: #{block_cross_forward.3} parent=39 // pred_check
          %p375 = pneg %p96
        $region50: #{block_cross_forward.3} parent=39 // pred_check_branch
          %377 = sbr.rel (%p375) target = $region52
        $region51: #{block_cross_forward.3} parent=39 // pred_region
          %s378 = sand.u32 %s24, 1
          %s379 = scalar_lea.sflag [#allocation5], %s378
          %s380 = sand.u32 %s86, 1
          %s381 = smul.addr %s380, 16
          %s382 = scalar_lea.vmem [#allocation4], %s381
          %s384 = ssub.s32 256, 256
          %385 = vsyncadd %s379, %s384
          %s386 = smul.addr %s24, 2
          %s387 = smul.addr %s386, 128
          %s388 = scalar_lea.hbm %s2, %s387
          %s389 = sshll.u32 %s382, 4
          %s390 = int_to_ptr.vmem [resolvable:$true] %s389
          %395 = dma.hbm_to_vmem [thread:$0]  %s388, 256, %s390, %s379, 128, 128, 8
        $region52: #{block_cross_forward.3} parent=39 // pred_fallthru
          _
      $region40: #{block_cross_forward.3} parent=5 // pred_fallthru
        _
      %p396 = scmp.le.s32.totalorder 1, %s24
      %p397 = scmp.lt.s32.totalorder %s24, 3
      %p398 = pnand %p396, %p397
      %p399 = pneg %p398
      // Predicated region
      $region53: #{block_cross_forward.3} parent=5 // pred_check
        _
      $region54: #{block_cross_forward.3} parent=5 // pred_check_branch
        %401 = sbr.rel (%p398) target = $region56
      $region55: #{block_cross_forward.3} parent=5 // pred_region
        %s402 = ssub.s32 %s24, 1
        %s403 = sand.u32 %s63, 1
        %s404 = scalar_lea.sflag [#allocation3], %s403
        %s405 = sand.u32 %s63, 1
        %s406 = smul.addr %s405, 16
        %s407 = scalar_lea.vmem [#allocation2], %s406
        // Predicated region
        $region57: #{block_cross_forward.3} parent=55 // pred_check
          %p408 = pneg %p76
        $region58: #{block_cross_forward.3} parent=55 // pred_check_branch
          %410 = sbr.rel (%p408) target = $region60
        $region59: #{block_cross_forward.3} parent=55 // pred_region
          %411 = dma.done %s404, 256
        $region60: #{block_cross_forward.3} parent=55 // pred_fallthru
          _
        %s412 = sand.u32 %s29, 1
        %s413 = scalar_lea.sflag [#allocation5], %s412
        %s414 = sand.u32 %s89, 1
        %s415 = smul.addr %s414, 16
        %s416 = scalar_lea.vmem [#allocation4], %s415
        // Predicated region
        $region61: #{block_cross_forward.3} parent=55 // pred_check
          %p417 = pneg %p102
        $region62: #{block_cross_forward.3} parent=55 // pred_check_branch
          %419 = sbr.rel (%p417) target = $region64
        $region63: #{block_cross_forward.3} parent=55 // pred_region
          %420 = dma.done %s413, 256
        $region64: #{block_cross_forward.3} parent=55 // pred_fallthru
          _
        // Predicated region
        $region65: #{block_cross_forward.3} parent=55 // pred_check
          %p421 = pneg %p123
        $region66: #{block_cross_forward.3} parent=55 // pred_check_branch
          %423 = sbr.rel (%p421) target = $region68
        $region67: #{block_cross_forward.3} parent=55 // pred_region
          %424 = dma.done [#allocation5], 512
        $region68: #{block_cross_forward.3} parent=55 // pred_fallthru
          _
        // Predicated region
        $region69: #{block_cross_forward.3} parent=55 // pred_check
          %p425 = pneg %p165
        $region70: #{block_cross_forward.3} parent=55 // pred_check_branch
          %427 = sbr.rel (%p425) target = $region72
        $region71: #{block_cross_forward.3} parent=55 // pred_region
          %428 = dma.done [#allocation8], 512
        $region72: #{block_cross_forward.3} parent=55 // pred_fallthru
          _
        // Predicated region
        $region73: #{block_cross_forward.3} parent=55 // pred_check
          %p429 = pneg %p207
        $region74: #{block_cross_forward.3} parent=55 // pred_check_branch
          %431 = sbr.rel (%p429) target = $region76
        $region75: #{block_cross_forward.3} parent=55 // pred_region
          %432 = dma.done [#allocation8], 512
        $region76: #{block_cross_forward.3} parent=55 // pred_fallthru
          _
        %p433 = scmp.lt.s32.totalorder %s29, 1
        %s434 = scalar_select %p433, %s29, 1
        %s435 = smul.addr %s434, 8
        %s436 = scalar_lea.vmem %s0, %s435
        %p437 = pneg %p50
        %p438 = pneg %p47
        %s439 = sand.u32 %s63, 1
        %s440 = scalar_lea.sflag [#allocation3], %s439
        %s441 = sand.u32 %s63, 1
        %s442 = smul.addr %s441, 16
        %s443 = scalar_lea.vmem [#allocation2], %s442
        %p444 = pneg %p76
        %p445 = pneg %p73
        %s446 = sand.u32 %s29, 1
        %s447 = scalar_lea.sflag [#allocation5], %s446
        %s448 = sand.u32 %s89, 1
        %s449 = smul.addr %s448, 16
        %s450 = scalar_lea.vmem [#allocation4], %s449
        %p451 = pneg %p102
        %p452 = pneg %p99
        %p453 = pneg %p123
        %p454 = pneg %p120
        %p455 = pneg %p144
        %p456 = pneg %p141
        %p457 = pneg %p165
        %p458 = pneg %p162
        %p459 = pneg %p186
        %p460 = pneg %p183
        %p461 = pneg %p207
        %p462 = pneg %p204
        %p463 = pneg %p228
        %p464 = pneg %p225
        %p465 = pneg %p254
        %p466 = pneg %p251
        %p467 = scmp.lt.s32.totalorder %s29, 1
        %s468 = scalar_select %p467, %s29, 1
        %s469 = smul.addr %s468, 8
        %s470 = scalar_lea.vmem %s9, %s469
        %p471 = pneg %p280
        %p472 = pneg %p277
        %p473 = scmp.lt.s32.totalorder %s29, 1
        %s474 = scalar_select %p473, %s29, 1
        %s475 = smul.addr %s474, 4
        %s476 = smul.addr %s475, 8
        %s477 = scalar_lea.vmem %s10, %s476
        %p478 = scmp.lt.s32.totalorder %s29, 1
        %s479 = scalar_select %p478, %s29, 1
        %s480 = smul.addr %s479, 8
        %s481 = scalar_lea.vmem %s0, %s480
        %p482 = scmp.lt.s32.totalorder %s29, 1
        %s483 = scalar_select %p482, %s29, 1
        %s484 = smul.addr %s483, 8
        %s485 = scalar_lea.vmem %s9, %s484
        %p486 = scmp.lt.s32.totalorder %s29, 1
        %s487 = scalar_select %p486, %s29, 1
        %s488 = smul.addr %s487, 4
        %s489 = smul.addr %s488, 8
        %s490 = scalar_lea.vmem %s10, %s489
        %v491 = vld [vmem:[%s481] sm:$0xff]
        %v492 = vld [vmem:[%s407] sm:$0xff]
        %v493 = vld [vmem:[%s407 + $0x8] sm:$0xff]
        %v494 = vld [vmem:[%s416] sm:$0xff]
        %v495 = vld [vmem:[%s416 + $0x8] sm:$0xff]
        %v496 = vld [vmem:[#allocation6] sm:$0xff]
        %v497 = vld [vmem:[#allocation6 + $0x8] sm:$0xff]
        %v498 = vld [vmem:[#allocation6 + $0x10] sm:$0xff]
        %v499 = vld [vmem:[#allocation6 + $0x18] sm:$0xff]
        %v500 = vld [vmem:[%s4] sm:$0x1]
        %v502 = vlaneseq
        %v503 = vshrl.u32 %v502, 7
        %v504 = vsub.s32 0, %v503
        %v505 = vrot.slane %v500, %v504
        %vm507 = vcmask 261120
        %v509 = vsel %vm507, %v491, 0
        %511 = vmatprep.subr.mxu0 0.0
        %512 = vmatpush1.msra.mxu0 0.0
        %513 = vmatprep.subr.mxu0 0.0
        %514 = vmatpush1.msra.mxu0 0.0
        %515 = vmatprep.subr.mxu0 0.0
        %516 = vmatpush1.msra.mxu0 0.0
        %517 = vmatprep.subr.mxu0 0.0
        %518 = vmatpush1.msra.mxu0 0.0
        %519 = vmatprep.subr.mxu0 0.0
        %520 = vmatpush1.msra.mxu0 0.0
        %521 = vmatprep.subr.mxu0 0.0
        %522 = vmatpush1.msra.mxu0 0.0
        %523 = vmatprep.subr.mxu0 0.0
        %524 = vmatpush1.msra.mxu0 0.0
        %525 = vmatprep.subr.mxu0 0.0
        %526 = vmatpush1.msra.mxu0 0.0
        %527 = vmatprep.subr.mxu0 0.0
        %528 = vmatpush1.msra.mxu0 0.0
        %529 = vmatprep.subr.mxu0 0.0
        %530 = vmatpush1.msra.mxu0 0.0
        %531 = vmatprep.subr.mxu0 0.0
        %532 = vmatpush1.msra.mxu0 0.0
        %533 = vmatprep.subr.mxu0 0.0
        %534 = vmatpush1.msra.mxu0 0.0
        %535 = vmatprep.subr.mxu0 0.0
        %536 = vmatpush1.msra.mxu0 %v499
        %537 = vmatprep.subr.mxu0 0.0
        %538 = vmatpush1.msra.mxu0 %v498
        %539 = vmatprep.subr.mxu0 0.0
        %540 = vmatpush1.msra.mxu0 %v497
        %541 = vmatprep.subr.mxu0 0.0
        %542 = vmatpush1.msra.mxu0 %v496
        %543 = vmatprep.subr.mxu0 0.0
        %544 = vmatpush2.msra.mxu0 0.0
        %545 = vmatprep.subr.mxu0 0.0
        %546 = vmatpush2.msra.mxu0 0.0
        %547 = vmatprep.subr.mxu0 0.0
        %548 = vmatpush2.msra.mxu0 0.0
        %549 = vmatprep.subr.mxu0 0.0
        %550 = vmatpush2.msra.mxu0 0.0
        %551 = vmatprep.subr.mxu0 0.0
        %552 = vmatpush2.msra.mxu0 0.0
        %553 = vmatprep.subr.mxu0 0.0
        %554 = vmatpush2.msra.mxu0 0.0
        %555 = vmatprep.subr.mxu0 0.0
        %556 = vmatpush2.msra.mxu0 0.0
        %557 = vmatprep.subr.mxu0 0.0
        %558 = vmatpush2.msra.mxu0 0.0
        %559 = vmatprep.subr.mxu0 0.0
        %560 = vmatpush2.msra.mxu0 0.0
        %561 = vmatprep.subr.mxu0 0.0
        %562 = vmatpush2.msra.mxu0 0.0
        %563 = vmatprep.subr.mxu0 0.0
        %564 = vmatpush2.msra.mxu0 0.0
        %565 = vmatprep.subr.mxu0 0.0
        %566 = vmatpush2.msra.mxu0 0.0
        %567 = vmatprep.subr.mxu0 0.0
        %568 = vmatpush2.msra.mxu0 0.0
        %569 = vmatprep.subr.mxu0 0.0
        %570 = vmatpush2.msra.mxu0 0.0
        %571 = vmatprep.subr.mxu0 0.0
        %572 = vmatpush2.msra.mxu0 0.0
        %573 = vmatprep.subr.mxu0 0.0
        %574 = vmatpush2.msra.mxu0 0.0
        %575 = vmatprep.mubr.f32.mxu0 0.0
        %576 = vmatmul.mubr.f32.gmra.mxu0 %v509
        %v577 = vpop.f32.mrf.mxu0
        %v578 = vadd.f32 %v505, %v577
        %v579 = vpop.f32.mrf.mxu0
        %580 = vdwg.mxu0
        %v581 = vmul.f32 %v578, 0.25
        %582 = vst.msk [vmem:[%s485] sm:$0xff] %vm507, %v581
        %v583 = vld [vmem:[#allocation7] sm:$0xff]
        %v584 = vld [vmem:[#allocation7 + $0x8] sm:$0xff]
        %v585 = vld [vmem:[#allocation7 + $0x10] sm:$0xff]
        %v586 = vld [vmem:[#allocation7 + $0x18] sm:$0xff]
        %v587 = vld [vmem:[%s6] sm:$0x1]
        %v589 = vlaneseq
        %v590 = vshrl.u32 %v589, 7
        %v591 = vsub.s32 0, %v590
        %v592 = vrot.slane %v587, %v591
        %v595 = vsel %vm507, %v492, 0
        %v598 = vsel %vm507, %v493, 0
        %600 = vmatprep.subr.mxu0 0.0
        %601 = vmatpush1.msra.mxu0 0.0
        %602 = vmatprep.subr.mxu0 0.0
        %603 = vmatpush1.msra.mxu0 0.0
        %604 = vmatprep.subr.mxu0 0.0
        %605 = vmatpush1.msra.mxu0 0.0
        %606 = vmatprep.subr.mxu0 0.0
        %607 = vmatpush1.msra.mxu0 0.0
        %608 = vmatprep.subr.mxu0 0.0
        %609 = vmatpush1.msra.mxu0 0.0
        %610 = vmatprep.subr.mxu0 0.0
        %611 = vmatpush1.msra.mxu0 0.0
        %612 = vmatprep.subr.mxu0 0.0
        %613 = vmatpush1.msra.mxu0 0.0
        %614 = vmatprep.subr.mxu0 0.0
        %615 = vmatpush1.msra.mxu0 0.0
        %616 = vmatprep.subr.mxu0 0.0
        %617 = vmatpush1.msra.mxu0 0.0
        %618 = vmatprep.subr.mxu0 0.0
        %619 = vmatpush1.msra.mxu0 0.0
        %620 = vmatprep.subr.mxu0 0.0
        %621 = vmatpush1.msra.mxu0 0.0
        %622 = vmatprep.subr.mxu0 0.0
        %623 = vmatpush1.msra.mxu0 0.0
        %624 = vmatprep.subr.mxu0 0.0
        %625 = vmatpush1.msra.mxu0 %v586
        %626 = vmatprep.subr.mxu0 0.0
        %627 = vmatpush1.msra.mxu0 %v585
        %628 = vmatprep.subr.mxu0 0.0
        %629 = vmatpush1.msra.mxu0 %v584
        %630 = vmatprep.subr.mxu0 0.0
        %631 = vmatpush1.msra.mxu0 %v583
        %632 = vmatprep.subr.mxu0 0.0
        %633 = vmatpush2.msra.mxu0 0.0
        %634 = vmatprep.subr.mxu0 0.0
        %635 = vmatpush2.msra.mxu0 0.0
        %636 = vmatprep.subr.mxu0 0.0
        %637 = vmatpush2.msra.mxu0 0.0
        %638 = vmatprep.subr.mxu0 0.0
        %639 = vmatpush2.msra.mxu0 0.0
        %640 = vmatprep.subr.mxu0 0.0
        %641 = vmatpush2.msra.mxu0 0.0
        %642 = vmatprep.subr.mxu0 0.0
        %643 = vmatpush2.msra.mxu0 0.0
        %644 = vmatprep.subr.mxu0 0.0
        %645 = vmatpush2.msra.mxu0 0.0
        %646 = vmatprep.subr.mxu0 0.0
        %647 = vmatpush2.msra.mxu0 0.0
        %648 = vmatprep.subr.mxu0 0.0
        %649 = vmatpush2.msra.mxu0 0.0
        %650 = vmatprep.subr.mxu0 0.0
        %651 = vmatpush2.msra.mxu0 0.0
        %652 = vmatprep.subr.mxu0 0.0
        %653 = vmatpush2.msra.mxu0 0.0
        %654 = vmatprep.subr.mxu0 0.0
        %655 = vmatpush2.msra.mxu0 0.0
        %656 = vmatprep.subr.mxu0 0.0
        %657 = vmatpush2.msra.mxu0 0.0
        %658 = vmatprep.subr.mxu0 0.0
        %659 = vmatpush2.msra.mxu0 0.0
        %660 = vmatprep.subr.mxu0 0.0
        %661 = vmatpush2.msra.mxu0 0.0
        %662 = vmatprep.subr.mxu0 0.0
        %663 = vmatpush2.msra.mxu0 0.0
        %664 = vmatprep.mubr.f32.mxu0 0.0
        %665 = vmatmul.mubr.f32.gmra.mxu0 %v595
        %v666 = vpop.f32.mrf.mxu0
        %v667 = vadd.f32 %v592, %v666
        %v668 = vpop.f32.mrf.mxu0
        %669 = vmatprep.mubr.f32.mxu0 0.0
        %670 = vmatmul.mubr.f32.gmra.mxu0 %v598
        %v671 = vpop.f32.mrf.mxu0
        %v672 = vadd.f32 %v592, %v671
        %v673 = vpop.f32.mrf.mxu0
        %674 = vdwg.mxu0
        %675 = vst.msk [vmem:[%s490] sm:$0xff] %vm507, %v667
        %676 = vst.msk [vmem:[%s490 + $0x8] sm:$0xff] %vm507, %v672
        %v677 = vld [vmem:[#allocation9] sm:$0xff]
        %v678 = vld [vmem:[#allocation9 + $0x8] sm:$0xff]
        %v679 = vld [vmem:[#allocation9 + $0x10] sm:$0xff]
        %v680 = vld [vmem:[#allocation9 + $0x18] sm:$0xff]
        %v681 = vld [vmem:[%s8] sm:$0x1]
        %v683 = vlaneseq
        %v684 = vshrl.u32 %v683, 7
        %v685 = vsub.s32 0, %v684
        %v686 = vrot.slane %v681, %v685
        %v689 = vsel %vm507, %v494, 0
        %v692 = vsel %vm507, %v495, 0
        %694 = vmatprep.subr.mxu0 0.0
        %695 = vmatpush1.msra.mxu0 0.0
        %696 = vmatprep.subr.mxu0 0.0
        %697 = vmatpush1.msra.mxu0 0.0
        %698 = vmatprep.subr.mxu0 0.0
        %699 = vmatpush1.msra.mxu0 0.0
        %700 = vmatprep.subr.mxu0 0.0
        %701 = vmatpush1.msra.mxu0 0.0
        %702 = vmatprep.subr.mxu0 0.0
        %703 = vmatpush1.msra.mxu0 0.0
        %704 = vmatprep.subr.mxu0 0.0
        %705 = vmatpush1.msra.mxu0 0.0
        %706 = vmatprep.subr.mxu0 0.0
        %707 = vmatpush1.msra.mxu0 0.0
        %708 = vmatprep.subr.mxu0 0.0
        %709 = vmatpush1.msra.mxu0 0.0
        %710 = vmatprep.subr.mxu0 0.0
        %711 = vmatpush1.msra.mxu0 0.0
        %712 = vmatprep.subr.mxu0 0.0
        %713 = vmatpush1.msra.mxu0 0.0
        %714 = vmatprep.subr.mxu0 0.0
        %715 = vmatpush1.msra.mxu0 0.0
        %716 = vmatprep.subr.mxu0 0.0
        %717 = vmatpush1.msra.mxu0 0.0
        %718 = vmatprep.subr.mxu0 0.0
        %719 = vmatpush1.msra.mxu0 %v680
        %720 = vmatprep.subr.mxu0 0.0
        %721 = vmatpush1.msra.mxu0 %v679
        %722 = vmatprep.subr.mxu0 0.0
        %723 = vmatpush1.msra.mxu0 %v678
        %724 = vmatprep.subr.mxu0 0.0
        %725 = vmatpush1.msra.mxu0 %v677
        %726 = vmatprep.subr.mxu0 0.0
        %727 = vmatpush2.msra.mxu0 0.0
        %728 = vmatprep.subr.mxu0 0.0
        %729 = vmatpush2.msra.mxu0 0.0
        %730 = vmatprep.subr.mxu0 0.0
        %731 = vmatpush2.msra.mxu0 0.0
        %732 = vmatprep.subr.mxu0 0.0
        %733 = vmatpush2.msra.mxu0 0.0
        %734 = vmatprep.subr.mxu0 0.0
        %735 = vmatpush2.msra.mxu0 0.0
        %736 = vmatprep.subr.mxu0 0.0
        %737 = vmatpush2.msra.mxu0 0.0
        %738 = vmatprep.subr.mxu0 0.0
        %739 = vmatpush2.msra.mxu0 0.0
        %740 = vmatprep.subr.mxu0 0.0
        %741 = vmatpush2.msra.mxu0 0.0
        %742 = vmatprep.subr.mxu0 0.0
        %743 = vmatpush2.msra.mxu0 0.0
        %744 = vmatprep.subr.mxu0 0.0
        %745 = vmatpush2.msra.mxu0 0.0
        %746 = vmatprep.subr.mxu0 0.0
        %747 = vmatpush2.msra.mxu0 0.0
        %748 = vmatprep.subr.mxu0 0.0
        %749 = vmatpush2.msra.mxu0 0.0
        %750 = vmatprep.subr.mxu0 0.0
        %751 = vmatpush2.msra.mxu0 0.0
        %752 = vmatprep.subr.mxu0 0.0
        %753 = vmatpush2.msra.mxu0 0.0
        %754 = vmatprep.subr.mxu0 0.0
        %755 = vmatpush2.msra.mxu0 0.0
        %756 = vmatprep.subr.mxu0 0.0
        %757 = vmatpush2.msra.mxu0 0.0
        %758 = vmatprep.mubr.f32.mxu0 0.0
        %759 = vmatmul.mubr.f32.gmra.mxu0 %v689
        %v760 = vpop.f32.mrf.mxu0
        %v761 = vadd.f32 %v686, %v760
        %v762 = vpop.f32.mrf.mxu0
        %763 = vmatprep.mubr.f32.mxu0 0.0
        %764 = vmatmul.mubr.f32.gmra.mxu0 %v692
        %v765 = vpop.f32.mrf.mxu0
        %v766 = vadd.f32 %v686, %v765
        %v767 = vpop.f32.mrf.mxu0
        %768 = vdwg.mxu0
        %s769 = scalar_lea.vmem %s490, 16
        %770 = vst.msk [vmem:[%s769] sm:$0xff] %vm507, %v761
        %771 = vst.msk [vmem:[%s769 + $0x8] sm:$0xff] %vm507, %v766
        %p772 = scmp.lt.s32.totalorder %s29, 1
        %s773 = scalar_select %p772, %s29, 1
        %s774 = smul.addr %s773, 8
        %s775 = scalar_lea.vmem %s9, %s774
        %p776 = scmp.lt.s32.totalorder %s29, 1
        %s777 = scalar_select %p776, %s29, 1
        %s778 = smul.addr %s777, 4
        %s779 = smul.addr %s778, 8
        %s780 = scalar_lea.vmem %s10, %s779
        // Predicated region
        $region77: #{block_cross_forward.3} parent=55 // pred_check
          %p781 = pneg %p251
        $region78: #{block_cross_forward.3} parent=55 // pred_check_branch
          %783 = sbr.rel (%p781) target = $region80
        $region79: #{block_cross_forward.3} parent=55 // pred_region
          _
        $region80: #{block_cross_forward.3} parent=55 // pred_fallthru
          _
        // Predicated region
        $region81: #{block_cross_forward.3} parent=55 // pred_check
          %p784 = pneg %p277
        $region82: #{block_cross_forward.3} parent=55 // pred_check_branch
          %786 = sbr.rel (%p784) target = $region84
        $region83: #{block_cross_forward.3} parent=55 // pred_region
          _
        $region84: #{block_cross_forward.3} parent=55 // pred_fallthru
          _
      $region56: #{block_cross_forward.3} parent=5 // pred_fallthru
        _
      %p787 = scmp.le.s32.totalorder 2, %s24
      // Predicated region
      $region85: #{block_cross_forward.3} parent=5 // pred_check
        %p788 = pneg %p787
      $region86: #{block_cross_forward.3} parent=5 // pred_check_branch
        %790 = sbr.rel (%p788) target = $region88
      $region87: #{block_cross_forward.3} parent=5 // pred_region
        %s791 = ssub.s32 %s24, 2
        // Predicated region
        $region89: #{block_cross_forward.3} parent=87 // pred_check
          %p792 = pneg %p257
        $region90: #{block_cross_forward.3} parent=87 // pred_check_branch
          %794 = sbr.rel (%p792) target = $region92
        $region91: #{block_cross_forward.3} parent=87 // pred_region
          %p795 = scmp.lt.s32.totalorder %s30, 1
          %s796 = scalar_select %p795, %s30, 1
          %s797 = smul.addr %s796, 8
          %s798 = scalar_lea.vmem %s9, %s797
        $region92: #{block_cross_forward.3} parent=87 // pred_fallthru
          _
        // Predicated region
        $region93: #{block_cross_forward.3} parent=87 // pred_check
          %p799 = pneg %p283
        $region94: #{block_cross_forward.3} parent=87 // pred_check_branch
          %801 = sbr.rel (%p799) target = $region96
        $region95: #{block_cross_forward.3} parent=87 // pred_region
          %p802 = scmp.lt.s32.totalorder %s30, 1
          %s803 = scalar_select %p802, %s30, 1
          %s804 = smul.addr %s803, 4
          %s805 = smul.addr %s804, 8
          %s806 = scalar_lea.vmem %s10, %s805
        $region96: #{block_cross_forward.3} parent=87 // pred_fallthru
          _
      $region88: #{block_cross_forward.3} parent=5 // pred_fallthru
        _
    $region6: #{block_cross_forward.3} parent=1 // loop_footer
      %s28 = sadd.s32 1, %s24
    $region7: #{block_cross_forward.3} parent=1 // loop_footer_branch
      %23 = sbr.rel target = $region3
    $region8: #{block_cross_forward.3} parent=1 // loop_exit
      _
    %807 = vsyncpa [#allocation3], 1
    %s808 = scalar_lea.sflag [#allocation3], 1
    %809 = vsyncpa %s808, 1
    %810 = vsyncpa [#allocation5], 1
    %s811 = scalar_lea.sflag [#allocation5], 1
    %812 = vsyncpa %s811, 1
    %813 = vsyncpa [#allocation8], 1

// kernel: block_cross_forward.5
$region0: #{block_cross_forward.5}
  #allocation0 [shape = 'u32[]', space=smem, size = 0x4, offset = 0x4, fixed_abs, tag = 'smem constant byte address 0x4 - core index']
  #allocation1 [shape = 'u32[144,128]{1,0:T(1,128)}', space=vmem, size = 0x12000, scoped, tag = 'internal scratch']
  %s0 = inlined_call_operand.vmem [shape: f32[2,8,32], index: 0, kind: input, shape index: {}]
  %s1 = inlined_call_operand.vmem [shape: f32[2,8,32], index: 1, kind: input, shape index: {}]
  %s2 = inlined_call_operand.vmem [shape: f32[32,64], index: 2, kind: input, shape index: {}]
  %s3 = inlined_call_operand.vmem [shape: f32[1,64], index: 3, kind: input, shape index: {}]
  %s4 = inlined_call_operand.vmem [shape: f32[64,32], index: 4, kind: input, shape index: {}]
  %s5 = inlined_call_operand.vmem [shape: f32[1,32], index: 5, kind: input, shape index: {}]
  %s6 = inlined_call_operand.vmem [shape: f32[1,32], index: 6, kind: input, shape index: {}]
  %s7 = inlined_call_operand.vmem [shape: f32[1,32], index: 7, kind: input, shape index: {}]
  %s8 = inlined_call_operand.hbm [shape: f32[2,8,32], index: 8, kind: output, shape index: {}]
  %s9 = sld [smem:[#allocation0]]
  $region65: #{block_cross_forward.5} parent=0
    _
  %s11 = ssub.s32 1, %s9
  %s12 = scalar_select 0, %s11, %s9
  $region1: #{block_cross_forward.5} parent=0
    #allocation2 [shape = 'u8[8192]{0}', space=vmem, size = 0x2000, scoped, tag = 'output window, operand 0']
    #allocation3 [shape = 's32[2]{0}', space=sflag, size = 0x8, scoped, tag = 'scoped memory for block_cross_forward.5']
    %13 = vsyncpa [#allocation3], 0
    %s14 = scalar_lea.sflag [#allocation3], 1
    %15 = vsyncpa %s14, 0
    loop: start=0, step=1, limit=4
    $region2: #{block_cross_forward.5} parent=1 // loop_pre_header
      _
    $region3: #{block_cross_forward.5} parent=1 // loop_header
      %s17 = sphi 0, %s21
      %p18 = scmp.ge.s32.totalorder %s17, 4
      %s24 = sphi 0, %s36
      %s25 = sphi 0, %s32
      %s26 = sphi 0, %s24
      %s27 = sphi 0, %s25
      %s28 = sphi 0, %s26
      %s29 = sphi 0, %s27
      %s41 = sphi 0, %s43
      %s44 = sphi 0, %s41
      %s45 = sphi 0, %s44
      %s61 = sphi 0, %s45
      %s69 = sphi 0, %s71
      %s72 = sphi 0, %s69
      %s73 = sphi 0, %s72
      %s89 = sphi 0, %s73
      %s93 = sphi 0, %s93
      %s95 = sphi 0, %s93
      %s96 = sphi 0, %s95
      %s110 = sphi 0, %s96
      %s114 = sphi 0, %s114
      %s116 = sphi 0, %s114
      %s117 = sphi 0, %s116
      %s131 = sphi 0, %s117
      %s135 = sphi 0, %s135
      %s137 = sphi 0, %s135
      %s138 = sphi 0, %s137
      %s152 = sphi 0, %s138
      %s156 = sphi 0, %s156
      %s158 = sphi 0, %s156
      %s159 = sphi 0, %s158
      %s173 = sphi 0, %s159
      %s177 = sphi 0, %s177
      %s179 = sphi 0, %s177
      %s180 = sphi 0, %s179
      %s194 = sphi 0, %s180
      %s198 = sphi 0, %s198
      %s200 = sphi 0, %s198
      %s201 = sphi 0, %s200
      %s215 = sphi 0, %s201
      %s223 = sphi 0, %s225
      %s226 = sphi 0, %s223
      %s227 = sphi 0, %s226
      %s243 = sphi 0, %s227
    $region4: #{block_cross_forward.5} parent=1 // loop_header_branch
      %20 = sbr.rel (%p18) target = $region8
    $region5: #{block_cross_forward.5} parent=1 // loop_body
      %s22 = ssub.s32 %s17, 1
      %s23 = ssub.s32 %s17, 2
      %s30 = sadd.s32 1, %s25
      %p31 = scmp.ge.s32.totalorder %s30, 1
      %s32 = scalar_select %p31, 0, %s30
      %s33 = sadd.s32 1, %s24
      %s34 = scalar_select %p31, %s33, %s24
      %p35 = scmp.ge.s32.totalorder %s34, 2
      %s36 = scalar_select %p35, 0, %s34
      %s37 = ssub.s32 %s24, %s36
      %s38 = ssub.s32 %s25, %s32
      %s39 = sor.u32 %s37, %s38
      %p40 = scmp.eq.s32.totalorder %s39, 0
      %s42 = sadd.s32 %s41, 1
      %s43 = scalar_select %p40, %s41, %s42
      %p46 = pneg %p40
      %p47 = scmp.eq.s32.totalorder %s17, 1
      %p48 = por %p46, %p47
      %p49 = scmp.ne.s32.totalorder %s41, %s44
      %p50 = scmp.eq.s32.totalorder %s17, 0
      %p51 = por %p49, %p50
      %p52 = scmp.ne.s32.totalorder %s41, %s44
      %p53 = scmp.eq.s32.totalorder %s22, 1
      %p54 = por %p52, %p53
      %p55 = scmp.ne.s32.totalorder %s44, %s45
      %p56 = scmp.eq.s32.totalorder %s22, 0
      %p57 = por %p55, %p56
      %p58 = scmp.ne.s32.totalorder %s44, %s45
      %p59 = scmp.eq.s32.totalorder %s23, 1
      %p60 = por %p58, %p59
      %p62 = scmp.ne.s32.totalorder %s45, %s61
      %p63 = scmp.eq.s32.totalorder %s23, 0
      %p64 = por %p62, %p63
      %s65 = ssub.s32 %s24, %s36
      %s66 = ssub.s32 %s25, %s32
      %s67 = sor.u32 %s65, %s66
      %p68 = scmp.eq.s32.totalorder %s67, 0
      %s70 = sadd.s32 %s69, 1
      %s71 = scalar_select %p68, %s69, %s70
      %p74 = pneg %p68
      %p75 = scmp.eq.s32.totalorder %s17, 1
      %p76 = por %p74, %p75
      %p77 = scmp.ne.s32.totalorder %s69, %s72
      %p78 = scmp.eq.s32.totalorder %s17, 0
      %p79 = por %p77, %p78
      %p80 = scmp.ne.s32.totalorder %s69, %s72
      %p81 = scmp.eq.s32.totalorder %s22, 1
      %p82 = por %p80, %p81
      %p83 = scmp.ne.s32.totalorder %s72, %s73
      %p84 = scmp.eq.s32.totalorder %s22, 0
      %p85 = por %p83, %p84
      %p86 = scmp.ne.s32.totalorder %s72, %s73
      %p87 = scmp.eq.s32.totalorder %s23, 1
      %p88 = por %p86, %p87
      %p90 = scmp.ne.s32.totalorder %s73, %s89
      %p91 = scmp.eq.s32.totalorder %s23, 0
      %p92 = por %p90, %p91
      %s94 = sadd.s32 %s93, 1
      %p97 = scmp.eq.s32.totalorder %s17, 1
      %p98 = scmp.ne.s32.totalorder %s93, %s95
      %p99 = scmp.eq.s32.totalorder %s17, 0
      %p100 = por %p98, %p99
      %p101 = scmp.ne.s32.totalorder %s93, %s95
      %p102 = scmp.eq.s32.totalorder %s22, 1
      %p103 = por %p101, %p102
      %p104 = scmp.ne.s32.totalorder %s95, %s96
      %p105 = scmp.eq.s32.totalorder %s22, 0
      %p106 = por %p104, %p105
      %p107 = scmp.ne.s32.totalorder %s95, %s96
      %p108 = scmp.eq.s32.totalorder %s23, 1
      %p109 = por %p107, %p108
      %p111 = scmp.ne.s32.totalorder %s96, %s110
      %p112 = scmp.eq.s32.totalorder %s23, 0
      %p113 = por %p111, %p112
      %s115 = sadd.s32 %s114, 1
      %p118 = scmp.eq.s32.totalorder %s17, 1
      %p119 = scmp.ne.s32.totalorder %s114, %s116
      %p120 = scmp.eq.s32.totalorder %s17, 0
      %p121 = por %p119, %p120
      %p122 = scmp.ne.s32.totalorder %s114, %s116
      %p123 = scmp.eq.s32.totalorder %s22, 1
      %p124 = por %p122, %p123
      %p125 = scmp.ne.s32.totalorder %s116, %s117
      %p126 = scmp.eq.s32.totalorder %s22, 0
      %p127 = por %p125, %p126
      %p128 = scmp.ne.s32.totalorder %s116, %s117
      %p129 = scmp.eq.s32.totalorder %s23, 1
      %p130 = por %p128, %p129
      %p132 = scmp.ne.s32.totalorder %s117, %s131
      %p133 = scmp.eq.s32.totalorder %s23, 0
      %p134 = por %p132, %p133
      %s136 = sadd.s32 %s135, 1
      %p139 = scmp.eq.s32.totalorder %s17, 1
      %p140 = scmp.ne.s32.totalorder %s135, %s137
      %p141 = scmp.eq.s32.totalorder %s17, 0
      %p142 = por %p140, %p141
      %p143 = scmp.ne.s32.totalorder %s135, %s137
      %p144 = scmp.eq.s32.totalorder %s22, 1
      %p145 = por %p143, %p144
      %p146 = scmp.ne.s32.totalorder %s137, %s138
      %p147 = scmp.eq.s32.totalorder %s22, 0
      %p148 = por %p146, %p147
      %p149 = scmp.ne.s32.totalorder %s137, %s138
      %p150 = scmp.eq.s32.totalorder %s23, 1
      %p151 = por %p149, %p150
      %p153 = scmp.ne.s32.totalorder %s138, %s152
      %p154 = scmp.eq.s32.totalorder %s23, 0
      %p155 = por %p153, %p154
      %s157 = sadd.s32 %s156, 1
      %p160 = scmp.eq.s32.totalorder %s17, 1
      %p161 = scmp.ne.s32.totalorder %s156, %s158
      %p162 = scmp.eq.s32.totalorder %s17, 0
      %p163 = por %p161, %p162
      %p164 = scmp.ne.s32.totalorder %s156, %s158
      %p165 = scmp.eq.s32.totalorder %s22, 1
      %p166 = por %p164, %p165
      %p167 = scmp.ne.s32.totalorder %s158, %s159
      %p168 = scmp.eq.s32.totalorder %s22, 0
      %p169 = por %p167, %p168
      %p170 = scmp.ne.s32.totalorder %s158, %s159
      %p171 = scmp.eq.s32.totalorder %s23, 1
      %p172 = por %p170, %p171
      %p174 = scmp.ne.s32.totalorder %s159, %s173
      %p175 = scmp.eq.s32.totalorder %s23, 0
      %p176 = por %p174, %p175
      %s178 = sadd.s32 %s177, 1
      %p181 = scmp.eq.s32.totalorder %s17, 1
      %p182 = scmp.ne.s32.totalorder %s177, %s179
      %p183 = scmp.eq.s32.totalorder %s17, 0
      %p184 = por %p182, %p183
      %p185 = scmp.ne.s32.totalorder %s177, %s179
      %p186 = scmp.eq.s32.totalorder %s22, 1
      %p187 = por %p185, %p186
      %p188 = scmp.ne.s32.totalorder %s179, %s180
      %p189 = scmp.eq.s32.totalorder %s22, 0
      %p190 = por %p188, %p189
      %p191 = scmp.ne.s32.totalorder %s179, %s180
      %p192 = scmp.eq.s32.totalorder %s23, 1
      %p193 = por %p191, %p192
      %p195 = scmp.ne.s32.totalorder %s180, %s194
      %p196 = scmp.eq.s32.totalorder %s23, 0
      %p197 = por %p195, %p196
      %s199 = sadd.s32 %s198, 1
      %p202 = scmp.eq.s32.totalorder %s17, 1
      %p203 = scmp.ne.s32.totalorder %s198, %s200
      %p204 = scmp.eq.s32.totalorder %s17, 0
      %p205 = por %p203, %p204
      %p206 = scmp.ne.s32.totalorder %s198, %s200
      %p207 = scmp.eq.s32.totalorder %s22, 1
      %p208 = por %p206, %p207
      %p209 = scmp.ne.s32.totalorder %s200, %s201
      %p210 = scmp.eq.s32.totalorder %s22, 0
      %p211 = por %p209, %p210
      %p212 = scmp.ne.s32.totalorder %s200, %s201
      %p213 = scmp.eq.s32.totalorder %s23, 1
      %p214 = por %p212, %p213
      %p216 = scmp.ne.s32.totalorder %s201, %s215
      %p217 = scmp.eq.s32.totalorder %s23, 0
      %p218 = por %p216, %p217
      %s219 = ssub.s32 %s24, %s36
      %s220 = ssub.s32 %s25, %s32
      %s221 = sor.u32 %s219, %s220
      %p222 = scmp.eq.s32.totalorder %s221, 0
      %s224 = sadd.s32 %s223, 1
      %s225 = scalar_select %p222, %s223, %s224
      %p228 = pneg %p222
      %p229 = scmp.eq.s32.totalorder %s17, 1
      %p230 = por %p228, %p229
      %p231 = scmp.ne.s32.totalorder %s223, %s226
      %p232 = scmp.eq.s32.totalorder %s17, 0
      %p233 = por %p231, %p232
      %p234 = scmp.ne.s32.totalorder %s223, %s226
      %p235 = scmp.eq.s32.totalorder %s22, 1
      %p236 = por %p234, %p235
      %p237 = scmp.ne.s32.totalorder %s226, %s227
      %p238 = scmp.eq.s32.totalorder %s22, 0
      %p239 = por %p237, %p238
      %p240 = scmp.ne.s32.totalorder %s226, %s227
      %p241 = scmp.eq.s32.totalorder %s23, 1
      %p242 = por %p240, %p241
      %p244 = scmp.ne.s32.totalorder %s227, %s243
      %p245 = scmp.eq.s32.totalorder %s23, 0
      %p246 = por %p244, %p245
      %p247 = scmp.le.s32.totalorder 1, %s17
      %p248 = scmp.lt.s32.totalorder %s17, 3
      %p249 = pnand %p247, %p248
      %p250 = pneg %p249
      // Predicated region
      $region9: #{block_cross_forward.5} parent=5 // pred_check
        _
      $region10: #{block_cross_forward.5} parent=5 // pred_check_branch
        %252 = sbr.rel (%p249) target = $region12
      $region11: #{block_cross_forward.5} parent=5 // pred_region
        %s253 = ssub.s32 %s17, 1
        // Predicated region
        $region13: #{block_cross_forward.5} parent=11 // pred_check
          %p254 = pneg %p106
        $region14: #{block_cross_forward.5} parent=11 // pred_check_branch
          %256 = sbr.rel (%p254) target = $region16
        $region15: #{block_cross_forward.5} parent=11 // pred_region
          _
        $region16: #{block_cross_forward.5} parent=11 // pred_fallthru
          _
        // Predicated region
        $region17: #{block_cross_forward.5} parent=11 // pred_check
          %p257 = pneg %p127
        $region18: #{block_cross_forward.5} parent=11 // pred_check_branch
          %259 = sbr.rel (%p257) target = $region20
        $region19: #{block_cross_forward.5} parent=11 // pred_region
          _
        $region20: #{block_cross_forward.5} parent=11 // pred_fallthru
          _
        // Predicated region
        $region21: #{block_cross_forward.5} parent=11 // pred_check
          %p260 = pneg %p148
        $region22: #{block_cross_forward.5} parent=11 // pred_check_branch
          %262 = sbr.rel (%p260) target = $region24
        $region23: #{block_cross_forward.5} parent=11 // pred_region
          _
        $region24: #{block_cross_forward.5} parent=11 // pred_fallthru
          _
        // Predicated region
        $region25: #{block_cross_forward.5} parent=11 // pred_check
          %p263 = pneg %p169
        $region26: #{block_cross_forward.5} parent=11 // pred_check_branch
          %265 = sbr.rel (%p263) target = $region28
        $region27: #{block_cross_forward.5} parent=11 // pred_region
          _
        $region28: #{block_cross_forward.5} parent=11 // pred_fallthru
          _
        // Predicated region
        $region29: #{block_cross_forward.5} parent=11 // pred_check
          %p266 = pneg %p190
        $region30: #{block_cross_forward.5} parent=11 // pred_check_branch
          %268 = sbr.rel (%p266) target = $region32
        $region31: #{block_cross_forward.5} parent=11 // pred_region
          _
        $region32: #{block_cross_forward.5} parent=11 // pred_fallthru
          _
        // Predicated region
        $region33: #{block_cross_forward.5} parent=11 // pred_check
          %p269 = pneg %p211
        $region34: #{block_cross_forward.5} parent=11 // pred_check_branch
          %271 = sbr.rel (%p269) target = $region36
        $region35: #{block_cross_forward.5} parent=11 // pred_region
          _
        $region36: #{block_cross_forward.5} parent=11 // pred_fallthru
          _
      $region12: #{block_cross_forward.5} parent=5 // pred_fallthru
        _
      %p272 = scmp.lt.s32.totalorder %s17, 2
      // Predicated region
      $region37: #{block_cross_forward.5} parent=5 // pred_check
        %p273 = pneg %p272
      $region38: #{block_cross_forward.5} parent=5 // pred_check_branch
        %275 = sbr.rel (%p273) target = $region40
      $region39: #{block_cross_forward.5} parent=5 // pred_region
        // Predicated region
        $region41: #{block_cross_forward.5} parent=39 // pred_check
          %p276 = pneg %p51
        $region42: #{block_cross_forward.5} parent=39 // pred_check_branch
          %278 = sbr.rel (%p276) target = $region44
        $region43: #{block_cross_forward.5} parent=39 // pred_region
          %p279 = scmp.lt.s32.totalorder %s24, 1
          %s280 = scalar_select %p279, %s24, 1
          %p281 = scmp.lt.s32.totalorder %s25, 0
          %s282 = scalar_select %p281, %s25, 0
          %s283 = sadd.s32 %s282, %s280
          %s284 = smul.addr %s283, 8
          %s285 = scalar_lea.vmem %s0, %s284
        $region44: #{block_cross_forward.5} parent=39 // pred_fallthru
          _
        // Predicated region
        $region45: #{block_cross_forward.5} parent=39 // pred_check
          %p286 = pneg %p79
        $region46: #{block_cross_forward.5} parent=39 // pred_check_branch
          %288 = sbr.rel (%p286) target = $region48
        $region47: #{block_cross_forward.5} parent=39 // pred_region
          %p289 = scmp.lt.s32.totalorder %s24, 1
          %s290 = scalar_select %p289, %s24, 1
          %p291 = scmp.lt.s32.totalorder %s25, 0
          %s292 = scalar_select %p291, %s25, 0
          %s293 = sadd.s32 %s292, %s290
          %s294 = smul.addr %s293, 8
          %s295 = scalar_lea.vmem %s1, %s294
        $region48: #{block_cross_forward.5} parent=39 // pred_fallthru
          _
      $region40: #{block_cross_forward.5} parent=5 // pred_fallthru
        _
      %p296 = scmp.le.s32.totalorder 1, %s17
      %p297 = scmp.lt.s32.totalorder %s17, 3
      %p298 = pnand %p296, %p297
      %p299 = pneg %p298
      // Predicated region
      $region49: #{block_cross_forward.5} parent=5 // pred_check
        _
      $region50: #{block_cross_forward.5} parent=5 // pred_check_branch
        %301 = sbr.rel (%p298) target = $region52
      $region51: #{block_cross_forward.5} parent=5 // pred_region
        %s302 = ssub.s32 %s17, 1
        %p303 = scmp.lt.s32.totalorder %s26, 1
        %s304 = scalar_select %p303, %s26, 1
        %p305 = scmp.lt.s32.totalorder %s27, 0
        %s306 = scalar_select %p305, %s27, 0
        %s307 = sadd.s32 %s306, %s304
        %s308 = smul.addr %s307, 8
        %s309 = scalar_lea.vmem %s0, %s308
        %p310 = pneg %p57
        %p311 = pneg %p54
        %p312 = scmp.lt.s32.totalorder %s26, 1
        %s313 = scalar_select %p312, %s26, 1
        %p314 = scmp.lt.s32.totalorder %s27, 0
        %s315 = scalar_select %p314, %s27, 0
        %s316 = sadd.s32 %s315, %s313
        %s317 = smul.addr %s316, 8
        %s318 = scalar_lea.vmem %s1, %s317
        %p319 = pneg %p85
        %p320 = pneg %p82
        %p321 = pneg %p106
        %p322 = pneg %p103
        %p323 = pneg %p127
        %p324 = pneg %p124
        %p325 = pneg %p148
        %p326 = pneg %p145
        %p327 = pneg %p169
        %p328 = pneg %p166
        %p329 = pneg %p190
        %p330 = pneg %p187
        %p331 = pneg %p211
        %p332 = pneg %p208
        %p333 = pneg %p239
        %p334 = pneg %p236
        %s335 = sand.u32 %s226, 1
        %s336 = scalar_lea.sflag [#allocation3], %s335
        %s337 = sand.u32 %s226, 1
        %s338 = smul.addr %s337, 8
        %s339 = scalar_lea.vmem [#allocation2], %s338
        %p340 = scmp.lt.s32.totalorder %s26, 1
        %s341 = scalar_select %p340, %s26, 1
        %p342 = scmp.lt.s32.totalorder %s27, 0
        %s343 = scalar_select %p342, %s27, 0
        %s344 = sadd.s32 %s343, %s341
        %s345 = smul.addr %s344, 8
        %s346 = scalar_lea.vmem %s0, %s345
        %p347 = scmp.lt.s32.totalorder %s26, 1
        %s348 = scalar_select %p347, %s26, 1
        %p349 = scmp.lt.s32.totalorder %s27, 0
        %s350 = scalar_select %p349, %s27, 0
        %s351 = sadd.s32 %s350, %s348
        %s352 = smul.addr %s351, 8
        %s353 = scalar_lea.vmem %s1, %s352
        %v354 = vld [vmem:[%s346] sm:$0xff]
        %v355 = vld [vmem:[%s2] sm:$0xff]
        %v356 = vld [vmem:[%s2 + $0x8] sm:$0xff]
        %v357 = vld [vmem:[%s2 + $0x10] sm:$0xff]
        %v358 = vld [vmem:[%s2 + $0x18] sm:$0xff]
        %v359 = vld [vmem:[%s3] sm:$0x1]
        %v361 = vlaneseq
        %v362 = vshrl.u32 %v361, 7
        %v363 = vsub.s32 0, %v362
        %v364 = vrot.slane %v359, %v363
        %vm366 = vcmask 261120
        %v368 = vsel %vm366, %v354, 0
        %370 = vmatprep.subr.mxu0 0.0
        %371 = vmatpush1.msra.mxu0 0.0
        %372 = vmatprep.subr.mxu0 0.0
        %373 = vmatpush1.msra.mxu0 0.0
        %374 = vmatprep.subr.mxu0 0.0
        %375 = vmatpush1.msra.mxu0 0.0
        %376 = vmatprep.subr.mxu0 0.0
        %377 = vmatpush1.msra.mxu0 0.0
        %378 = vmatprep.subr.mxu0 0.0
        %379 = vmatpush1.msra.mxu0 0.0
        %380 = vmatprep.subr.mxu0 0.0
        %381 = vmatpush1.msra.mxu0 0.0
        %382 = vmatprep.subr.mxu0 0.0
        %383 = vmatpush1.msra.mxu0 0.0
        %384 = vmatprep.subr.mxu0 0.0
        %385 = vmatpush1.msra.mxu0 0.0
        %386 = vmatprep.subr.mxu0 0.0
        %387 = vmatpush1.msra.mxu0 0.0
        %388 = vmatprep.subr.mxu0 0.0
        %389 = vmatpush1.msra.mxu0 0.0
        %390 = vmatprep.subr.mxu0 0.0
        %391 = vmatpush1.msra.mxu0 0.0
        %392 = vmatprep.subr.mxu0 0.0
        %393 = vmatpush1.msra.mxu0 0.0
        %394 = vmatprep.subr.mxu0 0.0
        %395 = vmatpush1.msra.mxu0 %v358
        %396 = vmatprep.subr.mxu0 0.0
        %397 = vmatpush1.msra.mxu0 %v357
        %398 = vmatprep.subr.mxu0 0.0
        %399 = vmatpush1.msra.mxu0 %v356
        %400 = vmatprep.subr.mxu0 0.0
        %401 = vmatpush1.msra.mxu0 %v355
        %402 = vmatprep.subr.mxu0 0.0
        %403 = vmatpush2.msra.mxu0 0.0
        %404 = vmatprep.subr.mxu0 0.0
        %405 = vmatpush2.msra.mxu0 0.0
        %406 = vmatprep.subr.mxu0 0.0
        %407 = vmatpush2.msra.mxu0 0.0
        %408 = vmatprep.subr.mxu0 0.0
        %409 = vmatpush2.msra.mxu0 0.0
        %410 = vmatprep.subr.mxu0 0.0
        %411 = vmatpush2.msra.mxu0 0.0
        %412 = vmatprep.subr.mxu0 0.0
        %413 = vmatpush2.msra.mxu0 0.0
        %414 = vmatprep.subr.mxu0 0.0
        %415 = vmatpush2.msra.mxu0 0.0
        %416 = vmatprep.subr.mxu0 0.0
        %417 = vmatpush2.msra.mxu0 0.0
        %418 = vmatprep.subr.mxu0 0.0
        %419 = vmatpush2.msra.mxu0 0.0
        %420 = vmatprep.subr.mxu0 0.0
        %421 = vmatpush2.msra.mxu0 0.0
        %422 = vmatprep.subr.mxu0 0.0
        %423 = vmatpush2.msra.mxu0 0.0
        %424 = vmatprep.subr.mxu0 0.0
        %425 = vmatpush2.msra.mxu0 0.0
        %426 = vmatprep.subr.mxu0 0.0
        %427 = vmatpush2.msra.mxu0 0.0
        %428 = vmatprep.subr.mxu0 0.0
        %429 = vmatpush2.msra.mxu0 0.0
        %430 = vmatprep.subr.mxu0 0.0
        %431 = vmatpush2.msra.mxu0 0.0
        %432 = vmatprep.subr.mxu0 0.0
        %433 = vmatpush2.msra.mxu0 0.0
        %434 = vmatprep.mubr.f32.mxu0 0.0
        %435 = vmatmul.mubr.f32.gmra.mxu0 %v368
        %v436 = vpop.f32.mrf.mxu0
        %v437 = vadd.f32 %v364, %v436
        %v438 = vpop.f32.mrf.mxu0
        %439 = vdwg.mxu0
        %v440 = vmax.f32 %v437, 0.0
        %v441 = vld [vmem:[%s4] sm:$0xff]
        %v442 = vld [vmem:[%s4 + $0x8] sm:$0xff]
        %v443 = vld [vmem:[%s4 + $0x10] sm:$0xff]
        %v444 = vld [vmem:[%s4 + $0x18] sm:$0xff]
        %v445 = vld [vmem:[%s4 + $0x20] sm:$0xff]
        %v446 = vld [vmem:[%s4 + $0x28] sm:$0xff]
        %v447 = vld [vmem:[%s4 + $0x30] sm:$0xff]
        %v448 = vld [vmem:[%s4 + $0x38] sm:$0xff]
        %v449 = vld [vmem:[%s5] sm:$0x1]
        %v451 = vlaneseq
        %v452 = vshrl.u32 %v451, 7
        %v453 = vsub.s32 0, %v452
        %v454 = vrot.slane %v449, %v453
        %vm456 = vcmask 523264
        %v458 = vsel %vm456, %v440, 0
        %460 = vmatprep.subr.mxu0 0.0
        %461 = vmatpush1.msra.mxu0 0.0
        %462 = vmatprep.subr.mxu0 0.0
        %463 = vmatpush1.msra.mxu0 0.0
        %464 = vmatprep.subr.mxu0 0.0
        %465 = vmatpush1.msra.mxu0 0.0
        %466 = vmatprep.subr.mxu0 0.0
        %467 = vmatpush1.msra.mxu0 0.0
        %468 = vmatprep.subr.mxu0 0.0
        %469 = vmatpush1.msra.mxu0 0.0
        %470 = vmatprep.subr.mxu0 0.0
        %471 = vmatpush1.msra.mxu0 0.0
        %472 = vmatprep.subr.mxu0 0.0
        %473 = vmatpush1.msra.mxu0 0.0
        %474 = vmatprep.subr.mxu0 0.0
        %475 = vmatpush1.msra.mxu0 0.0
        %476 = vmatprep.subr.mxu0 0.0
        %477 = vmatpush1.msra.mxu0 %v448
        %478 = vmatprep.subr.mxu0 0.0
        %479 = vmatpush1.msra.mxu0 %v447
        %480 = vmatprep.subr.mxu0 0.0
        %481 = vmatpush1.msra.mxu0 %v446
        %482 = vmatprep.subr.mxu0 0.0
        %483 = vmatpush1.msra.mxu0 %v445
        %484 = vmatprep.subr.mxu0 0.0
        %485 = vmatpush1.msra.mxu0 %v444
        %486 = vmatprep.subr.mxu0 0.0
        %487 = vmatpush1.msra.mxu0 %v443
        %488 = vmatprep.subr.mxu0 0.0
        %489 = vmatpush1.msra.mxu0 %v442
        %490 = vmatprep.subr.mxu0 0.0
        %491 = vmatpush1.msra.mxu0 %v441
        %492 = vmatprep.subr.mxu0 0.0
        %493 = vmatpush2.msra.mxu0 0.0
        %494 = vmatprep.subr.mxu0 0.0
        %495 = vmatpush2.msra.mxu0 0.0
        %496 = vmatprep.subr.mxu0 0.0
        %497 = vmatpush2.msra.mxu0 0.0
        %498 = vmatprep.subr.mxu0 0.0
        %499 = vmatpush2.msra.mxu0 0.0
        %500 = vmatprep.subr.mxu0 0.0
        %501 = vmatpush2.msra.mxu0 0.0
        %502 = vmatprep.subr.mxu0 0.0
        %503 = vmatpush2.msra.mxu0 0.0
        %504 = vmatprep.subr.mxu0 0.0
        %505 = vmatpush2.msra.mxu0 0.0
        %506 = vmatprep.subr.mxu0 0.0
        %507 = vmatpush2.msra.mxu0 0.0
        %508 = vmatprep.subr.mxu0 0.0
        %509 = vmatpush2.msra.mxu0 0.0
        %510 = vmatprep.subr.mxu0 0.0
        %511 = vmatpush2.msra.mxu0 0.0
        %512 = vmatprep.subr.mxu0 0.0
        %513 = vmatpush2.msra.mxu0 0.0
        %514 = vmatprep.subr.mxu0 0.0
        %515 = vmatpush2.msra.mxu0 0.0
        %516 = vmatprep.subr.mxu0 0.0
        %517 = vmatpush2.msra.mxu0 0.0
        %518 = vmatprep.subr.mxu0 0.0
        %519 = vmatpush2.msra.mxu0 0.0
        %520 = vmatprep.subr.mxu0 0.0
        %521 = vmatpush2.msra.mxu0 0.0
        %522 = vmatprep.subr.mxu0 0.0
        %523 = vmatpush2.msra.mxu0 0.0
        %524 = vmatprep.mubr.f32.mxu0 0.0
        %525 = vmatmul.mubr.f32.gmra.mxu0 %v458
        %v526 = vpop.f32.mrf.mxu0
        %v527 = vadd.f32 %v454, %v526
        %v528 = vpop.f32.mrf.mxu0
        %529 = vdwg.mxu0
        %v530 = vld [vmem:[%s353] sm:$0xff]
        %v531 = vadd.f32 %v527, %v530
        %v532 = vsel %vm366, %v531, 0.0
        %533 = vadd.xlane.f32.xlu0 %v532
        %v534 = vpop.xlane.xlu0 %533
        %v535 = vrcp.pop 32.0
        %v536 = vmul.f32 %v534, %v535
        %v537 = vsub.f32 %v531, %v536
        %v538 = vmul.f32 %v537, %v537
        %v539 = vsel %vm366, %v538, 0.0
        %540 = vadd.xlane.f32.xlu0 %v539
        %v541 = vpop.xlane.xlu0 %540
        %v542 = vmul.f32 %v541, %v535
        %v543 = vadd.f32 %v542, 1e-05
        %v544 = vrsqrt.pop %v543
        %v545 = vmul.f32 %v537, %v544
        %v546 = vld [vmem:[%s6] sm:$0x1]
        %v548 = vlaneseq
        %v549 = vshrl.u32 %v548, 7
        %v550 = vsub.s32 0, %v549
        %v551 = vrot.slane %v546, %v550
        %v553 = vmul.f32 %v545, %v551
        %v554 = vld [vmem:[%s7] sm:$0x1]
        %v556 = vlaneseq
        %v557 = vshrl.u32 %v556, 7
        %v558 = vsub.s32 0, %v557
        %v559 = vrot.slane %v554, %v558
        %v561 = vadd.f32 %v553, %v559
        %562 = vst.msk [vmem:[%s339] sm:$0xff] %vm366, %v561
        %s563 = sand.u32 %s226, 1
        %s564 = scalar_lea.sflag [#allocation3], %s563
        %s565 = sand.u32 %s226, 1
        %s566 = smul.addr %s565, 8
        %s567 = scalar_lea.vmem [#allocation2], %s566
        // Predicated region
        $region53: #{block_cross_forward.5} parent=51 // pred_check
          %p568 = pneg %p236
        $region54: #{block_cross_forward.5} parent=51 // pred_check_branch
          %570 = sbr.rel (%p568) target = $region56
        $region55: #{block_cross_forward.5} parent=51 // pred_region
          %s572 = ssub.s32 128, 128
          %573 = vsyncadd %s564, %s572
          %s574 = sadd.s32 %s27, %s26
          %s575 = smul.addr %s574, 128
          %s576 = scalar_lea.hbm %s8, %s575
          %s578 = sshll.u32 %s567, 4
          %s579 = int_to_ptr.vmem [resolvable:$true] %s578
          %581 = dma.vmem_to_hbm [thread:$0]  %s579, 128, %s576, %s564
        $region56: #{block_cross_forward.5} parent=51 // pred_fallthru
          _
      $region52: #{block_cross_forward.5} parent=5 // pred_fallthru
        _
      %p582 = scmp.le.s32.totalorder 2, %s17
      // Predicated region
      $region57: #{block_cross_forward.5} parent=5 // pred_check
        %p583 = pneg %p582
      $region58: #{block_cross_forward.5} parent=5 // pred_check_branch
        %585 = sbr.rel (%p583) target = $region60
      $region59: #{block_cross_forward.5} parent=5 // pred_region
        %s586 = ssub.s32 %s17, 2
        // Predicated region
        $region61: #{block_cross_forward.5} parent=59 // pred_check
          %p587 = pneg %p242
        $region62: #{block_cross_forward.5} parent=59 // pred_check_branch
          %589 = sbr.rel (%p587) target = $region64
        $region63: #{block_cross_forward.5} parent=59 // pred_region
          %s590 = sand.u32 %s227, 1
          %s591 = scalar_lea.sflag [#allocation3], %s590
          %s592 = sand.u32 %s227, 1
          %s593 = smul.addr %s592, 8
          %s594 = scalar_lea.vmem [#allocation2], %s593
          %595 = dma.done %s591, 128
        $region64: #{block_cross_forward.5} parent=59 // pred_fallthru
          _
      $region60: #{block_cross_forward.5} parent=5 // pred_fallthru
        _
    $region6: #{block_cross_forward.5} parent=1 // loop_footer
      %s21 = sadd.s32 1, %s17
    $region7: #{block_cross_forward.5} parent=1 // loop_footer_branch
      %16 = sbr.rel target = $region3
    $region8: #{block_cross_forward.5} parent=1 // loop_exit
      _
    %596 = vsyncpa [#allocation3], 1
    %s597 = scalar_lea.sflag [#allocation3], 1
    %598 = vsyncpa %s597, 1

// kernel: block_cross_forward.4
$region0: #{block_cross_forward.4}
  #allocation0 [shape = 'u32[]', space=smem, size = 0x4, offset = 0x4, fixed_abs, tag = 'smem constant byte address 0x4 - core index']
  #allocation1 [shape = 'u32[144,128]{1,0:T(1,128)}', space=vmem, size = 0x12000, scoped, tag = 'internal scratch']
  %s0 = inlined_call_operand.vmem [shape: f32[2,8,2,16], index: 0, kind: input, shape index: {}]
  %s1 = inlined_call_operand.vmem [shape: f32[2,16,16,4], index: 1, kind: input, shape index: {}]
  %s2 = inlined_call_operand.vmem [shape: f32[16,4,4], index: 2, kind: input, shape index: {}]
  %s3 = inlined_call_operand.vmem [shape: f32[2,8,2,16], index: 3, kind: output, shape index: {}]
  %s4 = sld [smem:[#allocation0]]
  $region45: #{block_cross_forward.4} parent=0
    _
  %s6 = ssub.s32 1, %s4
  %s7 = scalar_select 0, %s6, %s4
  loop: start=0, step=1, limit=4
  $region2: #{block_cross_forward.4} parent=0 // loop_pre_header
    _
  $region3: #{block_cross_forward.4} parent=0 // loop_header
    %s9 = sphi 0, %s13
    %p10 = scmp.ge.s32.totalorder %s9, 4
    %s19 = sphi 0, %s21
    %s22 = sphi 0, %s19
    %s23 = sphi 0, %s22
    %s39 = sphi 0, %s23
    %s45 = sphi 0, %s47
    %s48 = sphi 0, %s45
    %s49 = sphi 0, %s48
    %s65 = sphi 0, %s49
    %s69 = sphi 0, %s69
    %s71 = sphi 0, %s69
    %s72 = sphi 0, %s71
    %s86 = sphi 0, %s72
    %s92 = sphi 0, %s94
    %s95 = sphi 0, %s92
    %s96 = sphi 0, %s95
    %s112 = sphi 0, %s96
  $region4: #{block_cross_forward.4} parent=0 // loop_header_branch
    %12 = sbr.rel (%p10) target = $region8
  $region5: #{block_cross_forward.4} parent=0 // loop_body
    %s14 = ssub.s32 %s9, 1
    %s15 = ssub.s32 %s9, 2
    %s16 = sadd.s32 %s9, 1
    %s17 = ssub.s32 %s9, %s16
    %p18 = scmp.eq.s32.totalorder %s17, 0
    %s20 = sadd.s32 %s19, 1
    %s21 = scalar_select %p18, %s19, %s20
    %p24 = pneg %p18
    %p25 = scmp.eq.s32.totalorder %s9, 1
    %p26 = por %p24, %p25
    %p27 = scmp.ne.s32.totalorder %s19, %s22
    %p28 = scmp.eq.s32.totalorder %s9, 0
    %p29 = por %p27, %p28
    %p30 = scmp.ne.s32.totalorder %s19, %s22
    %p31 = scmp.eq.s32.totalorder %s14, 1
    %p32 = por %p30, %p31
    %p33 = scmp.ne.s32.totalorder %s22, %s23
    %p34 = scmp.eq.s32.totalorder %s14, 0
    %p35 = por %p33, %p34
    %p36 = scmp.ne.s32.totalorder %s22, %s23
    %p37 = scmp.eq.s32.totalorder %s15, 1
    %p38 = por %p36, %p37
    %p40 = scmp.ne.s32.totalorder %s23, %s39
    %p41 = scmp.eq.s32.totalorder %s15, 0
    %p42 = por %p40, %p41
    %s43 = ssub.s32 %s9, %s16
    %p44 = scmp.eq.s32.totalorder %s43, 0
    %s46 = sadd.s32 %s45, 1
    %s47 = scalar_select %p44, %s45, %s46
    %p50 = pneg %p44
    %p51 = scmp.eq.s32.totalorder %s9, 1
    %p52 = por %p50, %p51
    %p53 = scmp.ne.s32.totalorder %s45, %s48
    %p54 = scmp.eq.s32.totalorder %s9, 0
    %p55 = por %p53, %p54
    %p56 = scmp.ne.s32.totalorder %s45, %s48
    %p57 = scmp.eq.s32.totalorder %s14, 1
    %p58 = por %p56, %p57
    %p59 = scmp.ne.s32.totalorder %s48, %s49
    %p60 = scmp.eq.s32.totalorder %s14, 0
    %p61 = por %p59, %p60
    %p62 = scmp.ne.s32.totalorder %s48, %s49
    %p63 = scmp.eq.s32.totalorder %s15, 1
    %p64 = por %p62, %p63
    %p66 = scmp.ne.s32.totalorder %s49, %s65
    %p67 = scmp.eq.s32.totalorder %s15, 0
    %p68 = por %p66, %p67
    %s70 = sadd.s32 %s69, 1
    %p73 = scmp.eq.s32.totalorder %s9, 1
    %p74 = scmp.ne.s32.totalorder %s69, %s71
    %p75 = scmp.eq.s32.totalorder %s9, 0
    %p76 = por %p74, %p75
    %p77 = scmp.ne.s32.totalorder %s69, %s71
    %p78 = scmp.eq.s32.totalorder %s14, 1
    %p79 = por %p77, %p78
    %p80 = scmp.ne.s32.totalorder %s71, %s72
    %p81 = scmp.eq.s32.totalorder %s14, 0
    %p82 = por %p80, %p81
    %p83 = scmp.ne.s32.totalorder %s71, %s72
    %p84 = scmp.eq.s32.totalorder %s15, 1
    %p85 = por %p83, %p84
    %p87 = scmp.ne.s32.totalorder %s72, %s86
    %p88 = scmp.eq.s32.totalorder %s15, 0
    %p89 = por %p87, %p88
    %s90 = ssub.s32 %s9, %s16
    %p91 = scmp.eq.s32.totalorder %s90, 0
    %s93 = sadd.s32 %s92, 1
    %s94 = scalar_select %p91, %s92, %s93
    %p97 = pneg %p91
    %p98 = scmp.eq.s32.totalorder %s9, 1
    %p99 = por %p97, %p98
    %p100 = scmp.ne.s32.totalorder %s92, %s95
    %p101 = scmp.eq.s32.totalorder %s9, 0
    %p102 = por %p100, %p101
    %p103 = scmp.ne.s32.totalorder %s92, %s95
    %p104 = scmp.eq.s32.totalorder %s14, 1
    %p105 = por %p103, %p104
    %p106 = scmp.ne.s32.totalorder %s95, %s96
    %p107 = scmp.eq.s32.totalorder %s14, 0
    %p108 = por %p106, %p107
    %p109 = scmp.ne.s32.totalorder %s95, %s96
    %p110 = scmp.eq.s32.totalorder %s15, 1
    %p111 = por %p109, %p110
    %p113 = scmp.ne.s32.totalorder %s96, %s112
    %p114 = scmp.eq.s32.totalorder %s15, 0
    %p115 = por %p113, %p114
    %p116 = scmp.le.s32.totalorder 1, %s9
    %p117 = scmp.lt.s32.totalorder %s9, 3
    %p118 = pnand %p116, %p117
    %p119 = pneg %p118
    // Predicated region
    $region9: #{block_cross_forward.4} parent=5 // pred_check
      _
    $region10: #{block_cross_forward.4} parent=5 // pred_check_branch
      %121 = sbr.rel (%p118) target = $region12
    $region11: #{block_cross_forward.4} parent=5 // pred_region
      %s122 = ssub.s32 %s9, 1
      // Predicated region
      $region13: #{block_cross_forward.4} parent=11 // pred_check
        %p123 = pneg %p82
      $region14: #{block_cross_forward.4} parent=11 // pred_check_branch
        %125 = sbr.rel (%p123) target = $region16
      $region15: #{block_cross_forward.4} parent=11 // pred_region
        _
      $region16: #{block_cross_forward.4} parent=11 // pred_fallthru
        _
    $region12: #{block_cross_forward.4} parent=5 // pred_fallthru
      _
    %p126 = scmp.lt.s32.totalorder %s9, 2
    // Predicated region
    $region17: #{block_cross_forward.4} parent=5 // pred_check
      %p127 = pneg %p126
    $region18: #{block_cross_forward.4} parent=5 // pred_check_branch
      %129 = sbr.rel (%p127) target = $region20
    $region19: #{block_cross_forward.4} parent=5 // pred_region
      // Predicated region
      $region21: #{block_cross_forward.4} parent=19 // pred_check
        %p130 = pneg %p29
      $region22: #{block_cross_forward.4} parent=19 // pred_check_branch
        %132 = sbr.rel (%p130) target = $region24
      $region23: #{block_cross_forward.4} parent=19 // pred_region
        %p133 = scmp.lt.s32.totalorder %s9, 1
        %s134 = scalar_select %p133, %s9, 1
        %s135 = smul.addr %s134, 8
        %s136 = smul.addr %s135, 2
        %s137 = scalar_lea.vmem %s0, %s136
      $region24: #{block_cross_forward.4} parent=19 // pred_fallthru
        _
      // Predicated region
      $region25: #{block_cross_forward.4} parent=19 // pred_check
        %p138 = pneg %p55
      $region26: #{block_cross_forward.4} parent=19 // pred_check_branch
        %140 = sbr.rel (%p138) target = $region28
      $region27: #{block_cross_forward.4} parent=19 // pred_region
        %p141 = scmp.lt.s32.totalorder %s9, 1
        %s142 = scalar_select %p141, %s9, 1
        %s143 = smul.addr %s142, 32
        %s144 = smul.addr %s143, 8
        %s145 = scalar_lea.vmem %s1, %s144
      $region28: #{block_cross_forward.4} parent=19 // pred_fallthru
        _
    $region20: #{block_cross_forward.4} parent=5 // pred_fallthru
      _
    %p146 = scmp.le.s32.totalorder 1, %s9
    %p147 = scmp.lt.s32.totalorder %s9, 3
    %p148 = pnand %p146, %p147
    %p149 = pneg %p148
    // Predicated region
    $region29: #{block_cross_forward.4} parent=5 // pred_check
      _
    $region30: #{block_cross_forward.4} parent=5 // pred_check_branch
      %151 = sbr.rel (%p148) target = $region32
    $region31: #{block_cross_forward.4} parent=5 // pred_region
      %s152 = ssub.s32 %s9, 1
      %p153 = scmp.lt.s32.totalorder %s14, 1
      %s154 = scalar_select %p153, %s14, 1
      %s155 = smul.addr %s154, 8
      %s156 = smul.addr %s155, 2
      %s157 = scalar_lea.vmem %s0, %s156
      %p158 = pneg %p35
      %p159 = pneg %p32
      %p160 = scmp.lt.s32.totalorder %s14, 1
      %s161 = scalar_select %p160, %s14, 1
      %s162 = smul.addr %s161, 32
      %s163 = smul.addr %s162, 8
      %s164 = scalar_lea.vmem %s1, %s163
      %p165 = pneg %p61
      %p166 = pneg %p58
      %p167 = pneg %p82
      %p168 = pneg %p79
      %p169 = pneg %p108
      %p170 = pneg %p105
      %p171 = scmp.lt.s32.totalorder %s14, 1
      %s172 = scalar_select %p171, %s14, 1
      %s173 = smul.addr %s172, 8
      %s174 = smul.addr %s173, 2
      %s175 = scalar_lea.vmem %s3, %s174
      %p176 = scmp.lt.s32.totalorder %s14, 1
      %s177 = scalar_select %p176, %s14, 1
      %s178 = smul.addr %s177, 8
      %s179 = smul.addr %s178, 2
      %s180 = scalar_lea.vmem %s0, %s179
      %p181 = scmp.lt.s32.totalorder %s14, 1
      %s182 = scalar_select %p181, %s14, 1
      %s183 = smul.addr %s182, 32
      %s184 = smul.addr %s183, 8
      %s185 = scalar_lea.vmem %s1, %s184
      %p186 = scmp.lt.s32.totalorder %s14, 1
      %s187 = scalar_select %p186, %s14, 1
      %s188 = smul.addr %s187, 8
      %s189 = smul.addr %s188, 2
      %s190 = scalar_lea.vmem %s3, %s189
      %v191 = vld [vmem:[%s180] sm:$0x3]
      %v192 = vld [vmem:[%s180 + $0x2] sm:$0x3]
      %v193 = vld [vmem:[%s180 + $0x4] sm:$0x3]
      %v194 = vld [vmem:[%s180 + $0x6] sm:$0x3]
      %v195 = vld [vmem:[%s180 + $0x8] sm:$0x3]
      %v196 = vld [vmem:[%s180 + $0xa] sm:$0x3]
      %v197 = vld [vmem:[%s180 + $0xc] sm:$0x3]
      %v198 = vld [vmem:[%s180 + $0xe] sm:$0x3]
      %v199 = vld [vmem:[%s185] sm:$0xff]
      %v200 = vld [vmem:[%s185 + $0x8] sm:$0xff]
      %v201 = vld [vmem:[%s185 + $0x10] sm:$0xff]
      %v202 = vld [vmem:[%s185 + $0x18] sm:$0xff]
      %v203 = vld [vmem:[%s185 + $0x20] sm:$0xff]
      %v204 = vld [vmem:[%s185 + $0x28] sm:$0xff]
      %v205 = vld [vmem:[%s185 + $0x30] sm:$0xff]
      %v206 = vld [vmem:[%s185 + $0x38] sm:$0xff]
      %v207 = vld [vmem:[%s185 + $0x40] sm:$0xff]
      %v208 = vld [vmem:[%s185 + $0x48] sm:$0xff]
      %v209 = vld [vmem:[%s185 + $0x50] sm:$0xff]
      %v210 = vld [vmem:[%s185 + $0x58] sm:$0xff]
      %v211 = vld [vmem:[%s185 + $0x60] sm:$0xff]
      %v212 = vld [vmem:[%s185 + $0x68] sm:$0xff]
      %v213 = vld [vmem:[%s185 + $0x70] sm:$0xff]
      %v214 = vld [vmem:[%s185 + $0x78] sm:$0xff]
      %v215 = vld [vmem:[%s185 + $0x80] sm:$0xff]
      %v216 = vld [vmem:[%s185 + $0x88] sm:$0xff]
      %v217 = vld [vmem:[%s185 + $0x90] sm:$0xff]
      %v218 = vld [vmem:[%s185 + $0x98] sm:$0xff]
      %v219 = vld [vmem:[%s185 + $0xa0] sm:$0xff]
      %v220 = vld [vmem:[%s185 + $0xa8] sm:$0xff]
      %v221 = vld [vmem:[%s185 + $0xb0] sm:$0xff]
      %v222 = vld [vmem:[%s185 + $0xb8] sm:$0xff]
      %v223 = vld [vmem:[%s185 + $0xc0] sm:$0xff]
      %v224 = vld [vmem:[%s185 + $0xc8] sm:$0xff]
      %v225 = vld [vmem:[%s185 + $0xd0] sm:$0xff]
      %v226 = vld [vmem:[%s185 + $0xd8] sm:$0xff]
      %v227 = vld [vmem:[%s185 + $0xe0] sm:$0xff]
      %v228 = vld [vmem:[%s185 + $0xe8] sm:$0xff]
      %v229 = vld [vmem:[%s185 + $0xf0] sm:$0xff]
      %v230 = vld [vmem:[%s185 + $0xf8] sm:$0xff]
      %v231 = vld [vmem:[%s2] sm:$0xf]
      %v232 = vld [vmem:[%s2 + $0x4] sm:$0xf]
      %v233 = vld [vmem:[%s2 + $0x8] sm:$0xf]
      %v234 = vld [vmem:[%s2 + $0xc] sm:$0xf]
      %v235 = vld [vmem:[%s2 + $0x10] sm:$0xf]
      %v236 = vld [vmem:[%s2 + $0x14] sm:$0xf]
      %v237 = vld [vmem:[%s2 + $0x18] sm:$0xf]
      %v238 = vld [vmem:[%s2 + $0x1c] sm:$0xf]
      %v239 = vld [vmem:[%s2 + $0x20] sm:$0xf]
      %v240 = vld [vmem:[%s2 + $0x24] sm:$0xf]
      %v241 = vld [vmem:[%s2 + $0x28] sm:$0xf]
      %v242 = vld [vmem:[%s2 + $0x2c] sm:$0xf]
      %v243 = vld [vmem:[%s2 + $0x30] sm:$0xf]
      %v244 = vld [vmem:[%s2 + $0x34] sm:$0xf]
      %v245 = vld [vmem:[%s2 + $0x38] sm:$0xf]
      %v246 = vld [vmem:[%s2 + $0x3c] sm:$0xf]
      %vm247 = vcmask 31744
      %v249 = vsel %vm247, %v199, 0
      %v252 = vsel %vm247, %v200, 0
      %vm254 = vcmask 1043456
      %v256 = vsel %vm254, %v231, 0
      %258 = vmatprep.subr.mxu0 0.0
      %259 = vmatpush1.msra.mxu0 0.0
      %260 = vmatprep.subr.mxu0 0.0
      %261 = vmatpush1.msra.mxu0 0.0
      %262 = vmatprep.subr.mxu0 0.0
      %263 = vmatpush1.msra.mxu0 0.0
      %264 = vmatprep.subr.mxu0 0.0
      %265 = vmatpush1.msra.mxu0 0.0
      %266 = vmatprep.subr.mxu0 0.0
      %267 = vmatpush1.msra.mxu0 0.0
      %268 = vmatprep.subr.mxu0 0.0
      %269 = vmatpush1.msra.mxu0 0.0
      %270 = vmatprep.subr.mxu0 0.0
      %271 = vmatpush1.msra.mxu0 0.0
      %272 = vmatprep.subr.mxu0 0.0
      %273 = vmatpush1.msra.mxu0 0.0
      %274 = vmatprep.subr.mxu0 0.0
      %275 = vmatpush1.msra.mxu0 0.0
      %276 = vmatprep.subr.mxu0 0.0
      %277 = vmatpush1.msra.mxu0 0.0
      %278 = vmatprep.subr.mxu0 0.0
      %279 = vmatpush1.msra.mxu0 0.0
      %280 = vmatprep.subr.mxu0 0.0
      %281 = vmatpush1.msra.mxu0 0.0
      %282 = vmatprep.subr.mxu0 0.0
      %283 = vmatpush1.msra.mxu0 0.0
      %284 = vmatprep.subr.mxu0 0.0
      %285 = vmatpush1.msra.mxu0 0.0
      %286 = vmatprep.subr.mxu0 0.0
      %287 = vmatpush1.msra.mxu0 0.0
      %288 = vmatprep.subr.mxu0 0.0
      %289 = vmatpush1.msra.mxu0 %v256
      %290 = vmatprep.subr.mxu0 0.0
      %291 = vmatpush2.msra.mxu0 0.0
      %292 = vmatprep.subr.mxu0 0.0
      %293 = vmatpush2.msra.mxu0 0.0
      %294 = vmatprep.subr.mxu0 0.0
      %295 = vmatpush2.msra.mxu0 0.0
      %296 = vmatprep.subr.mxu0 0.0
      %297 = vmatpush2.msra.mxu0 0.0
      %298 = vmatprep.subr.mxu0 0.0
      %299 = vmatpush2.msra.mxu0 0.0
      %300 = vmatprep.subr.mxu0 0.0
      %301 = vmatpush2.msra.mxu0 0.0
      %302 = vmatprep.subr.mxu0 0.0
      %303 = vmatpush2.msra.mxu0 0.0
      %304 = vmatprep.subr.mxu0 0.0
      %305 = vmatpush2.msra.mxu0 0.0
      %306 = vmatprep.subr.mxu0 0.0
      %307 = vmatpush2.msra.mxu0 0.0
      %308 = vmatprep.subr.mxu0 0.0
      %309 = vmatpush2.msra.mxu0 0.0
      %310 = vmatprep.subr.mxu0 0.0
      %311 = vmatpush2.msra.mxu0 0.0
      %312 = vmatprep.subr.mxu0 0.0
      %313 = vmatpush2.msra.mxu0 0.0
      %314 = vmatprep.subr.mxu0 0.0
      %315 = vmatpush2.msra.mxu0 0.0
      %316 = vmatprep.subr.mxu0 0.0
      %317 = vmatpush2.msra.mxu0 0.0
      %318 = vmatprep.subr.mxu0 0.0
      %319 = vmatpush2.msra.mxu0 0.0
      %320 = vmatprep.subr.mxu0 0.0
      %321 = vmatpush2.msra.mxu0 0.0
      %322 = vmatprep.mubr.f32.mxu0 0.0
      %323 = vmatmul.mubr.f32.gmra.mxu0 %v249
      %v324 = vpop.f32.mrf.mxu0
      %v325 = vadd.f32 0.0, %v324
      %v326 = vpop.f32.mrf.mxu0
      %327 = vmatprep.mubr.f32.mxu0 0.0
      %328 = vmatmul.mubr.f32.gmra.mxu0 %v252
      %v329 = vpop.f32.mrf.mxu0
      %v330 = vadd.f32 0.0, %v329
      %v331 = vpop.f32.mrf.mxu0
      %332 = vdwg.mxu0
      %v334 = vsel %vm247, %v201, 0
      %v337 = vsel %vm247, %v202, 0
      %v340 = vsel %vm254, %v232, 0
      %342 = vmatprep.subr.mxu0 0.0
      %343 = vmatpush1.msra.mxu0 0.0
      %344 = vmatprep.subr.mxu0 0.0
      %345 = vmatpush1.msra.mxu0 0.0
      %346 = vmatprep.subr.mxu0 0.0
      %347 = vmatpush1.msra.mxu0 0.0
      %348 = vmatprep.subr.mxu0 0.0
      %349 = vmatpush1.msra.mxu0 0.0
      %350 = vmatprep.subr.mxu0 0.0
      %351 = vmatpush1.msra.mxu0 0.0
      %352 = vmatprep.subr.mxu0 0.0
      %353 = vmatpush1.msra.mxu0 0.0
      %354 = vmatprep.subr.mxu0 0.0
      %355 = vmatpush1.msra.mxu0 0.0
      %356 = vmatprep.subr.mxu0 0.0
      %357 = vmatpush1.msra.mxu0 0.0
      %358 = vmatprep.subr.mxu0 0.0
      %359 = vmatpush1.msra.mxu0 0.0
      %360 = vmatprep.subr.mxu0 0.0
      %361 = vmatpush1.msra.mxu0 0.0
      %362 = vmatprep.subr.mxu0 0.0
      %363 = vmatpush1.msra.mxu0 0.0
      %364 = vmatprep.subr.mxu0 0.0
      %365 = vmatpush1.msra.mxu0 0.0
      %366 = vmatprep.subr.mxu0 0.0
      %367 = vmatpush1.msra.mxu0 0.0
      %368 = vmatprep.subr.mxu0 0.0
      %369 = vmatpush1.msra.mxu0 0.0
      %370 = vmatprep.subr.mxu0 0.0
      %371 = vmatpush1.msra.mxu0 0.0
      %372 = vmatprep.subr.mxu0 0.0
      %373 = vmatpush1.msra.mxu0 %v340
      %374 = vmatprep.subr.mxu0 0.0
      %375 = vmatpush2.msra.mxu0 0.0
      %376 = vmatprep.subr.mxu0 0.0
      %377 = vmatpush2.msra.mxu0 0.0
      %378 = vmatprep.subr.mxu0 0.0
      %379 = vmatpush2.msra.mxu0 0.0
      %380 = vmatprep.subr.mxu0 0.0
      %381 = vmatpush2.msra.mxu0 0.0
      %382 = vmatprep.subr.mxu0 0.0
      %383 = vmatpush2.msra.mxu0 0.0
      %384 = vmatprep.subr.mxu0 0.0
      %385 = vmatpush2.msra.mxu0 0.0
      %386 = vmatprep.subr.mxu0 0.0
      %387 = vmatpush2.msra.mxu0 0.0
      %388 = vmatprep.subr.mxu0 0.0
      %389 = vmatpush2.msra.mxu0 0.0
      %390 = vmatprep.subr.mxu0 0.0
      %391 = vmatpush2.msra.mxu0 0.0
      %392 = vmatprep.subr.mxu0 0.0
      %393 = vmatpush2.msra.mxu0 0.0
      %394 = vmatprep.subr.mxu0 0.0
      %395 = vmatpush2.msra.mxu0 0.0
      %396 = vmatprep.subr.mxu0 0.0
      %397 = vmatpush2.msra.mxu0 0.0
      %398 = vmatprep.subr.mxu0 0.0
      %399 = vmatpush2.msra.mxu0 0.0
      %400 = vmatprep.subr.mxu0 0.0
      %401 = vmatpush2.msra.mxu0 0.0
      %402 = vmatprep.subr.mxu0 0.0
      %403 = vmatpush2.msra.mxu0 0.0
      %404 = vmatprep.subr.mxu0 0.0
      %405 = vmatpush2.msra.mxu0 0.0
      %406 = vmatprep.mubr.f32.mxu0 0.0
      %407 = vmatmul.mubr.f32.gmra.mxu0 %v334
      %v408 = vpop.f32.mrf.mxu0
      %v409 = vadd.f32 0.0, %v408
      %v410 = vpop.f32.mrf.mxu0
      %411 = vmatprep.mubr.f32.mxu0 0.0
      %412 = vmatmul.mubr.f32.gmra.mxu0 %v337
      %v413 = vpop.f32.mrf.mxu0
      %v414 = vadd.f32 0.0, %v413
      %v415 = vpop.f32.mrf.mxu0
      %416 = vdwg.mxu0
      %v418 = vsel %vm247, %v203, 0
      %v421 = vsel %vm247, %v204, 0
      %v424 = vsel %vm254, %v233, 0
      %426 = vmatprep.subr.mxu0 0.0
      %427 = vmatpush1.msra.mxu0 0.0
      %428 = vmatprep.subr.mxu0 0.0
      %429 = vmatpush1.msra.mxu0 0.0
      %430 = vmatprep.subr.mxu0 0.0
      %431 = vmatpush1.msra.mxu0 0.0
      %432 = vmatprep.subr.mxu0 0.0
      %433 = vmatpush1.msra.mxu0 0.0
      %434 = vmatprep.subr.mxu0 0.0
      %435 = vmatpush1.msra.mxu0 0.0
      %436 = vmatprep.subr.mxu0 0.0
      %437 = vmatpush1.msra.mxu0 0.0
      %438 = vmatprep.subr.mxu0 0.0
      %439 = vmatpush1.msra.mxu0 0.0
      %440 = vmatprep.subr.mxu0 0.0
      %441 = vmatpush1.msra.mxu0 0.0
      %442 = vmatprep.subr.mxu0 0.0
      %443 = vmatpush1.msra.mxu0 0.0
      %444 = vmatprep.subr.mxu0 0.0
      %445 = vmatpush1.msra.mxu0 0.0
      %446 = vmatprep.subr.mxu0 0.0
      %447 = vmatpush1.msra.mxu0 0.0
      %448 = vmatprep.subr.mxu0 0.0
      %449 = vmatpush1.msra.mxu0 0.0
      %450 = vmatprep.subr.mxu0 0.0
      %451 = vmatpush1.msra.mxu0 0.0
      %452 = vmatprep.subr.mxu0 0.0
      %453 = vmatpush1.msra.mxu0 0.0
      %454 = vmatprep.subr.mxu0 0.0
      %455 = vmatpush1.msra.mxu0 0.0
      %456 = vmatprep.subr.mxu0 0.0
      %457 = vmatpush1.msra.mxu0 %v424
      %458 = vmatprep.subr.mxu0 0.0
      %459 = vmatpush2.msra.mxu0 0.0
      %460 = vmatprep.subr.mxu0 0.0
      %461 = vmatpush2.msra.mxu0 0.0
      %462 = vmatprep.subr.mxu0 0.0
      %463 = vmatpush2.msra.mxu0 0.0
      %464 = vmatprep.subr.mxu0 0.0
      %465 = vmatpush2.msra.mxu0 0.0
      %466 = vmatprep.subr.mxu0 0.0
      %467 = vmatpush2.msra.mxu0 0.0
      %468 = vmatprep.subr.mxu0 0.0
      %469 = vmatpush2.msra.mxu0 0.0
      %470 = vmatprep.subr.mxu0 0.0
      %471 = vmatpush2.msra.mxu0 0.0
      %472 = vmatprep.subr.mxu0 0.0
      %473 = vmatpush2.msra.mxu0 0.0
      %474 = vmatprep.subr.mxu0 0.0
      %475 = vmatpush2.msra.mxu0 0.0
      %476 = vmatprep.subr.mxu0 0.0
      %477 = vmatpush2.msra.mxu0 0.0
      %478 = vmatprep.subr.mxu0 0.0
      %479 = vmatpush2.msra.mxu0 0.0
      %480 = vmatprep.subr.mxu0 0.0
      %481 = vmatpush2.msra.mxu0 0.0
      %482 = vmatprep.subr.mxu0 0.0
      %483 = vmatpush2.msra.mxu0 0.0
      %484 = vmatprep.subr.mxu0 0.0
      %485 = vmatpush2.msra.mxu0 0.0
      %486 = vmatprep.subr.mxu0 0.0
      %487 = vmatpush2.msra.mxu0 0.0
      %488 = vmatprep.subr.mxu0 0.0
      %489 = vmatpush2.msra.mxu0 0.0
      %490 = vmatprep.mubr.f32.mxu0 0.0
      %491 = vmatmul.mubr.f32.gmra.mxu0 %v418
      %v492 = vpop.f32.mrf.mxu0
      %v493 = vadd.f32 0.0, %v492
      %v494 = vpop.f32.mrf.mxu0
      %495 = vmatprep.mubr.f32.mxu0 0.0
      %496 = vmatmul.mubr.f32.gmra.mxu0 %v421
      %v497 = vpop.f32.mrf.mxu0
      %v498 = vadd.f32 0.0, %v497
      %v499 = vpop.f32.mrf.mxu0
      %500 = vdwg.mxu0
      %v502 = vsel %vm247, %v205, 0
      %v505 = vsel %vm247, %v206, 0
      %v508 = vsel %vm254, %v234, 0
      %510 = vmatprep.subr.mxu0 0.0
      %511 = vmatpush1.msra.mxu0 0.0
      %512 = vmatprep.subr.mxu0 0.0
      %513 = vmatpush1.msra.mxu0 0.0
      %514 = vmatprep.subr.mxu0 0.0
      %515 = vmatpush1.msra.mxu0 0.0
      %516 = vmatprep.subr.mxu0 0.0
      %517 = vmatpush1.msra.mxu0 0.0
      %518 = vmatprep.subr.mxu0 0.0
      %519 = vmatpush1.msra.mxu0 0.0
      %520 = vmatprep.subr.mxu0 0.0
      %521 = vmatpush1.msra.mxu0 0.0
      %522 = vmatprep.subr.mxu0 0.0
      %523 = vmatpush1.msra.mxu0 0.0
      %524 = vmatprep.subr.mxu0 0.0
      %525 = vmatpush1.msra.mxu0 0.0
      %526 = vmatprep.subr.mxu0 0.0
      %527 = vmatpush1.msra.mxu0 0.0
      %528 = vmatprep.subr.mxu0 0.0
      %529 = vmatpush1.msra.mxu0 0.0
      %530 = vmatprep.subr.mxu0 0.0
      %531 = vmatpush1.msra.mxu0 0.0
      %532 = vmatprep.subr.mxu0 0.0
      %533 = vmatpush1.msra.mxu0 0.0
      %534 = vmatprep.subr.mxu0 0.0
      %535 = vmatpush1.msra.mxu0 0.0
      %536 = vmatprep.subr.mxu0 0.0
      %537 = vmatpush1.msra.mxu0 0.0
      %538 = vmatprep.subr.mxu0 0.0
      %539 = vmatpush1.msra.mxu0 0.0
      %540 = vmatprep.subr.mxu0 0.0
      %541 = vmatpush1.msra.mxu0 %v508
      %542 = vmatprep.subr.mxu0 0.0
      %543 = vmatpush2.msra.mxu0 0.0
      %544 = vmatprep.subr.mxu0 0.0
      %545 = vmatpush2.msra.mxu0 0.0
      %546 = vmatprep.subr.mxu0 0.0
      %547 = vmatpush2.msra.mxu0 0.0
      %548 = vmatprep.subr.mxu0 0.0
      %549 = vmatpush2.msra.mxu0 0.0
      %550 = vmatprep.subr.mxu0 0.0
      %551 = vmatpush2.msra.mxu0 0.0
      %552 = vmatprep.subr.mxu0 0.0
      %553 = vmatpush2.msra.mxu0 0.0
      %554 = vmatprep.subr.mxu0 0.0
      %555 = vmatpush2.msra.mxu0 0.0
      %556 = vmatprep.subr.mxu0 0.0
      %557 = vmatpush2.msra.mxu0 0.0
      %558 = vmatprep.subr.mxu0 0.0
      %559 = vmatpush2.msra.mxu0 0.0
      %560 = vmatprep.subr.mxu0 0.0
      %561 = vmatpush2.msra.mxu0 0.0
      %562 = vmatprep.subr.mxu0 0.0
      %563 = vmatpush2.msra.mxu0 0.0
      %564 = vmatprep.subr.mxu0 0.0
      %565 = vmatpush2.msra.mxu0 0.0
      %566 = vmatprep.subr.mxu0 0.0
      %567 = vmatpush2.msra.mxu0 0.0
      %568 = vmatprep.subr.mxu0 0.0
      %569 = vmatpush2.msra.mxu0 0.0
      %570 = vmatprep.subr.mxu0 0.0
      %571 = vmatpush2.msra.mxu0 0.0
      %572 = vmatprep.subr.mxu0 0.0
      %573 = vmatpush2.msra.mxu0 0.0
      %574 = vmatprep.mubr.f32.mxu0 0.0
      %575 = vmatmul.mubr.f32.gmra.mxu0 %v502
      %v576 = vpop.f32.mrf.mxu0
      %v577 = vadd.f32 0.0, %v576
      %v578 = vpop.f32.mrf.mxu0
      %579 = vmatprep.mubr.f32.mxu0 0.0
      %580 = vmatmul.mubr.f32.gmra.mxu0 %v505
      %v581 = vpop.f32.mrf.mxu0
      %v582 = vadd.f32 0.0, %v581
      %v583 = vpop.f32.mrf.mxu0
      %584 = vdwg.mxu0
      %v586 = vsel %vm247, %v207, 0
      %v589 = vsel %vm247, %v208, 0
      %v592 = vsel %vm254, %v235, 0
      %594 = vmatprep.subr.mxu0 0.0
      %595 = vmatpush1.msra.mxu0 0.0
      %596 = vmatprep.subr.mxu0 0.0
      %597 = vmatpush1.msra.mxu0 0.0
      %598 = vmatprep.subr.mxu0 0.0
      %599 = vmatpush1.msra.mxu0 0.0
      %600 = vmatprep.subr.mxu0 0.0
      %601 = vmatpush1.msra.mxu0 0.0
      %602 = vmatprep.subr.mxu0 0.0
      %603 = vmatpush1.msra.mxu0 0.0
      %604 = vmatprep.subr.mxu0 0.0
      %605 = vmatpush1.msra.mxu0 0.0
      %606 = vmatprep.subr.mxu0 0.0
      %607 = vmatpush1.msra.mxu0 0.0
      %608 = vmatprep.subr.mxu0 0.0
      %609 = vmatpush1.msra.mxu0 0.0
      %610 = vmatprep.subr.mxu0 0.0
      %611 = vmatpush1.msra.mxu0 0.0
      %612 = vmatprep.subr.mxu0 0.0
      %613 = vmatpush1.msra.mxu0 0.0
      %614 = vmatprep.subr.mxu0 0.0
      %615 = vmatpush1.msra.mxu0 0.0
      %616 = vmatprep.subr.mxu0 0.0
      %617 = vmatpush1.msra.mxu0 0.0
      %618 = vmatprep.subr.mxu0 0.0
      %619 = vmatpush1.msra.mxu0 0.0
      %620 = vmatprep.subr.mxu0 0.0
      %621 = vmatpush1.msra.mxu0 0.0
      %622 = vmatprep.subr.mxu0 0.0
      %623 = vmatpush1.msra.mxu0 0.0
      %624 = vmatprep.subr.mxu0 0.0
      %625 = vmatpush1.msra.mxu0 %v592
      %626 = vmatprep.subr.mxu0 0.0
      %627 = vmatpush2.msra.mxu0 0.0
      %628 = vmatprep.subr.mxu0 0.0
      %629 = vmatpush2.msra.mxu0 0.0
      %630 = vmatprep.subr.mxu0 0.0
      %631 = vmatpush2.msra.mxu0 0.0
      %632 = vmatprep.subr.mxu0 0.0
      %633 = vmatpush2.msra.mxu0 0.0
      %634 = vmatprep.subr.mxu0 0.0
      %635 = vmatpush2.msra.mxu0 0.0
      %636 = vmatprep.subr.mxu0 0.0
      %637 = vmatpush2.msra.mxu0 0.0
      %638 = vmatprep.subr.mxu0 0.0
      %639 = vmatpush2.msra.mxu0 0.0
      %640 = vmatprep.subr.mxu0 0.0
      %641 = vmatpush2.msra.mxu0 0.0
      %642 = vmatprep.subr.mxu0 0.0
      %643 = vmatpush2.msra.mxu0 0.0
      %644 = vmatprep.subr.mxu0 0.0
      %645 = vmatpush2.msra.mxu0 0.0
      %646 = vmatprep.subr.mxu0 0.0
      %647 = vmatpush2.msra.mxu0 0.0
      %648 = vmatprep.subr.mxu0 0.0
      %649 = vmatpush2.msra.mxu0 0.0
      %650 = vmatprep.subr.mxu0 0.0
      %651 = vmatpush2.msra.mxu0 0.0
      %652 = vmatprep.subr.mxu0 0.0
      %653 = vmatpush2.msra.mxu0 0.0
      %654 = vmatprep.subr.mxu0 0.0
      %655 = vmatpush2.msra.mxu0 0.0
      %656 = vmatprep.subr.mxu0 0.0
      %657 = vmatpush2.msra.mxu0 0.0
      %658 = vmatprep.mubr.f32.mxu0 0.0
      %659 = vmatmul.mubr.f32.gmra.mxu0 %v586
      %v660 = vpop.f32.mrf.mxu0
      %v661 = vadd.f32 0.0, %v660
      %v662 = vpop.f32.mrf.mxu0
      %663 = vmatprep.mubr.f32.mxu0 0.0
      %664 = vmatmul.mubr.f32.gmra.mxu0 %v589
      %v665 = vpop.f32.mrf.mxu0
      %v666 = vadd.f32 0.0, %v665
      %v667 = vpop.f32.mrf.mxu0
      %668 = vdwg.mxu0
      %v670 = vsel %vm247, %v209, 0
      %v673 = vsel %vm247, %v210, 0
      %v676 = vsel %vm254, %v236, 0
      %678 = vmatprep.subr.mxu0 0.0
      %679 = vmatpush1.msra.mxu0 0.0
      %680 = vmatprep.subr.mxu0 0.0
      %681 = vmatpush1.msra.mxu0 0.0
      %682 = vmatprep.subr.mxu0 0.0
      %683 = vmatpush1.msra.mxu0 0.0
      %684 = vmatprep.subr.mxu0 0.0
      %685 = vmatpush1.msra.mxu0 0.0
      %686 = vmatprep.subr.mxu0 0.0
      %687 = vmatpush1.msra.mxu0 0.0
      %688 = vmatprep.subr.mxu0 0.0
      %689 = vmatpush1.msra.mxu0 0.0
      %690 = vmatprep.subr.mxu0 0.0
      %691 = vmatpush1.msra.mxu0 0.0
      %692 = vmatprep.subr.mxu0 0.0
      %693 = vmatpush1.msra.mxu0 0.0
      %694 = vmatprep.subr.mxu0 0.0
      %695 = vmatpush1.msra.mxu0 0.0
      %696 = vmatprep.subr.mxu0 0.0
      %697 = vmatpush1.msra.mxu0 0.0
      %698 = vmatprep.subr.mxu0 0.0
      %699 = vmatpush1.msra.mxu0 0.0
      %700 = vmatprep.subr.mxu0 0.0
      %701 = vmatpush1.msra.mxu0 0.0
      %702 = vmatprep.subr.mxu0 0.0
      %703 = vmatpush1.msra.mxu0 0.0
      %704 = vmatprep.subr.mxu0 0.0
      %705 = vmatpush1.msra.mxu0 0.0
      %706 = vmatprep.subr.mxu0 0.0
      %707 = vmatpush1.msra.mxu0 0.0
      %708 = vmatprep.subr.mxu0 0.0
      %709 = vmatpush1.msra.mxu0 %v676
      %710 = vmatprep.subr.mxu0 0.0
      %711 = vmatpush2.msra.mxu0 0.0
      %712 = vmatprep.subr.mxu0 0.0
      %713 = vmatpush2.msra.mxu0 0.0
      %714 = vmatprep.subr.mxu0 0.0
      %715 = vmatpush2.msra.mxu0 0.0
      %716 = vmatprep.subr.mxu0 0.0
      %717 = vmatpush2.msra.mxu0 0.0
      %718 = vmatprep.subr.mxu0 0.0
      %719 = vmatpush2.msra.mxu0 0.0
      %720 = vmatprep.subr.mxu0 0.0
      %721 = vmatpush2.msra.mxu0 0.0
      %722 = vmatprep.subr.mxu0 0.0
      %723 = vmatpush2.msra.mxu0 0.0
      %724 = vmatprep.subr.mxu0 0.0
      %725 = vmatpush2.msra.mxu0 0.0
      %726 = vmatprep.subr.mxu0 0.0
      %727 = vmatpush2.msra.mxu0 0.0
      %728 = vmatprep.subr.mxu0 0.0
      %729 = vmatpush2.msra.mxu0 0.0
      %730 = vmatprep.subr.mxu0 0.0
      %731 = vmatpush2.msra.mxu0 0.0
      %732 = vmatprep.subr.mxu0 0.0
      %733 = vmatpush2.msra.mxu0 0.0
      %734 = vmatprep.subr.mxu0 0.0
      %735 = vmatpush2.msra.mxu0 0.0
      %736 = vmatprep.subr.mxu0 0.0
      %737 = vmatpush2.msra.mxu0 0.0
      %738 = vmatprep.subr.mxu0 0.0
      %739 = vmatpush2.msra.mxu0 0.0
      %740 = vmatprep.subr.mxu0 0.0
      %741 = vmatpush2.msra.mxu0 0.0
      %742 = vmatprep.mubr.f32.mxu0 0.0
      %743 = vmatmul.mubr.f32.gmra.mxu0 %v670
      %v744 = vpop.f32.mrf.mxu0
      %v745 = vadd.f32 0.0, %v744
      %v746 = vpop.f32.mrf.mxu0
      %747 = vmatprep.mubr.f32.mxu0 0.0
      %748 = vmatmul.mubr.f32.gmra.mxu0 %v673
      %v749 = vpop.f32.mrf.mxu0
      %v750 = vadd.f32 0.0, %v749
      %v751 = vpop.f32.mrf.mxu0
      %752 = vdwg.mxu0
      %v754 = vsel %vm247, %v211, 0
      %v757 = vsel %vm247, %v212, 0
      %v760 = vsel %vm254, %v237, 0
      %762 = vmatprep.subr.mxu0 0.0
      %763 = vmatpush1.msra.mxu0 0.0
      %764 = vmatprep.subr.mxu0 0.0
      %765 = vmatpush1.msra.mxu0 0.0
      %766 = vmatprep.subr.mxu0 0.0
      %767 = vmatpush1.msra.mxu0 0.0
      %768 = vmatprep.subr.mxu0 0.0
      %769 = vmatpush1.msra.mxu0 0.0
      %770 = vmatprep.subr.mxu0 0.0
      %771 = vmatpush1.msra.mxu0 0.0
      %772 = vmatprep.subr.mxu0 0.0
      %773 = vmatpush1.msra.mxu0 0.0
      %774 = vmatprep.subr.mxu0 0.0
      %775 = vmatpush1.msra.mxu0 0.0
      %776 = vmatprep.subr.mxu0 0.0
      %777 = vmatpush1.msra.mxu0 0.0
      %778 = vmatprep.subr.mxu0 0.0
      %779 = vmatpush1.msra.mxu0 0.0
      %780 = vmatprep.subr.mxu0 0.0
      %781 = vmatpush1.msra.mxu0 0.0
      %782 = vmatprep.subr.mxu0 0.0
      %783 = vmatpush1.msra.mxu0 0.0
      %784 = vmatprep.subr.mxu0 0.0
      %785 = vmatpush1.msra.mxu0 0.0
      %786 = vmatprep.subr.mxu0 0.0
      %787 = vmatpush1.msra.mxu0 0.0
      %788 = vmatprep.subr.mxu0 0.0
      %789 = vmatpush1.msra.mxu0 0.0
      %790 = vmatprep.subr.mxu0 0.0
      %791 = vmatpush1.msra.mxu0 0.0
      %792 = vmatprep.subr.mxu0 0.0
      %793 = vmatpush1.msra.mxu0 %v760
      %794 = vmatprep.subr.mxu0 0.0
      %795 = vmatpush2.msra.mxu0 0.0
      %796 = vmatprep.subr.mxu0 0.0
      %797 = vmatpush2.msra.mxu0 0.0
      %798 = vmatprep.subr.mxu0 0.0
      %799 = vmatpush2.msra.mxu0 0.0
      %800 = vmatprep.subr.mxu0 0.0
      %801 = vmatpush2.msra.mxu0 0.0
      %802 = vmatprep.subr.mxu0 0.0
      %803 = vmatpush2.msra.mxu0 0.0
      %804 = vmatprep.subr.mxu0 0.0
      %805 = vmatpush2.msra.mxu0 0.0
      %806 = vmatprep.subr.mxu0 0.0
      %807 = vmatpush2.msra.mxu0 0.0
      %808 = vmatprep.subr.mxu0 0.0
      %809 = vmatpush2.msra.mxu0 0.0
      %810 = vmatprep.subr.mxu0 0.0
      %811 = vmatpush2.msra.mxu0 0.0
      %812 = vmatprep.subr.mxu0 0.0
      %813 = vmatpush2.msra.mxu0 0.0
      %814 = vmatprep.subr.mxu0 0.0
      %815 = vmatpush2.msra.mxu0 0.0
      %816 = vmatprep.subr.mxu0 0.0
      %817 = vmatpush2.msra.mxu0 0.0
      %818 = vmatprep.subr.mxu0 0.0
      %819 = vmatpush2.msra.mxu0 0.0
      %820 = vmatprep.subr.mxu0 0.0
      %821 = vmatpush2.msra.mxu0 0.0
      %822 = vmatprep.subr.mxu0 0.0
      %823 = vmatpush2.msra.mxu0 0.0
      %824 = vmatprep.subr.mxu0 0.0
      %825 = vmatpush2.msra.mxu0 0.0
      %826 = vmatprep.mubr.f32.mxu0 0.0
      %827 = vmatmul.mubr.f32.gmra.mxu0 %v754
      %v828 = vpop.f32.mrf.mxu0
      %v829 = vadd.f32 0.0, %v828
      %v830 = vpop.f32.mrf.mxu0
      %831 = vmatprep.mubr.f32.mxu0 0.0
      %832 = vmatmul.mubr.f32.gmra.mxu0 %v757
      %v833 = vpop.f32.mrf.mxu0
      %v834 = vadd.f32 0.0, %v833
      %v835 = vpop.f32.mrf.mxu0
      %836 = vdwg.mxu0
      %v838 = vsel %vm247, %v213, 0
      %v841 = vsel %vm247, %v214, 0
      %v844 = vsel %vm254, %v238, 0
      %846 = vmatprep.subr.mxu0 0.0
      %847 = vmatpush1.msra.mxu0 0.0
      %848 = vmatprep.subr.mxu0 0.0
      %849 = vmatpush1.msra.mxu0 0.0
      %850 = vmatprep.subr.mxu0 0.0
      %851 = vmatpush1.msra.mxu0 0.0
      %852 = vmatprep.subr.mxu0 0.0
      %853 = vmatpush1.msra.mxu0 0.0
      %854 = vmatprep.subr.mxu0 0.0
      %855 = vmatpush1.msra.mxu0 0.0
      %856 = vmatprep.subr.mxu0 0.0
      %857 = vmatpush1.msra.mxu0 0.0
      %858 = vmatprep.subr.mxu0 0.0
      %859 = vmatpush1.msra.mxu0 0.0
      %860 = vmatprep.subr.mxu0 0.0
      %861 = vmatpush1.msra.mxu0 0.0
      %862 = vmatprep.subr.mxu0 0.0
      %863 = vmatpush1.msra.mxu0 0.0
      %864 = vmatprep.subr.mxu0 0.0
      %865 = vmatpush1.msra.mxu0 0.0
      %866 = vmatprep.subr.mxu0 0.0
      %867 = vmatpush1.msra.mxu0 0.0
      %868 = vmatprep.subr.mxu0 0.0
      %869 = vmatpush1.msra.mxu0 0.0
      %870 = vmatprep.subr.mxu0 0.0
      %871 = vmatpush1.msra.mxu0 0.0
      %872 = vmatprep.subr.mxu0 0.0
      %873 = vmatpush1.msra.mxu0 0.0
      %874 = vmatprep.subr.mxu0 0.0
      %875 = vmatpush1.msra.mxu0 0.0
      %876 = vmatprep.subr.mxu0 0.0
      %877 = vmatpush1.msra.mxu0 %v844
      %878 = vmatprep.subr.mxu0 0.0
      %879 = vmatpush2.msra.mxu0 0.0
      %880 = vmatprep.subr.mxu0 0.0
      %881 = vmatpush2.msra.mxu0 0.0
      %882 = vmatprep.subr.mxu0 0.0
      %883 = vmatpush2.msra.mxu0 0.0
      %884 = vmatprep.subr.mxu0 0.0
      %885 = vmatpush2.msra.mxu0 0.0
      %886 = vmatprep.subr.mxu0 0.0
      %887 = vmatpush2.msra.mxu0 0.0
      %888 = vmatprep.subr.mxu0 0.0
      %889 = vmatpush2.msra.mxu0 0.0
      %890 = vmatprep.subr.mxu0 0.0
      %891 = vmatpush2.msra.mxu0 0.0
      %892 = vmatprep.subr.mxu0 0.0
      %893 = vmatpush2.msra.mxu0 0.0
      %894 = vmatprep.subr.mxu0 0.0
      %895 = vmatpush2.msra.mxu0 0.0
      %896 = vmatprep.subr.mxu0 0.0
      %897 = vmatpush2.msra.mxu0 0.0
      %898 = vmatprep.subr.mxu0 0.0
      %899 = vmatpush2.msra.mxu0 0.0
      %900 = vmatprep.subr.mxu0 0.0
      %901 = vmatpush2.msra.mxu0 0.0
      %902 = vmatprep.subr.mxu0 0.0
      %903 = vmatpush2.msra.mxu0 0.0
      %904 = vmatprep.subr.mxu0 0.0
      %905 = vmatpush2.msra.mxu0 0.0
      %906 = vmatprep.subr.mxu0 0.0
      %907 = vmatpush2.msra.mxu0 0.0
      %908 = vmatprep.subr.mxu0 0.0
      %909 = vmatpush2.msra.mxu0 0.0
      %910 = vmatprep.mubr.f32.mxu0 0.0
      %911 = vmatmul.mubr.f32.gmra.mxu0 %v838
      %v912 = vpop.f32.mrf.mxu0
      %v913 = vadd.f32 0.0, %v912
      %v914 = vpop.f32.mrf.mxu0
      %915 = vmatprep.mubr.f32.mxu0 0.0
      %916 = vmatmul.mubr.f32.gmra.mxu0 %v841
      %v917 = vpop.f32.mrf.mxu0
      %v918 = vadd.f32 0.0, %v917
      %v919 = vpop.f32.mrf.mxu0
      %920 = vdwg.mxu0
      %v922 = vsel %vm247, %v215, 0
      %v925 = vsel %vm247, %v216, 0
      %v928 = vsel %vm254, %v239, 0
      %930 = vmatprep.subr.mxu0 0.0
      %931 = vmatpush1.msra.mxu0 0.0
      %932 = vmatprep.subr.mxu0 0.0
      %933 = vmatpush1.msra.mxu0 0.0
      %934 = vmatprep.subr.mxu0 0.0
      %935 = vmatpush1.msra.mxu0 0.0
      %936 = vmatprep.subr.mxu0 0.0
      %937 = vmatpush1.msra.mxu0 0.0
      %938 = vmatprep.subr.mxu0 0.0
      %939 = vmatpush1.msra.mxu0 0.0
      %940 = vmatprep.subr.mxu0 0.0
      %941 = vmatpush1.msra.mxu0 0.0
      %942 = vmatprep.subr.mxu0 0.0
      %943 = vmatpush1.msra.mxu0 0.0
      %944 = vmatprep.subr.mxu0 0.0
      %945 = vmatpush1.msra.mxu0 0.0
      %946 = vmatprep.subr.mxu0 0.0
      %947 = vmatpush1.msra.mxu0 0.0
      %948 = vmatprep.subr.mxu0 0.0
      %949 = vmatpush1.msra.mxu0 0.0
      %950 = vmatprep.subr.mxu0 0.0
      %951 = vmatpush1.msra.mxu0 0.0
      %952 = vmatprep.subr.mxu0 0.0
      %953 = vmatpush1.msra.mxu0 0.0
      %954 = vmatprep.subr.mxu0 0.0
      %955 = vmatpush1.msra.mxu0 0.0
      %956 = vmatprep.subr.mxu0 0.0
      %957 = vmatpush1.msra.mxu0 0.0
      %958 = vmatprep.subr.mxu0 0.0
      %959 = vmatpush1.msra.mxu0 0.0
      %960 = vmatprep.subr.mxu0 0.0
      %961 = vmatpush1.msra.mxu0 %v928
      %962 = vmatprep.subr.mxu0 0.0
      %963 = vmatpush2.msra.mxu0 0.0
      %964 = vmatprep.subr.mxu0 0.0
      %965 = vmatpush2.msra.mxu0 0.0
      %966 = vmatprep.subr.mxu0 0.0
      %967 = vmatpush2.msra.mxu0 0.0
      %968 = vmatprep.subr.mxu0 0.0
      %969 = vmatpush2.msra.mxu0 0.0
      %970 = vmatprep.subr.mxu0 0.0
      %971 = vmatpush2.msra.mxu0 0.0
      %972 = vmatprep.subr.mxu0 0.0
      %973 = vmatpush2.msra.mxu0 0.0
      %974 = vmatprep.subr.mxu0 0.0
      %975 = vmatpush2.msra.mxu0 0.0
      %976 = vmatprep.subr.mxu0 0.0
      %977 = vmatpush2.msra.mxu0 0.0
      %978 = vmatprep.subr.mxu0 0.0
      %979 = vmatpush2.msra.mxu0 0.0
      %980 = vmatprep.subr.mxu0 0.0
      %981 = vmatpush2.msra.mxu0 0.0
      %982 = vmatprep.subr.mxu0 0.0
      %983 = vmatpush2.msra.mxu0 0.0
      %984 = vmatprep.subr.mxu0 0.0
      %985 = vmatpush2.msra.mxu0 0.0
      %986 = vmatprep.subr.mxu0 0.0
      %987 = vmatpush2.msra.mxu0 0.0
      %988 = vmatprep.subr.mxu0 0.0
      %989 = vmatpush2.msra.mxu0 0.0
      %990 = vmatprep.subr.mxu0 0.0
      %991 = vmatpush2.msra.mxu0 0.0
      %992 = vmatprep.subr.mxu0 0.0
      %993 = vmatpush2.msra.mxu0 0.0
      %994 = vmatprep.mubr.f32.mxu0 0.0
      %995 = vmatmul.mubr.f32.gmra.mxu0 %v922
      %v996 = vpop.f32.mrf.mxu0
      %v997 = vadd.f32 0.0, %v996
      %v998 = vpop.f32.mrf.mxu0
      %999 = vmatprep.mubr.f32.mxu0 0.0
      %1000 = vmatmul.mubr.f32.gmra.mxu0 %v925
      %v1001 = vpop.f32.mrf.mxu0
      %v1002 = vadd.f32 0.0, %v1001
      %v1003 = vpop.f32.mrf.mxu0
      %1004 = vdwg.mxu0
      %v1006 = vsel %vm247, %v217, 0
      %v1009 = vsel %vm247, %v218, 0
      %v1012 = vsel %vm254, %v240, 0
      %1014 = vmatprep.subr.mxu0 0.0
      %1015 = vmatpush1.msra.mxu0 0.0
      %1016 = vmatprep.subr.mxu0 0.0
      %1017 = vmatpush1.msra.mxu0 0.0
      %1018 = vmatprep.subr.mxu0 0.0
      %1019 = vmatpush1.msra.mxu0 0.0
      %1020 = vmatprep.subr.mxu0 0.0
      %1021 = vmatpush1.msra.mxu0 0.0
      %1022 = vmatprep.subr.mxu0 0.0
      %1023 = vmatpush1.msra.mxu0 0.0
      %1024 = vmatprep.subr.mxu0 0.0
      %1025 = vmatpush1.msra.mxu0 0.0
      %1026 = vmatprep.subr.mxu0 0.0
      %1027 = vmatpush1.msra.mxu0 0.0
      %1028 = vmatprep.subr.mxu0 0.0
      %1029 = vmatpush1.msra.mxu0 0.0
      %1030 = vmatprep.subr.mxu0 0.0
      %1031 = vmatpush1.msra.mxu0 0.0
      %1032 = vmatprep.subr.mxu0 0.0
      %1033 = vmatpush1.msra.mxu0 0.0
      %1034 = vmatprep.subr.mxu0 0.0
      %1035 = vmatpush1.msra.mxu0 0.0
      %1036 = vmatprep.subr.mxu0 0.0
      %1037 = vmatpush1.msra.mxu0 0.0
      %1038 = vmatprep.subr.mxu0 0.0
      %1039 = vmatpush1.msra.mxu0 0.0
      %1040 = vmatprep.subr.mxu0 0.0
      %1041 = vmatpush1.msra.mxu0 0.0
      %1042 = vmatprep.subr.mxu0 0.0
      %1043 = vmatpush1.msra.mxu0 0.0
      %1044 = vmatprep.subr.mxu0 0.0
      %1045 = vmatpush1.msra.mxu0 %v1012
      %1046 = vmatprep.subr.mxu0 0.0
      %1047 = vmatpush2.msra.mxu0 0.0
      %1048 = vmatprep.subr.mxu0 0.0
      %1049 = vmatpush2.msra.mxu0 0.0
      %1050 = vmatprep.subr.mxu0 0.0
      %1051 = vmatpush2.msra.mxu0 0.0
      %1052 = vmatprep.subr.mxu0 0.0
      %1053 = vmatpush2.msra.mxu0 0.0
      %1054 = vmatprep.subr.mxu0 0.0
      %1055 = vmatpush2.msra.mxu0 0.0
      %1056 = vmatprep.subr.mxu0 0.0
      %1057 = vmatpush2.msra.mxu0 0.0
      %1058 = vmatprep.subr.mxu0 0.0
      %1059 = vmatpush2.msra.mxu0 0.0
      %1060 = vmatprep.subr.mxu0 0.0
      %1061 = vmatpush2.msra.mxu0 0.0
      %1062 = vmatprep.subr.mxu0 0.0
      %1063 = vmatpush2.msra.mxu0 0.0
      %1064 = vmatprep.subr.mxu0 0.0
      %1065 = vmatpush2.msra.mxu0 0.0
      %1066 = vmatprep.subr.mxu0 0.0
      %1067 = vmatpush2.msra.mxu0 0.0
      %1068 = vmatprep.subr.mxu0 0.0
      %1069 = vmatpush2.msra.mxu0 0.0
      %1070 = vmatprep.subr.mxu0 0.0
      %1071 = vmatpush2.msra.mxu0 0.0
      %1072 = vmatprep.subr.mxu0 0.0
      %1073 = vmatpush2.msra.mxu0 0.0
      %1074 = vmatprep.subr.mxu0 0.0
      %1075 = vmatpush2.msra.mxu0 0.0
      %1076 = vmatprep.subr.mxu0 0.0
      %1077 = vmatpush2.msra.mxu0 0.0
      %1078 = vmatprep.mubr.f32.mxu0 0.0
      %1079 = vmatmul.mubr.f32.gmra.mxu0 %v1006
      %v1080 = vpop.f32.mrf.mxu0
      %v1081 = vadd.f32 0.0, %v1080
      %v1082 = vpop.f32.mrf.mxu0
      %1083 = vmatprep.mubr.f32.mxu0 0.0
      %1084 = vmatmul.mubr.f32.gmra.mxu0 %v1009
      %v1085 = vpop.f32.mrf.mxu0
      %v1086 = vadd.f32 0.0, %v1085
      %v1087 = vpop.f32.mrf.mxu0
      %1088 = vdwg.mxu0
      %v1090 = vsel %vm247, %v219, 0
      %v1093 = vsel %vm247, %v220, 0
      %v1096 = vsel %vm254, %v241, 0
      %1098 = vmatprep.subr.mxu0 0.0
      %1099 = vmatpush1.msra.mxu0 0.0
      %1100 = vmatprep.subr.mxu0 0.0
      %1101 = vmatpush1.msra.mxu0 0.0
      %1102 = vmatprep.subr.mxu0 0.0
      %1103 = vmatpush1.msra.mxu0 0.0
      %1104 = vmatprep.subr.mxu0 0.0
      %1105 = vmatpush1.msra.mxu0 0.0
      %1106 = vmatprep.subr.mxu0 0.0
      %1107 = vmatpush1.msra.mxu0 0.0
      %1108 = vmatprep.subr.mxu0 0.0
      %1109 = vmatpush1.msra.mxu0 0.0
      %1110 = vmatprep.subr.mxu0 0.0
      %1111 = vmatpush1.msra.mxu0 0.0
      %1112 = vmatprep.subr.mxu0 0.0
      %1113 = vmatpush1.msra.mxu0 0.0
      %1114 = vmatprep.subr.mxu0 0.0
      %1115 = vmatpush1.msra.mxu0 0.0
      %1116 = vmatprep.subr.mxu0 0.0
      %1117 = vmatpush1.msra.mxu0 0.0
      %1118 = vmatprep.subr.mxu0 0.0
      %1119 = vmatpush1.msra.mxu0 0.0
      %1120 = vmatprep.subr.mxu0 0.0
      %1121 = vmatpush1.msra.mxu0 0.0
      %1122 = vmatprep.subr.mxu0 0.0
      %1123 = vmatpush1.msra.mxu0 0.0
      %1124 = vmatprep.subr.mxu0 0.0
      %1125 = vmatpush1.msra.mxu0 0.0
      %1126 = vmatprep.subr.mxu0 0.0
      %1127 = vmatpush1.msra.mxu0 0.0
      %1128 = vmatprep.subr.mxu0 0.0
      %1129 = vmatpush1.msra.mxu0 %v1096
      %1130 = vmatprep.subr.mxu0 0.0
      %1131 = vmatpush2.msra.mxu0 0.0
      %1132 = vmatprep.subr.mxu0 0.0
      %1133 = vmatpush2.msra.mxu0 0.0
      %1134 = vmatprep.subr.mxu0 0.0
      %1135 = vmatpush2.msra.mxu0 0.0
      %1136 = vmatprep.subr.mxu0 0.0
      %1137 = vmatpush2.msra.mxu0 0.0
      %1138 = vmatprep.subr.mxu0 0.0
      %1139 = vmatpush2.msra.mxu0 0.0
      %1140 = vmatprep.subr.mxu0 0.0
      %1141 = vmatpush2.msra.mxu0 0.0
      %1142 = vmatprep.subr.mxu0 0.0
      %1143 = vmatpush2.msra.mxu0 0.0
      %1144 = vmatprep.subr.mxu0 0.0
      %1145 = vmatpush2.msra.mxu0 0.0
      %1146 = vmatprep.subr.mxu0 0.0
      %1147 = vmatpush2.msra.mxu0 0.0
      %1148 = vmatprep.subr.mxu0 0.0
      %1149 = vmatpush2.msra.mxu0 0.0
      %1150 = vmatprep.subr.mxu0 0.0
      %1151 = vmatpush2.msra.mxu0 0.0
      %1152 = vmatprep.subr.mxu0 0.0
      %1153 = vmatpush2.msra.mxu0 0.0
      %1154 = vmatprep.subr.mxu0 0.0
      %1155 = vmatpush2.msra.mxu0 0.0
      %1156 = vmatprep.subr.mxu0 0.0
      %1157 = vmatpush2.msra.mxu0 0.0
      %1158 = vmatprep.subr.mxu0 0.0
      %1159 = vmatpush2.msra.mxu0 0.0
      %1160 = vmatprep.subr.mxu0 0.0
      %1161 = vmatpush2.msra.mxu0 0.0
      %1162 = vmatprep.mubr.f32.mxu0 0.0
      %1163 = vmatmul.mubr.f32.gmra.mxu0 %v1090
      %v1164 = vpop.f32.mrf.mxu0
      %v1165 = vadd.f32 0.0, %v1164
      %v1166 = vpop.f32.mrf.mxu0
      %1167 = vmatprep.mubr.f32.mxu0 0.0
      %1168 = vmatmul.mubr.f32.gmra.mxu0 %v1093
      %v1169 = vpop.f32.mrf.mxu0
      %v1170 = vadd.f32 0.0, %v1169
      %v1171 = vpop.f32.mrf.mxu0
      %1172 = vdwg.mxu0
      %v1174 = vsel %vm247, %v221, 0
      %v1177 = vsel %vm247, %v222, 0
      %v1180 = vsel %vm254, %v242, 0
      %1182 = vmatprep.subr.mxu0 0.0
      %1183 = vmatpush1.msra.mxu0 0.0
      %1184 = vmatprep.subr.mxu0 0.0
      %1185 = vmatpush1.msra.mxu0 0.0
      %1186 = vmatprep.subr.mxu0 0.0
      %1187 = vmatpush1.msra.mxu0 0.0
      %1188 = vmatprep.subr.mxu0 0.0
      %1189 = vmatpush1.msra.mxu0 0.0
      %1190 = vmatprep.subr.mxu0 0.0
      %1191 = vmatpush1.msra.mxu0 0.0
      %1192 = vmatprep.subr.mxu0 0.0
      %1193 = vmatpush1.msra.mxu0 0.0
      %1194 = vmatprep.subr.mxu0 0.0
      %1195 = vmatpush1.msra.mxu0 0.0
      %1196 = vmatprep.subr.mxu0 0.0
      %1197 = vmatpush1.msra.mxu0 0.0
      %1198 = vmatprep.subr.mxu0 0.0
      %1199 = vmatpush1.msra.mxu0 0.0
      %1200 = vmatprep.subr.mxu0 0.0
      %1201 = vmatpush1.msra.mxu0 0.0
      %1202 = vmatprep.subr.mxu0 0.0
      %1203 = vmatpush1.msra.mxu0 0.0
      %1204 = vmatprep.subr.mxu0 0.0
      %1205 = vmatpush1.msra.mxu0 0.0
      %1206 = vmatprep.subr.mxu0 0.0
      %1207 = vmatpush1.msra.mxu0 0.0
      %1208 = vmatprep.subr.mxu0 0.0
      %1209 = vmatpush1.msra.mxu0 0.0
      %1210 = vmatprep.subr.mxu0 0.0
      %1211 = vmatpush1.msra.mxu0 0.0
      %1212 = vmatprep.subr.mxu0 0.0
      %1213 = vmatpush1.msra.mxu0 %v1180
      %1214 = vmatprep.subr.mxu0 0.0
      %1215 = vmatpush2.msra.mxu0 0.0
      %1216 = vmatprep.subr.mxu0 0.0
      %1217 = vmatpush2.msra.mxu0 0.0
      %1218 = vmatprep.subr.mxu0 0.0
      %1219 = vmatpush2.msra.mxu0 0.0
      %1220 = vmatprep.subr.mxu0 0.0
      %1221 = vmatpush2.msra.mxu0 0.0
      %1222 = vmatprep.subr.mxu0 0.0
      %1223 = vmatpush2.msra.mxu0 0.0
      %1224 = vmatprep.subr.mxu0 0.0
      %1225 = vmatpush2.msra.mxu0 0.0
      %1226 = vmatprep.subr.mxu0 0.0
      %1227 = vmatpush2.msra.mxu0 0.0
      %1228 = vmatprep.subr.mxu0 0.0
      %1229 = vmatpush2.msra.mxu0 0.0
      %1230 = vmatprep.subr.mxu0 0.0
      %1231 = vmatpush2.msra.mxu0 0.0
      %1232 = vmatprep.subr.mxu0 0.0
      %1233 = vmatpush2.msra.mxu0 0.0
      %1234 = vmatprep.subr.mxu0 0.0
      %1235 = vmatpush2.msra.mxu0 0.0
      %1236 = vmatprep.subr.mxu0 0.0
      %1237 = vmatpush2.msra.mxu0 0.0
      %1238 = vmatprep.subr.mxu0 0.0
      %1239 = vmatpush2.msra.mxu0 0.0
      %1240 = vmatprep.subr.mxu0 0.0
      %1241 = vmatpush2.msra.mxu0 0.0
      %1242 = vmatprep.subr.mxu0 0.0
      %1243 = vmatpush2.msra.mxu0 0.0
      %1244 = vmatprep.subr.mxu0 0.0
      %1245 = vmatpush2.msra.mxu0 0.0
      %1246 = vmatprep.mubr.f32.mxu0 0.0
      %1247 = vmatmul.mubr.f32.gmra.mxu0 %v1174
      %v1248 = vpop.f32.mrf.mxu0
      %v1249 = vadd.f32 0.0, %v1248
      %v1250 = vpop.f32.mrf.mxu0
      %1251 = vmatprep.mubr.f32.mxu0 0.0
      %1252 = vmatmul.mubr.f32.gmra.mxu0 %v1177
      %v1253 = vpop.f32.mrf.mxu0
      %v1254 = vadd.f32 0.0, %v1253
      %v1255 = vpop.f32.mrf.mxu0
      %1256 = vdwg.mxu0
      %v1258 = vsel %vm247, %v223, 0
      %v1261 = vsel %vm247, %v224, 0
      %v1264 = vsel %vm254, %v243, 0
      %1266 = vmatprep.subr.mxu0 0.0
      %1267 = vmatpush1.msra.mxu0 0.0
      %1268 = vmatprep.subr.mxu0 0.0
      %1269 = vmatpush1.msra.mxu0 0.0
      %1270 = vmatprep.subr.mxu0 0.0
      %1271 = vmatpush1.msra.mxu0 0.0
      %1272 = vmatprep.subr.mxu0 0.0
      %1273 = vmatpush1.msra.mxu0 0.0
      %1274 = vmatprep.subr.mxu0 0.0
      %1275 = vmatpush1.msra.mxu0 0.0
      %1276 = vmatprep.subr.mxu0 0.0
      %1277 = vmatpush1.msra.mxu0 0.0
      %1278 = vmatprep.subr.mxu0 0.0
      %1279 = vmatpush1.msra.mxu0 0.0
      %1280 = vmatprep.subr.mxu0 0.0
      %1281 = vmatpush1.msra.mxu0 0.0
      %1282 = vmatprep.subr.mxu0 0.0
      %1283 = vmatpush1.msra.mxu0 0.0
      %1284 = vmatprep.subr.mxu0 0.0
      %1285 = vmatpush1.msra.mxu0 0.0
      %1286 = vmatprep.subr.mxu0 0.0
      %1287 = vmatpush1.msra.mxu0 0.0
      %1288 = vmatprep.subr.mxu0 0.0
      %1289 = vmatpush1.msra.mxu0 0.0
      %1290 = vmatprep.subr.mxu0 0.0
      %1291 = vmatpush1.msra.mxu0 0.0
      %1292 = vmatprep.subr.mxu0 0.0
      %1293 = vmatpush1.msra.mxu0 0.0
      %1294 = vmatprep.subr.mxu0 0.0
      %1295 = vmatpush1.msra.mxu0 0.0
      %1296 = vmatprep.subr.mxu0 0.0
      %1297 = vmatpush1.msra.mxu0 %v1264
      %1298 = vmatprep.subr.mxu0 0.0
      %1299 = vmatpush2.msra.mxu0 0.0
      %1300 = vmatprep.subr.mxu0 0.0
      %1301 = vmatpush2.msra.mxu0 0.0
      %1302 = vmatprep.subr.mxu0 0.0
      %1303 = vmatpush2.msra.mxu0 0.0
      %1304 = vmatprep.subr.mxu0 0.0
      %1305 = vmatpush2.msra.mxu0 0.0
      %1306 = vmatprep.subr.mxu0 0.0
      %1307 = vmatpush2.msra.mxu0 0.0
      %1308 = vmatprep.subr.mxu0 0.0
      %1309 = vmatpush2.msra.mxu0 0.0
      %1310 = vmatprep.subr.mxu0 0.0
      %1311 = vmatpush2.msra.mxu0 0.0
      %1312 = vmatprep.subr.mxu0 0.0
      %1313 = vmatpush2.msra.mxu0 0.0
      %1314 = vmatprep.subr.mxu0 0.0
      %1315 = vmatpush2.msra.mxu0 0.0
      %1316 = vmatprep.subr.mxu0 0.0
      %1317 = vmatpush2.msra.mxu0 0.0
      %1318 = vmatprep.subr.mxu0 0.0
      %1319 = vmatpush2.msra.mxu0 0.0
      %1320 = vmatprep.subr.mxu0 0.0
      %1321 = vmatpush2.msra.mxu0 0.0
      %1322 = vmatprep.subr.mxu0 0.0
      %1323 = vmatpush2.msra.mxu0 0.0
      %1324 = vmatprep.subr.mxu0 0.0
      %1325 = vmatpush2.msra.mxu0 0.0
      %1326 = vmatprep.subr.mxu0 0.0
      %1327 = vmatpush2.msra.mxu0 0.0
      %1328 = vmatprep.subr.mxu0 0.0
      %1329 = vmatpush2.msra.mxu0 0.0
      %1330 = vmatprep.mubr.f32.mxu0 0.0
      %1331 = vmatmul.mubr.f32.gmra.mxu0 %v1258
      %v1332 = vpop.f32.mrf.mxu0
      %v1333 = vadd.f32 0.0, %v1332
      %v1334 = vpop.f32.mrf.mxu0
      %1335 = vmatprep.mubr.f32.mxu0 0.0
      %1336 = vmatmul.mubr.f32.gmra.mxu0 %v1261
      %v1337 = vpop.f32.mrf.mxu0
      %v1338 = vadd.f32 0.0, %v1337
      %v1339 = vpop.f32.mrf.mxu0
      %1340 = vdwg.mxu0
      %v1342 = vsel %vm247, %v225, 0
      %v1345 = vsel %vm247, %v226, 0
      %v1348 = vsel %vm254, %v244, 0
      %1350 = vmatprep.subr.mxu0 0.0
      %1351 = vmatpush1.msra.mxu0 0.0
      %1352 = vmatprep.subr.mxu0 0.0
      %1353 = vmatpush1.msra.mxu0 0.0
      %1354 = vmatprep.subr.mxu0 0.0
      %1355 = vmatpush1.msra.mxu0 0.0
      %1356 = vmatprep.subr.mxu0 0.0
      %1357 = vmatpush1.msra.mxu0 0.0
      %1358 = vmatprep.subr.mxu0 0.0
      %1359 = vmatpush1.msra.mxu0 0.0
      %1360 = vmatprep.subr.mxu0 0.0
      %1361 = vmatpush1.msra.mxu0 0.0
      %1362 = vmatprep.subr.mxu0 0.0
      %1363 = vmatpush1.msra.mxu0 0.0
      %1364 = vmatprep.subr.mxu0 0.0
      %1365 = vmatpush1.msra.mxu0 0.0
      %1366 = vmatprep.subr.mxu0 0.0
      %1367 = vmatpush1.msra.mxu0 0.0
      %1368 = vmatprep.subr.mxu0 0.0
      %1369 = vmatpush1.msra.mxu0 0.0
      %1370 = vmatprep.subr.mxu0 0.0
      %1371 = vmatpush1.msra.mxu0 0.0
      %1372 = vmatprep.subr.mxu0 0.0
      %1373 = vmatpush1.msra.mxu0 0.0
      %1374 = vmatprep.subr.mxu0 0.0
      %1375 = vmatpush1.msra.mxu0 0.0
      %1376 = vmatprep.subr.mxu0 0.0
      %1377 = vmatpush1.msra.mxu0 0.0
      %1378 = vmatprep.subr.mxu0 0.0
      %1379 = vmatpush1.msra.mxu0 0.0
      %1380 = vmatprep.subr.mxu0 0.0
      %1381 = vmatpush1.msra.mxu0 %v1348
      %1382 = vmatprep.subr.mxu0 0.0
      %1383 = vmatpush2.msra.mxu0 0.0
      %1384 = vmatprep.subr.mxu0 0.0
      %1385 = vmatpush2.msra.mxu0 0.0
      %1386 = vmatprep.subr.mxu0 0.0
      %1387 = vmatpush2.msra.mxu0 0.0
      %1388 = vmatprep.subr.mxu0 0.0
      %1389 = vmatpush2.msra.mxu0 0.0
      %1390 = vmatprep.subr.mxu0 0.0
      %1391 = vmatpush2.msra.mxu0 0.0
      %1392 = vmatprep.subr.mxu0 0.0
      %1393 = vmatpush2.msra.mxu0 0.0
      %1394 = vmatprep.subr.mxu0 0.0
      %1395 = vmatpush2.msra.mxu0 0.0
      %1396 = vmatprep.subr.mxu0 0.0
      %1397 = vmatpush2.msra.mxu0 0.0
      %1398 = vmatprep.subr.mxu0 0.0
      %1399 = vmatpush2.msra.mxu0 0.0
      %1400 = vmatprep.subr.mxu0 0.0
      %1401 = vmatpush2.msra.mxu0 0.0
      %1402 = vmatprep.subr.mxu0 0.0
      %1403 = vmatpush2.msra.mxu0 0.0
      %1404 = vmatprep.subr.mxu0 0.0
      %1405 = vmatpush2.msra.mxu0 0.0
      %1406 = vmatprep.subr.mxu0 0.0
      %1407 = vmatpush2.msra.mxu0 0.0
      %1408 = vmatprep.subr.mxu0 0.0
      %1409 = vmatpush2.msra.mxu0 0.0
      %1410 = vmatprep.subr.mxu0 0.0
      %1411 = vmatpush2.msra.mxu0 0.0
      %1412 = vmatprep.subr.mxu0 0.0
      %1413 = vmatpush2.msra.mxu0 0.0
      %1414 = vmatprep.mubr.f32.mxu0 0.0
      %1415 = vmatmul.mubr.f32.gmra.mxu0 %v1342
      %v1416 = vpop.f32.mrf.mxu0
      %v1417 = vadd.f32 0.0, %v1416
      %v1418 = vpop.f32.mrf.mxu0
      %1419 = vmatprep.mubr.f32.mxu0 0.0
      %1420 = vmatmul.mubr.f32.gmra.mxu0 %v1345
      %v1421 = vpop.f32.mrf.mxu0
      %v1422 = vadd.f32 0.0, %v1421
      %v1423 = vpop.f32.mrf.mxu0
      %1424 = vdwg.mxu0
      %v1426 = vsel %vm247, %v227, 0
      %v1429 = vsel %vm247, %v228, 0
      %v1432 = vsel %vm254, %v245, 0
      %1434 = vmatprep.subr.mxu0 0.0
      %1435 = vmatpush1.msra.mxu0 0.0
      %1436 = vmatprep.subr.mxu0 0.0
      %1437 = vmatpush1.msra.mxu0 0.0
      %1438 = vmatprep.subr.mxu0 0.0
      %1439 = vmatpush1.msra.mxu0 0.0
      %1440 = vmatprep.subr.mxu0 0.0
      %1441 = vmatpush1.msra.mxu0 0.0
      %1442 = vmatprep.subr.mxu0 0.0
      %1443 = vmatpush1.msra.mxu0 0.0
      %1444 = vmatprep.subr.mxu0 0.0
      %1445 = vmatpush1.msra.mxu0 0.0
      %1446 = vmatprep.subr.mxu0 0.0
      %1447 = vmatpush1.msra.mxu0 0.0
      %1448 = vmatprep.subr.mxu0 0.0
      %1449 = vmatpush1.msra.mxu0 0.0
      %1450 = vmatprep.subr.mxu0 0.0
      %1451 = vmatpush1.msra.mxu0 0.0
      %1452 = vmatprep.subr.mxu0 0.0
      %1453 = vmatpush1.msra.mxu0 0.0
      %1454 = vmatprep.subr.mxu0 0.0
      %1455 = vmatpush1.msra.mxu0 0.0
      %1456 = vmatprep.subr.mxu0 0.0
      %1457 = vmatpush1.msra.mxu0 0.0
      %1458 = vmatprep.subr.mxu0 0.0
      %1459 = vmatpush1.msra.mxu0 0.0
      %1460 = vmatprep.subr.mxu0 0.0
      %1461 = vmatpush1.msra.mxu0 0.0
      %1462 = vmatprep.subr.mxu0 0.0
      %1463 = vmatpush1.msra.mxu0 0.0
      %1464 = vmatprep.subr.mxu0 0.0
      %1465 = vmatpush1.msra.mxu0 %v1432
      %1466 = vmatprep.subr.mxu0 0.0
      %1467 = vmatpush2.msra.mxu0 0.0
      %1468 = vmatprep.subr.mxu0 0.0
      %1469 = vmatpush2.msra.mxu0 0.0
      %1470 = vmatprep.subr.mxu0 0.0
      %1471 = vmatpush2.msra.mxu0 0.0
      %1472 = vmatprep.subr.mxu0 0.0
      %1473 = vmatpush2.msra.mxu0 0.0
      %1474 = vmatprep.subr.mxu0 0.0
      %1475 = vmatpush2.msra.mxu0 0.0
      %1476 = vmatprep.subr.mxu0 0.0
      %1477 = vmatpush2.msra.mxu0 0.0
      %1478 = vmatprep.subr.mxu0 0.0
      %1479 = vmatpush2.msra.mxu0 0.0
      %1480 = vmatprep.subr.mxu0 0.0
      %1481 = vmatpush2.msra.mxu0 0.0
      %1482 = vmatprep.subr.mxu0 0.0
      %1483 = vmatpush2.msra.mxu0 0.0
      %1484 = vmatprep.subr.mxu0 0.0
      %1485 = vmatpush2.msra.mxu0 0.0
      %1486 = vmatprep.subr.mxu0 0.0
      %1487 = vmatpush2.msra.mxu0 0.0
      %1488 = vmatprep.subr.mxu0 0.0
      %1489 = vmatpush2.msra.mxu0 0.0
      %1490 = vmatprep.subr.mxu0 0.0
      %1491 = vmatpush2.msra.mxu0 0.0
      %1492 = vmatprep.subr.mxu0 0.0
      %1493 = vmatpush2.msra.mxu0 0.0
      %1494 = vmatprep.subr.mxu0 0.0
      %1495 = vmatpush2.msra.mxu0 0.0
      %1496 = vmatprep.subr.mxu0 0.0
      %1497 = vmatpush2.msra.mxu0 0.0
      %1498 = vmatprep.mubr.f32.mxu0 0.0
      %1499 = vmatmul.mubr.f32.gmra.mxu0 %v1426
      %v1500 = vpop.f32.mrf.mxu0
      %v1501 = vadd.f32 0.0, %v1500
      %v1502 = vpop.f32.mrf.mxu0
      %1503 = vmatprep.mubr.f32.mxu0 0.0
      %1504 = vmatmul.mubr.f32.gmra.mxu0 %v1429
      %v1505 = vpop.f32.mrf.mxu0
      %v1506 = vadd.f32 0.0, %v1505
      %v1507 = vpop.f32.mrf.mxu0
      %1508 = vdwg.mxu0
      %v1510 = vsel %vm247, %v229, 0
      %v1513 = vsel %vm247, %v230, 0
      %v1516 = vsel %vm254, %v246, 0
      %1518 = vmatprep.subr.mxu0 0.0
      %1519 = vmatpush1.msra.mxu0 0.0
      %1520 = vmatprep.subr.mxu0 0.0
      %1521 = vmatpush1.msra.mxu0 0.0
      %1522 = vmatprep.subr.mxu0 0.0
      %1523 = vmatpush1.msra.mxu0 0.0
      %1524 = vmatprep.subr.mxu0 0.0
      %1525 = vmatpush1.msra.mxu0 0.0
      %1526 = vmatprep.subr.mxu0 0.0
      %1527 = vmatpush1.msra.mxu0 0.0
      %1528 = vmatprep.subr.mxu0 0.0
      %1529 = vmatpush1.msra.mxu0 0.0
      %1530 = vmatprep.subr.mxu0 0.0
      %1531 = vmatpush1.msra.mxu0 0.0
      %1532 = vmatprep.subr.mxu0 0.0
      %1533 = vmatpush1.msra.mxu0 0.0
      %1534 = vmatprep.subr.mxu0 0.0
      %1535 = vmatpush1.msra.mxu0 0.0
      %1536 = vmatprep.subr.mxu0 0.0
      %1537 = vmatpush1.msra.mxu0 0.0
      %1538 = vmatprep.subr.mxu0 0.0
      %1539 = vmatpush1.msra.mxu0 0.0
      %1540 = vmatprep.subr.mxu0 0.0
      %1541 = vmatpush1.msra.mxu0 0.0
      %1542 = vmatprep.subr.mxu0 0.0
      %1543 = vmatpush1.msra.mxu0 0.0
      %1544 = vmatprep.subr.mxu0 0.0
      %1545 = vmatpush1.msra.mxu0 0.0
      %1546 = vmatprep.subr.mxu0 0.0
      %1547 = vmatpush1.msra.mxu0 0.0
      %1548 = vmatprep.subr.mxu0 0.0
      %1549 = vmatpush1.msra.mxu0 %v1516
      %1550 = vmatprep.subr.mxu0 0.0
      %1551 = vmatpush2.msra.mxu0 0.0
      %1552 = vmatprep.subr.mxu0 0.0
      %1553 = vmatpush2.msra.mxu0 0.0
      %1554 = vmatprep.subr.mxu0 0.0
      %1555 = vmatpush2.msra.mxu0 0.0
      %1556 = vmatprep.subr.mxu0 0.0
      %1557 = vmatpush2.msra.mxu0 0.0
      %1558 = vmatprep.subr.mxu0 0.0
      %1559 = vmatpush2.msra.mxu0 0.0
      %1560 = vmatprep.subr.mxu0 0.0
      %1561 = vmatpush2.msra.mxu0 0.0
      %1562 = vmatprep.subr.mxu0 0.0
      %1563 = vmatpush2.msra.mxu0 0.0
      %1564 = vmatprep.subr.mxu0 0.0
      %1565 = vmatpush2.msra.mxu0 0.0
      %1566 = vmatprep.subr.mxu0 0.0
      %1567 = vmatpush2.msra.mxu0 0.0
      %1568 = vmatprep.subr.mxu0 0.0
      %1569 = vmatpush2.msra.mxu0 0.0
      %1570 = vmatprep.subr.mxu0 0.0
      %1571 = vmatpush2.msra.mxu0 0.0
      %1572 = vmatprep.subr.mxu0 0.0
      %1573 = vmatpush2.msra.mxu0 0.0
      %1574 = vmatprep.subr.mxu0 0.0
      %1575 = vmatpush2.msra.mxu0 0.0
      %1576 = vmatprep.subr.mxu0 0.0
      %1577 = vmatpush2.msra.mxu0 0.0
      %1578 = vmatprep.subr.mxu0 0.0
      %1579 = vmatpush2.msra.mxu0 0.0
      %1580 = vmatprep.subr.mxu0 0.0
      %1581 = vmatpush2.msra.mxu0 0.0
      %1582 = vmatprep.mubr.f32.mxu0 0.0
      %1583 = vmatmul.mubr.f32.gmra.mxu0 %v1510
      %v1584 = vpop.f32.mrf.mxu0
      %v1585 = vadd.f32 0.0, %v1584
      %v1586 = vpop.f32.mrf.mxu0
      %1587 = vmatprep.mubr.f32.mxu0 0.0
      %1588 = vmatmul.mubr.f32.gmra.mxu0 %v1513
      %v1589 = vpop.f32.mrf.mxu0
      %v1590 = vadd.f32 0.0, %v1589
      %v1591 = vpop.f32.mrf.mxu0
      %1592 = vdwg.mxu0
      %vm1593 = vcmask 130048
      %v1595 = vsel %vm1593, %v191, 0
      %1597 = vmatprep.subr.mxu0 0.0
      %1598 = vmatpush1.msra.mxu0 0.0
      %1599 = vmatprep.subr.mxu0 0.0
      %1600 = vmatpush1.msra.mxu0 0.0
      %1601 = vmatprep.subr.mxu0 0.0
      %1602 = vmatpush1.msra.mxu0 0.0
      %1603 = vmatprep.subr.mxu0 0.0
      %1604 = vmatpush1.msra.mxu0 0.0
      %1605 = vmatprep.subr.mxu0 0.0
      %1606 = vmatpush1.msra.mxu0 0.0
      %1607 = vmatprep.subr.mxu0 0.0
      %1608 = vmatpush1.msra.mxu0 0.0
      %1609 = vmatprep.subr.mxu0 0.0
      %1610 = vmatpush1.msra.mxu0 0.0
      %1611 = vmatprep.subr.mxu0 0.0
      %1612 = vmatpush1.msra.mxu0 0.0
      %1613 = vmatprep.subr.mxu0 0.0
      %1614 = vmatpush1.msra.mxu0 0.0
      %1615 = vmatprep.subr.mxu0 0.0
      %1616 = vmatpush1.msra.mxu0 0.0
      %1617 = vmatprep.subr.mxu0 0.0
      %1618 = vmatpush1.msra.mxu0 0.0
      %1619 = vmatprep.subr.mxu0 0.0
      %1620 = vmatpush1.msra.mxu0 0.0
      %1621 = vmatprep.subr.mxu0 0.0
      %1622 = vmatpush1.msra.mxu0 0.0
      %1623 = vmatprep.subr.mxu0 0.0
      %1624 = vmatpush1.msra.mxu0 0.0
      %1625 = vmatprep.subr.mxu0 0.0
      %1626 = vmatpush1.msra.mxu0 %v330
      %1627 = vmatprep.subr.mxu0 0.0
      %1628 = vmatpush1.msra.mxu0 %v325
      %1629 = vmatprep.subr.mxu0 0.0
      %1630 = vmatpush2.msra.mxu0 0.0
      %1631 = vmatprep.subr.mxu0 0.0
      %1632 = vmatpush2.msra.mxu0 0.0
      %1633 = vmatprep.subr.mxu0 0.0
      %1634 = vmatpush2.msra.mxu0 0.0
      %1635 = vmatprep.subr.mxu0 0.0
      %1636 = vmatpush2.msra.mxu0 0.0
      %1637 = vmatprep.subr.mxu0 0.0
      %1638 = vmatpush2.msra.mxu0 0.0
      %1639 = vmatprep.subr.mxu0 0.0
      %1640 = vmatpush2.msra.mxu0 0.0
      %1641 = vmatprep.subr.mxu0 0.0
      %1642 = vmatpush2.msra.mxu0 0.0
      %1643 = vmatprep.subr.mxu0 0.0
      %1644 = vmatpush2.msra.mxu0 0.0
      %1645 = vmatprep.subr.mxu0 0.0
      %1646 = vmatpush2.msra.mxu0 0.0
      %1647 = vmatprep.subr.mxu0 0.0
      %1648 = vmatpush2.msra.mxu0 0.0
      %1649 = vmatprep.subr.mxu0 0.0
      %1650 = vmatpush2.msra.mxu0 0.0
      %1651 = vmatprep.subr.mxu0 0.0
      %1652 = vmatpush2.msra.mxu0 0.0
      %1653 = vmatprep.subr.mxu0 0.0
      %1654 = vmatpush2.msra.mxu0 0.0
      %1655 = vmatprep.subr.mxu0 0.0
      %1656 = vmatpush2.msra.mxu0 0.0
      %1657 = vmatprep.subr.mxu0 0.0
      %1658 = vmatpush2.msra.mxu0 0.0
      %1659 = vmatprep.subr.mxu0 0.0
      %1660 = vmatpush2.msra.mxu0 0.0
      %1661 = vmatprep.mubr.f32.mxu0 0.0
      %1662 = vmatmul.mubr.f32.gmra.mxu0 %v1595
      %v1663 = vpop.f32.mrf.mxu0
      %v1664 = vadd.f32 0.0, %v1663
      %v1665 = vpop.f32.mrf.mxu0
      %1666 = vdwg.mxu0
      %v1668 = vsel %vm1593, %v192, 0
      %1670 = vmatprep.subr.mxu0 0.0
      %1671 = vmatpush1.msra.mxu0 0.0
      %1672 = vmatprep.subr.mxu0 0.0
      %1673 = vmatpush1.msra.mxu0 0.0
      %1674 = vmatprep.subr.mxu0 0.0
      %1675 = vmatpush1.msra.mxu0 0.0
      %1676 = vmatprep.subr.mxu0 0.0
      %1677 = vmatpush1.msra.mxu0 0.0
      %1678 = vmatprep.subr.mxu0 0.0
      %1679 = vmatpush1.msra.mxu0 0.0
      %1680 = vmatprep.subr.mxu0 0.0
      %1681 = vmatpush1.msra.mxu0 0.0
      %1682 = vmatprep.subr.mxu0 0.0
      %1683 = vmatpush1.msra.mxu0 0.0
      %1684 = vmatprep.subr.mxu0 0.0
      %1685 = vmatpush1.msra.mxu0 0.0
      %1686 = vmatprep.subr.mxu0 0.0
      %1687 = vmatpush1.msra.mxu0 0.0
      %1688 = vmatprep.subr.mxu0 0.0
      %1689 = vmatpush1.msra.mxu0 0.0
      %1690 = vmatprep.subr.mxu0 0.0
      %1691 = vmatpush1.msra.mxu0 0.0
      %1692 = vmatprep.subr.mxu0 0.0
      %1693 = vmatpush1.msra.mxu0 0.0
      %1694 = vmatprep.subr.mxu0 0.0
      %1695 = vmatpush1.msra.mxu0 0.0
      %1696 = vmatprep.subr.mxu0 0.0
      %1697 = vmatpush1.msra.mxu0 0.0
      %1698 = vmatprep.subr.mxu0 0.0
      %1699 = vmatpush1.msra.mxu0 %v414
      %1700 = vmatprep.subr.mxu0 0.0
      %1701 = vmatpush1.msra.mxu0 %v409
      %1702 = vmatprep.subr.mxu0 0.0
      %1703 = vmatpush2.msra.mxu0 0.0
      %1704 = vmatprep.subr.mxu0 0.0
      %1705 = vmatpush2.msra.mxu0 0.0
      %1706 = vmatprep.subr.mxu0 0.0
      %1707 = vmatpush2.msra.mxu0 0.0
      %1708 = vmatprep.subr.mxu0 0.0
      %1709 = vmatpush2.msra.mxu0 0.0
      %1710 = vmatprep.subr.mxu0 0.0
      %1711 = vmatpush2.msra.mxu0 0.0
      %1712 = vmatprep.subr.mxu0 0.0
      %1713 = vmatpush2.msra.mxu0 0.0
      %1714 = vmatprep.subr.mxu0 0.0
      %1715 = vmatpush2.msra.mxu0 0.0
      %1716 = vmatprep.subr.mxu0 0.0
      %1717 = vmatpush2.msra.mxu0 0.0
      %1718 = vmatprep.subr.mxu0 0.0
      %1719 = vmatpush2.msra.mxu0 0.0
      %1720 = vmatprep.subr.mxu0 0.0
      %1721 = vmatpush2.msra.mxu0 0.0
      %1722 = vmatprep.subr.mxu0 0.0
      %1723 = vmatpush2.msra.mxu0 0.0
      %1724 = vmatprep.subr.mxu0 0.0
      %1725 = vmatpush2.msra.mxu0 0.0
      %1726 = vmatprep.subr.mxu0 0.0
      %1727 = vmatpush2.msra.mxu0 0.0
      %1728 = vmatprep.subr.mxu0 0.0
      %1729 = vmatpush2.msra.mxu0 0.0
      %1730 = vmatprep.subr.mxu0 0.0
      %1731 = vmatpush2.msra.mxu0 0.0
      %1732 = vmatprep.subr.mxu0 0.0
      %1733 = vmatpush2.msra.mxu0 0.0
      %1734 = vmatprep.mubr.f32.mxu0 0.0
      %1735 = vmatmul.mubr.f32.gmra.mxu0 %v1668
      %v1736 = vpop.f32.mrf.mxu0
      %v1737 = vadd.f32 0.0, %v1736
      %v1738 = vpop.f32.mrf.mxu0
      %1739 = vdwg.mxu0
      %v1741 = vsel %vm1593, %v193, 0
      %1743 = vmatprep.subr.mxu0 0.0
      %1744 = vmatpush1.msra.mxu0 0.0
      %1745 = vmatprep.subr.mxu0 0.0
      %1746 = vmatpush1.msra.mxu0 0.0
      %1747 = vmatprep.subr.mxu0 0.0
      %1748 = vmatpush1.msra.mxu0 0.0
      %1749 = vmatprep.subr.mxu0 0.0
      %1750 = vmatpush1.msra.mxu0 0.0
      %1751 = vmatprep.subr.mxu0 0.0
      %1752 = vmatpush1.msra.mxu0 0.0
      %1753 = vmatprep.subr.mxu0 0.0
      %1754 = vmatpush1.msra.mxu0 0.0
      %1755 = vmatprep.subr.mxu0 0.0
      %1756 = vmatpush1.msra.mxu0 0.0
      %1757 = vmatprep.subr.mxu0 0.0
      %1758 = vmatpush1.msra.mxu0 0.0
      %1759 = vmatprep.subr.mxu0 0.0
      %1760 = vmatpush1.msra.mxu0 0.0
      %1761 = vmatprep.subr.mxu0 0.0
      %1762 = vmatpush1.msra.mxu0 0.0
      %1763 = vmatprep.subr.mxu0 0.0
      %1764 = vmatpush1.msra.mxu0 0.0
      %1765 = vmatprep.subr.mxu0 0.0
      %1766 = vmatpush1.msra.mxu0 0.0
      %1767 = vmatprep.subr.mxu0 0.0
      %1768 = vmatpush1.msra.mxu0 0.0
      %1769 = vmatprep.subr.mxu0 0.0
      %1770 = vmatpush1.msra.mxu0 0.0
      %1771 = vmatprep.subr.mxu0 0.0
      %1772 = vmatpush1.msra.mxu0 %v498
      %1773 = vmatprep.subr.mxu0 0.0
      %1774 = vmatpush1.msra.mxu0 %v493
      %1775 = vmatprep.subr.mxu0 0.0
      %1776 = vmatpush2.msra.mxu0 0.0
      %1777 = vmatprep.subr.mxu0 0.0
      %1778 = vmatpush2.msra.mxu0 0.0
      %1779 = vmatprep.subr.mxu0 0.0
      %1780 = vmatpush2.msra.mxu0 0.0
      %1781 = vmatprep.subr.mxu0 0.0
      %1782 = vmatpush2.msra.mxu0 0.0
      %1783 = vmatprep.subr.mxu0 0.0
      %1784 = vmatpush2.msra.mxu0 0.0
      %1785 = vmatprep.subr.mxu0 0.0
      %1786 = vmatpush2.msra.mxu0 0.0
      %1787 = vmatprep.subr.mxu0 0.0
      %1788 = vmatpush2.msra.mxu0 0.0
      %1789 = vmatprep.subr.mxu0 0.0
      %1790 = vmatpush2.msra.mxu0 0.0
      %1791 = vmatprep.subr.mxu0 0.0
      %1792 = vmatpush2.msra.mxu0 0.0
      %1793 = vmatprep.subr.mxu0 0.0
      %1794 = vmatpush2.msra.mxu0 0.0
      %1795 = vmatprep.subr.mxu0 0.0
      %1796 = vmatpush2.msra.mxu0 0.0
      %1797 = vmatprep.subr.mxu0 0.0
      %1798 = vmatpush2.msra.mxu0 0.0
      %1799 = vmatprep.subr.mxu0 0.0
      %1800 = vmatpush2.msra.mxu0 0.0
      %1801 = vmatprep.subr.mxu0 0.0
      %1802 = vmatpush2.msra.mxu0 0.0
      %1803 = vmatprep.subr.mxu0 0.0
      %1804 = vmatpush2.msra.mxu0 0.0
      %1805 = vmatprep.subr.mxu0 0.0
      %1806 = vmatpush2.msra.mxu0 0.0
      %1807 = vmatprep.mubr.f32.mxu0 0.0
      %1808 = vmatmul.mubr.f32.gmra.mxu0 %v1741
      %v1809 = vpop.f32.mrf.mxu0
      %v1810 = vadd.f32 0.0, %v1809
      %v1811 = vpop.f32.mrf.mxu0
      %1812 = vdwg.mxu0
      %v1814 = vsel %vm1593, %v194, 0
      %1816 = vmatprep.subr.mxu0 0.0
      %1817 = vmatpush1.msra.mxu0 0.0
      %1818 = vmatprep.subr.mxu0 0.0
      %1819 = vmatpush1.msra.mxu0 0.0
      %1820 = vmatprep.subr.mxu0 0.0
      %1821 = vmatpush1.msra.mxu0 0.0
      %1822 = vmatprep.subr.mxu0 0.0
      %1823 = vmatpush1.msra.mxu0 0.0
      %1824 = vmatprep.subr.mxu0 0.0
      %1825 = vmatpush1.msra.mxu0 0.0
      %1826 = vmatprep.subr.mxu0 0.0
      %1827 = vmatpush1.msra.mxu0 0.0
      %1828 = vmatprep.subr.mxu0 0.0
      %1829 = vmatpush1.msra.mxu0 0.0
      %1830 = vmatprep.subr.mxu0 0.0
      %1831 = vmatpush1.msra.mxu0 0.0
      %1832 = vmatprep.subr.mxu0 0.0
      %1833 = vmatpush1.msra.mxu0 0.0
      %1834 = vmatprep.subr.mxu0 0.0
      %1835 = vmatpush1.msra.mxu0 0.0
      %1836 = vmatprep.subr.mxu0 0.0
      %1837 = vmatpush1.msra.mxu0 0.0
      %1838 = vmatprep.subr.mxu0 0.0
      %1839 = vmatpush1.msra.mxu0 0.0
      %1840 = vmatprep.subr.mxu0 0.0
      %1841 = vmatpush1.msra.mxu0 0.0
      %1842 = vmatprep.subr.mxu0 0.0
      %1843 = vmatpush1.msra.mxu0 0.0
      %1844 = vmatprep.subr.mxu0 0.0
      %1845 = vmatpush1.msra.mxu0 %v582
      %1846 = vmatprep.subr.mxu0 0.0
      %1847 = vmatpush1.msra.mxu0 %v577
      %1848 = vmatprep.subr.mxu0 0.0
      %1849 = vmatpush2.msra.mxu0 0.0
      %1850 = vmatprep.subr.mxu0 0.0
      %1851 = vmatpush2.msra.mxu0 0.0
      %1852 = vmatprep.subr.mxu0 0.0
      %1853 = vmatpush2.msra.mxu0 0.0
      %1854 = vmatprep.subr.mxu0 0.0
      %1855 = vmatpush2.msra.mxu0 0.0
      %1856 = vmatprep.subr.mxu0 0.0
      %1857 = vmatpush2.msra.mxu0 0.0
      %1858 = vmatprep.subr.mxu0 0.0
      %1859 = vmatpush2.msra.mxu0 0.0
      %1860 = vmatprep.subr.mxu0 0.0
      %1861 = vmatpush2.msra.mxu0 0.0
      %1862 = vmatprep.subr.mxu0 0.0
      %1863 = vmatpush2.msra.mxu0 0.0
      %1864 = vmatprep.subr.mxu0 0.0
      %1865 = vmatpush2.msra.mxu0 0.0
      %1866 = vmatprep.subr.mxu0 0.0
      %1867 = vmatpush2.msra.mxu0 0.0
      %1868 = vmatprep.subr.mxu0 0.0
      %1869 = vmatpush2.msra.mxu0 0.0
      %1870 = vmatprep.subr.mxu0 0.0
      %1871 = vmatpush2.msra.mxu0 0.0
      %1872 = vmatprep.subr.mxu0 0.0
      %1873 = vmatpush2.msra.mxu0 0.0
      %1874 = vmatprep.subr.mxu0 0.0
      %1875 = vmatpush2.msra.mxu0 0.0
      %1876 = vmatprep.subr.mxu0 0.0
      %1877 = vmatpush2.msra.mxu0 0.0
      %1878 = vmatprep.subr.mxu0 0.0
      %1879 = vmatpush2.msra.mxu0 0.0
      %1880 = vmatprep.mubr.f32.mxu0 0.0
      %1881 = vmatmul.mubr.f32.gmra.mxu0 %v1814
      %v1882 = vpop.f32.mrf.mxu0
      %v1883 = vadd.f32 0.0, %v1882
      %v1884 = vpop.f32.mrf.mxu0
      %1885 = vdwg.mxu0
      %v1887 = vsel %vm1593, %v195, 0
      %1889 = vmatprep.subr.mxu0 0.0
      %1890 = vmatpush1.msra.mxu0 0.0
      %1891 = vmatprep.subr.mxu0 0.0
      %1892 = vmatpush1.msra.mxu0 0.0
      %1893 = vmatprep.subr.mxu0 0.0
      %1894 = vmatpush1.msra.mxu0 0.0
      %1895 = vmatprep.subr.mxu0 0.0
      %1896 = vmatpush1.msra.mxu0 0.0
      %1897 = vmatprep.subr.mxu0 0.0
      %1898 = vmatpush1.msra.mxu0 0.0
      %1899 = vmatprep.subr.mxu0 0.0
      %1900 = vmatpush1.msra.mxu0 0.0
      %1901 = vmatprep.subr.mxu0 0.0
      %1902 = vmatpush1.msra.mxu0 0.0
      %1903 = vmatprep.subr.mxu0 0.0
      %1904 = vmatpush1.msra.mxu0 0.0
      %1905 = vmatprep.subr.mxu0 0.0
      %1906 = vmatpush1.msra.mxu0 0.0
      %1907 = vmatprep.subr.mxu0 0.0
      %1908 = vmatpush1.msra.mxu0 0.0
      %1909 = vmatprep.subr.mxu0 0.0
      %1910 = vmatpush1.msra.mxu0 0.0
      %1911 = vmatprep.subr.mxu0 0.0
      %1912 = vmatpush1.msra.mxu0 0.0
      %1913 = vmatprep.subr.mxu0 0.0
      %1914 = vmatpush1.msra.mxu0 0.0
      %1915 = vmatprep.subr.mxu0 0.0
      %1916 = vmatpush1.msra.mxu0 0.0
      %1917 = vmatprep.subr.mxu0 0.0
      %1918 = vmatpush1.msra.mxu0 %v666
      %1919 = vmatprep.subr.mxu0 0.0
      %1920 = vmatpush1.msra.mxu0 %v661
      %1921 = vmatprep.subr.mxu0 0.0
      %1922 = vmatpush2.msra.mxu0 0.0
      %1923 = vmatprep.subr.mxu0 0.0
      %1924 = vmatpush2.msra.mxu0 0.0
      %1925 = vmatprep.subr.mxu0 0.0
      %1926 = vmatpush2.msra.mxu0 0.0
      %1927 = vmatprep.subr.mxu0 0.0
      %1928 = vmatpush2.msra.mxu0 0.0
      %1929 = vmatprep.subr.mxu0 0.0
      %1930 = vmatpush2.msra.mxu0 0.0
      %1931 = vmatprep.subr.mxu0 0.0
      %1932 = vmatpush2.msra.mxu0 0.0
      %1933 = vmatprep.subr.mxu0 0.0
      %1934 = vmatpush2.msra.mxu0 0.0
      %1935 = vmatprep.subr.mxu0 0.0
      %1936 = vmatpush2.msra.mxu0 0.0
      %1937 = vmatprep.subr.mxu0 0.0
      %1938 = vmatpush2.msra.mxu0 0.0
      %1939 = vmatprep.subr.mxu0 0.0
      %1940 = vmatpush2.msra.mxu0 0.0
      %1941 = vmatprep.subr.mxu0 0.0
      %1942 = vmatpush2.msra.mxu0 0.0
      %1943 = vmatprep.subr.mxu0 0.0
      %1944 = vmatpush2.msra.mxu0 0.0
      %1945 = vmatprep.subr.mxu0 0.0
      %1946 = vmatpush2.msra.mxu0 0.0
      %1947 = vmatprep.subr.mxu0 0.0
      %1948 = vmatpush2.msra.mxu0 0.0
      %1949 = vmatprep.subr.mxu0 0.0
      %1950 = vmatpush2.msra.mxu0 0.0
      %1951 = vmatprep.subr.mxu0 0.0
      %1952 = vmatpush2.msra.mxu0 0.0
      %1953 = vmatprep.mubr.f32.mxu0 0.0
      %1954 = vmatmul.mubr.f32.gmra.mxu0 %v1887
      %v1955 = vpop.f32.mrf.mxu0
      %v1956 = vadd.f32 0.0, %v1955
      %v1957 = vpop.f32.mrf.mxu0
      %1958 = vdwg.mxu0
      %v1960 = vsel %vm1593, %v196, 0
      %1962 = vmatprep.subr.mxu0 0.0
      %1963 = vmatpush1.msra.mxu0 0.0
      %1964 = vmatprep.subr.mxu0 0.0
      %1965 = vmatpush1.msra.mxu0 0.0
      %1966 = vmatprep.subr.mxu0 0.0
      %1967 = vmatpush1.msra.mxu0 0.0
      %1968 = vmatprep.subr.mxu0 0.0
      %1969 = vmatpush1.msra.mxu0 0.0
      %1970 = vmatprep.subr.mxu0 0.0
      %1971 = vmatpush1.msra.mxu0 0.0
      %1972 = vmatprep.subr.mxu0 0.0
      %1973 = vmatpush1.msra.mxu0 0.0
      %1974 = vmatprep.subr.mxu0 0.0
      %1975 = vmatpush1.msra.mxu0 0.0
      %1976 = vmatprep.subr.mxu0 0.0
      %1977 = vmatpush1.msra.mxu0 0.0
      %1978 = vmatprep.subr.mxu0 0.0
      %1979 = vmatpush1.msra.mxu0 0.0
      %1980 = vmatprep.subr.mxu0 0.0
      %1981 = vmatpush1.msra.mxu0 0.0
      %1982 = vmatprep.subr.mxu0 0.0
      %1983 = vmatpush1.msra.mxu0 0.0
      %1984 = vmatprep.subr.mxu0 0.0
      %1985 = vmatpush1.msra.mxu0 0.0
      %1986 = vmatprep.subr.mxu0 0.0
      %1987 = vmatpush1.msra.mxu0 0.0
      %1988 = vmatprep.subr.mxu0 0.0
      %1989 = vmatpush1.msra.mxu0 0.0
      %1990 = vmatprep.subr.mxu0 0.0
      %1991 = vmatpush1.msra.mxu0 %v750
      %1992 = vmatprep.subr.mxu0 0.0
      %1993 = vmatpush1.msra.mxu0 %v745
      %1994 = vmatprep.subr.mxu0 0.0
      %1995 = vmatpush2.msra.mxu0 0.0
      %1996 = vmatprep.subr.mxu0 0.0
      %1997 = vmatpush2.msra.mxu0 0.0
      %1998 = vmatprep.subr.mxu0 0.0
      %1999 = vmatpush2.msra.mxu0 0.0
      %2000 = vmatprep.subr.mxu0 0.0
      %2001 = vmatpush2.msra.mxu0 0.0
      %2002 = vmatprep.subr.mxu0 0.0
      %2003 = vmatpush2.msra.mxu0 0.0
      %2004 = vmatprep.subr.mxu0 0.0
      %2005 = vmatpush2.msra.mxu0 0.0
      %2006 = vmatprep.subr.mxu0 0.0
      %2007 = vmatpush2.msra.mxu0 0.0
      %2008 = vmatprep.subr.mxu0 0.0
      %2009 = vmatpush2.msra.mxu0 0.0
      %2010 = vmatprep.subr.mxu0 0.0
      %2011 = vmatpush2.msra.mxu0 0.0
      %2012 = vmatprep.subr.mxu0 0.0
      %2013 = vmatpush2.msra.mxu0 0.0
      %2014 = vmatprep.subr.mxu0 0.0
      %2015 = vmatpush2.msra.mxu0 0.0
      %2016 = vmatprep.subr.mxu0 0.0
      %2017 = vmatpush2.msra.mxu0 0.0
      %2018 = vmatprep.subr.mxu0 0.0
      %2019 = vmatpush2.msra.mxu0 0.0
      %2020 = vmatprep.subr.mxu0 0.0
      %2021 = vmatpush2.msra.mxu0 0.0
      %2022 = vmatprep.subr.mxu0 0.0
      %2023 = vmatpush2.msra.mxu0 0.0
      %2024 = vmatprep.subr.mxu0 0.0
      %2025 = vmatpush2.msra.mxu0 0.0
      %2026 = vmatprep.mubr.f32.mxu0 0.0
      %2027 = vmatmul.mubr.f32.gmra.mxu0 %v1960
      %v2028 = vpop.f32.mrf.mxu0
      %v2029 = vadd.f32 0.0, %v2028
      %v2030 = vpop.f32.mrf.mxu0
      %2031 = vdwg.mxu0
      %v2033 = vsel %vm1593, %v197, 0
      %2035 = vmatprep.subr.mxu0 0.0
      %2036 = vmatpush1.msra.mxu0 0.0
      %2037 = vmatprep.subr.mxu0 0.0
      %2038 = vmatpush1.msra.mxu0 0.0
      %2039 = vmatprep.subr.mxu0 0.0
      %2040 = vmatpush1.msra.mxu0 0.0
      %2041 = vmatprep.subr.mxu0 0.0
      %2042 = vmatpush1.msra.mxu0 0.0
      %2043 = vmatprep.subr.mxu0 0.0
      %2044 = vmatpush1.msra.mxu0 0.0
      %2045 = vmatprep.subr.mxu0 0.0
      %2046 = vmatpush1.msra.mxu0 0.0
      %2047 = vmatprep.subr.mxu0 0.0
      %2048 = vmatpush1.msra.mxu0 0.0
      %2049 = vmatprep.subr.mxu0 0.0
      %2050 = vmatpush1.msra.mxu0 0.0
      %2051 = vmatprep.subr.mxu0 0.0
      %2052 = vmatpush1.msra.mxu0 0.0
      %2053 = vmatprep.subr.mxu0 0.0
      %2054 = vmatpush1.msra.mxu0 0.0
      %2055 = vmatprep.subr.mxu0 0.0
      %2056 = vmatpush1.msra.mxu0 0.0
      %2057 = vmatprep.subr.mxu0 0.0
      %2058 = vmatpush1.msra.mxu0 0.0
      %2059 = vmatprep.subr.mxu0 0.0
      %2060 = vmatpush1.msra.mxu0 0.0
      %2061 = vmatprep.subr.mxu0 0.0
      %2062 = vmatpush1.msra.mxu0 0.0
      %2063 = vmatprep.subr.mxu0 0.0
      %2064 = vmatpush1.msra.mxu0 %v834
      %2065 = vmatprep.subr.mxu0 0.0
      %2066 = vmatpush1.msra.mxu0 %v829
      %2067 = vmatprep.subr.mxu0 0.0
      %2068 = vmatpush2.msra.mxu0 0.0
      %2069 = vmatprep.subr.mxu0 0.0
      %2070 = vmatpush2.msra.mxu0 0.0
      %2071 = vmatprep.subr.mxu0 0.0
      %2072 = vmatpush2.msra.mxu0 0.0
      %2073 = vmatprep.subr.mxu0 0.0
      %2074 = vmatpush2.msra.mxu0 0.0
      %2075 = vmatprep.subr.mxu0 0.0
      %2076 = vmatpush2.msra.mxu0 0.0
      %2077 = vmatprep.subr.mxu0 0.0
      %2078 = vmatpush2.msra.mxu0 0.0
      %2079 = vmatprep.subr.mxu0 0.0
      %2080 = vmatpush2.msra.mxu0 0.0
      %2081 = vmatprep.subr.mxu0 0.0
      %2082 = vmatpush2.msra.mxu0 0.0
      %2083 = vmatprep.subr.mxu0 0.0
      %2084 = vmatpush2.msra.mxu0 0.0
      %2085 = vmatprep.subr.mxu0 0.0
      %2086 = vmatpush2.msra.mxu0 0.0
      %2087 = vmatprep.subr.mxu0 0.0
      %2088 = vmatpush2.msra.mxu0 0.0
      %2089 = vmatprep.subr.mxu0 0.0
      %2090 = vmatpush2.msra.mxu0 0.0
      %2091 = vmatprep.subr.mxu0 0.0
      %2092 = vmatpush2.msra.mxu0 0.0
      %2093 = vmatprep.subr.mxu0 0.0
      %2094 = vmatpush2.msra.mxu0 0.0
      %2095 = vmatprep.subr.mxu0 0.0
      %2096 = vmatpush2.msra.mxu0 0.0
      %2097 = vmatprep.subr.mxu0 0.0
      %2098 = vmatpush2.msra.mxu0 0.0
      %2099 = vmatprep.mubr.f32.mxu0 0.0
      %2100 = vmatmul.mubr.f32.gmra.mxu0 %v2033
      %v2101 = vpop.f32.mrf.mxu0
      %v2102 = vadd.f32 0.0, %v2101
      %v2103 = vpop.f32.mrf.mxu0
      %2104 = vdwg.mxu0
      %v2106 = vsel %vm1593, %v198, 0
      %2108 = vmatprep.subr.mxu0 0.0
      %2109 = vmatpush1.msra.mxu0 0.0
      %2110 = vmatprep.subr.mxu0 0.0
      %2111 = vmatpush1.msra.mxu0 0.0
      %2112 = vmatprep.subr.mxu0 0.0
      %2113 = vmatpush1.msra.mxu0 0.0
      %2114 = vmatprep.subr.mxu0 0.0
      %2115 = vmatpush1.msra.mxu0 0.0
      %2116 = vmatprep.subr.mxu0 0.0
      %2117 = vmatpush1.msra.mxu0 0.0
      %2118 = vmatprep.subr.mxu0 0.0
      %2119 = vmatpush1.msra.mxu0 0.0
      %2120 = vmatprep.subr.mxu0 0.0
      %2121 = vmatpush1.msra.mxu0 0.0
      %2122 = vmatprep.subr.mxu0 0.0
      %2123 = vmatpush1.msra.mxu0 0.0
      %2124 = vmatprep.subr.mxu0 0.0
      %2125 = vmatpush1.msra.mxu0 0.0
      %2126 = vmatprep.subr.mxu0 0.0
      %2127 = vmatpush1.msra.mxu0 0.0
      %2128 = vmatprep.subr.mxu0 0.0
      %2129 = vmatpush1.msra.mxu0 0.0
      %2130 = vmatprep.subr.mxu0 0.0
      %2131 = vmatpush1.msra.mxu0 0.0
      %2132 = vmatprep.subr.mxu0 0.0
      %2133 = vmatpush1.msra.mxu0 0.0
      %2134 = vmatprep.subr.mxu0 0.0
      %2135 = vmatpush1.msra.mxu0 0.0
      %2136 = vmatprep.subr.mxu0 0.0
      %2137 = vmatpush1.msra.mxu0 %v918
      %2138 = vmatprep.subr.mxu0 0.0
      %2139 = vmatpush1.msra.mxu0 %v913
      %2140 = vmatprep.subr.mxu0 0.0
      %2141 = vmatpush2.msra.mxu0 0.0
      %2142 = vmatprep.subr.mxu0 0.0
      %2143 = vmatpush2.msra.mxu0 0.0
      %2144 = vmatprep.subr.mxu0 0.0
      %2145 = vmatpush2.msra.mxu0 0.0
      %2146 = vmatprep.subr.mxu0 0.0
      %2147 = vmatpush2.msra.mxu0 0.0
      %2148 = vmatprep.subr.mxu0 0.0
      %2149 = vmatpush2.msra.mxu0 0.0
      %2150 = vmatprep.subr.mxu0 0.0
      %2151 = vmatpush2.msra.mxu0 0.0
      %2152 = vmatprep.subr.mxu0 0.0
      %2153 = vmatpush2.msra.mxu0 0.0
      %2154 = vmatprep.subr.mxu0 0.0
      %2155 = vmatpush2.msra.mxu0 0.0
      %2156 = vmatprep.subr.mxu0 0.0
      %2157 = vmatpush2.msra.mxu0 0.0
      %2158 = vmatprep.subr.mxu0 0.0
      %2159 = vmatpush2.msra.mxu0 0.0
      %2160 = vmatprep.subr.mxu0 0.0
      %2161 = vmatpush2.msra.mxu0 0.0
      %2162 = vmatprep.subr.mxu0 0.0
      %2163 = vmatpush2.msra.mxu0 0.0
      %2164 = vmatprep.subr.mxu0 0.0
      %2165 = vmatpush2.msra.mxu0 0.0
      %2166 = vmatprep.subr.mxu0 0.0
      %2167 = vmatpush2.msra.mxu0 0.0
      %2168 = vmatprep.subr.mxu0 0.0
      %2169 = vmatpush2.msra.mxu0 0.0
      %2170 = vmatprep.subr.mxu0 0.0
      %2171 = vmatpush2.msra.mxu0 0.0
      %2172 = vmatprep.mubr.f32.mxu0 0.0
      %2173 = vmatmul.mubr.f32.gmra.mxu0 %v2106
      %v2174 = vpop.f32.mrf.mxu0
      %v2175 = vadd.f32 0.0, %v2174
      %v2176 = vpop.f32.mrf.mxu0
      %2177 = vdwg.mxu0
      %vm2178 = vcmask 25600
      %v2179 = vsel %vm2178, %v1664, -inf
      %2180 = vmax.xlane.f32.xlu0 %v2179
      %v2181 = vpop.xlane.xlu0 %2180
      %v2182 = vsel %vm2178, %v1737, -inf
      %2183 = vmax.xlane.f32.xlu0 %v2182
      %v2184 = vpop.xlane.xlu0 %2183
      %v2185 = vsel %vm2178, %v1810, -inf
      %2186 = vmax.xlane.f32.xlu0 %v2185
      %v2187 = vpop.xlane.xlu0 %2186
      %v2188 = vsel %vm2178, %v1883, -inf
      %2189 = vmax.xlane.f32.xlu0 %v2188
      %v2190 = vpop.xlane.xlu0 %2189
      %v2191 = vsel %vm2178, %v1956, -inf
      %2192 = vmax.xlane.f32.xlu0 %v2191
      %v2193 = vpop.xlane.xlu0 %2192
      %v2194 = vsel %vm2178, %v2029, -inf
      %2195 = vmax.xlane.f32.xlu0 %v2194
      %v2196 = vpop.xlane.xlu0 %2195
      %v2197 = vsel %vm2178, %v2102, -inf
      %2198 = vmax.xlane.f32.xlu0 %v2197
      %v2199 = vpop.xlane.xlu0 %2198
      %v2200 = vsel %vm2178, %v2175, -inf
      %2201 = vmax.xlane.f32.xlu0 %v2200
      %v2202 = vpop.xlane.xlu0 %2201
      %v2203 = vsub.f32 %v1664, %v2181
      %v2204 = vsub.f32 %v1737, %v2184
      %v2205 = vsub.f32 %v1810, %v2187
      %v2206 = vsub.f32 %v1883, %v2190
      %v2207 = vsub.f32 %v1956, %v2193
      %v2208 = vsub.f32 %v2029, %v2196
      %v2209 = vsub.f32 %v2102, %v2199
      %v2210 = vsub.f32 %v2175, %v2202
      %v2211 = vmul.f32 %v2203, 1.442695
      %v2212 = vpow.pop %v2211
      %v2213 = vmul.f32 %v2204, 1.442695
      %v2214 = vpow.pop %v2213
      %v2215 = vmul.f32 %v2205, 1.442695
      %v2216 = vpow.pop %v2215
      %v2217 = vmul.f32 %v2206, 1.442695
      %v2218 = vpow.pop %v2217
      %v2219 = vmul.f32 %v2207, 1.442695
      %v2220 = vpow.pop %v2219
      %v2221 = vmul.f32 %v2208, 1.442695
      %v2222 = vpow.pop %v2221
      %v2223 = vmul.f32 %v2209, 1.442695
      %v2224 = vpow.pop %v2223
      %v2225 = vmul.f32 %v2210, 1.442695
      %v2226 = vpow.pop %v2225
      %v2227 = vsel %vm2178, %v2212, 0.0
      %2228 = vadd.xlane.f32.xlu0 %v2227
      %v2229 = vpop.xlane.xlu0 %2228
      %v2230 = vsel %vm2178, %v2214, 0.0
      %2231 = vadd.xlane.f32.xlu0 %v2230
      %v2232 = vpop.xlane.xlu0 %2231
      %v2233 = vsel %vm2178, %v2216, 0.0
      %2234 = vadd.xlane.f32.xlu0 %v2233
      %v2235 = vpop.xlane.xlu0 %2234
      %v2236 = vsel %vm2178, %v2218, 0.0
      %2237 = vadd.xlane.f32.xlu0 %v2236
      %v2238 = vpop.xlane.xlu0 %2237
      %v2239 = vsel %vm2178, %v2220, 0.0
      %2240 = vadd.xlane.f32.xlu0 %v2239
      %v2241 = vpop.xlane.xlu0 %2240
      %v2242 = vsel %vm2178, %v2222, 0.0
      %2243 = vadd.xlane.f32.xlu0 %v2242
      %v2244 = vpop.xlane.xlu0 %2243
      %v2245 = vsel %vm2178, %v2224, 0.0
      %2246 = vadd.xlane.f32.xlu0 %v2245
      %v2247 = vpop.xlane.xlu0 %2246
      %v2248 = vsel %vm2178, %v2226, 0.0
      %2249 = vadd.xlane.f32.xlu0 %v2248
      %v2250 = vpop.xlane.xlu0 %2249
      %v2251 = vrcp.pop %v2229
      %v2252 = vrcp.pop %v2232
      %v2253 = vrcp.pop %v2235
      %v2254 = vrcp.pop %v2238
      %v2255 = vrcp.pop %v2241
      %v2256 = vrcp.pop %v2244
      %v2257 = vrcp.pop %v2247
      %v2258 = vrcp.pop %v2250
      %v2259 = vmul.f32 %v2212, %v2251
      %v2260 = vmul.f32 %v2214, %v2252
      %v2261 = vmul.f32 %v2216, %v2253
      %v2262 = vmul.f32 %v2218, %v2254
      %v2263 = vmul.f32 %v2220, %v2255
      %v2264 = vmul.f32 %v2222, %v2256
      %v2265 = vmul.f32 %v2224, %v2257
      %v2266 = vmul.f32 %v2226, %v2258
      %v2268 = vsel %vm247, %v2259, 0
      %v2271 = vsel %vm247, %v997, 0
      %v2274 = vsel %vm247, %v1002, 0
      %2276 = vmatprep.subr.mxu0 0.0
      %2277 = vmatpush1.xpose.msra.mxu0 0.0
      %2278 = vmatprep.subr.mxu0 0.0
      %2279 = vmatpush1.xpose.msra.mxu0 0.0
      %2280 = vmatprep.subr.mxu0 0.0
      %2281 = vmatpush1.xpose.msra.mxu0 0.0
      %2282 = vmatprep.subr.mxu0 0.0
      %2283 = vmatpush1.xpose.msra.mxu0 0.0
      %2284 = vmatprep.subr.mxu0 0.0
      %2285 = vmatpush1.xpose.msra.mxu0 0.0
      %2286 = vmatprep.subr.mxu0 0.0
      %2287 = vmatpush1.xpose.msra.mxu0 0.0
      %2288 = vmatprep.subr.mxu0 0.0
      %2289 = vmatpush1.xpose.msra.mxu0 0.0
      %2290 = vmatprep.subr.mxu0 0.0
      %2291 = vmatpush1.xpose.msra.mxu0 0.0
      %2292 = vmatprep.subr.mxu0 0.0
      %2293 = vmatpush1.xpose.msra.mxu0 0.0
      %2294 = vmatprep.subr.mxu0 0.0
      %2295 = vmatpush1.xpose.msra.mxu0 0.0
      %2296 = vmatprep.subr.mxu0 0.0
      %2297 = vmatpush1.xpose.msra.mxu0 0.0
      %2298 = vmatprep.subr.mxu0 0.0
      %2299 = vmatpush1.xpose.msra.mxu0 0.0
      %2300 = vmatprep.subr.mxu0 0.0
      %2301 = vmatpush1.xpose.msra.mxu0 0.0
      %2302 = vmatprep.subr.mxu0 0.0
      %2303 = vmatpush1.xpose.msra.mxu0 0.0
      %2304 = vmatprep.subr.mxu0 0.0
      %2305 = vmatpush1.xpose.msra.mxu0 %v2274
      %2306 = vmatprep.subr.mxu0 0.0
      %2307 = vmatpush1.xpose.msra.mxu0 %v2271
      %2308 = vmatprep.subr.mxu0 0.0
      %2309 = vmatpush2.xpose.msra.mxu0 0.0
      %2310 = vmatprep.subr.mxu0 0.0
      %2311 = vmatpush2.xpose.msra.mxu0 0.0
      %2312 = vmatprep.subr.mxu0 0.0
      %2313 = vmatpush2.xpose.msra.mxu0 0.0
      %2314 = vmatprep.subr.mxu0 0.0
      %2315 = vmatpush2.xpose.msra.mxu0 0.0
      %2316 = vmatprep.subr.mxu0 0.0
      %2317 = vmatpush2.xpose.msra.mxu0 0.0
      %2318 = vmatprep.subr.mxu0 0.0
      %2319 = vmatpush2.xpose.msra.mxu0 0.0
      %2320 = vmatprep.subr.mxu0 0.0
      %2321 = vmatpush2.xpose.msra.mxu0 0.0
      %2322 = vmatprep.subr.mxu0 0.0
      %2323 = vmatpush2.xpose.msra.mxu0 0.0
      %2324 = vmatprep.subr.mxu0 0.0
      %2325 = vmatpush2.xpose.msra.mxu0 0.0
      %2326 = vmatprep.subr.mxu0 0.0
      %2327 = vmatpush2.xpose.msra.mxu0 0.0
      %2328 = vmatprep.subr.mxu0 0.0
      %2329 = vmatpush2.xpose.msra.mxu0 0.0
      %2330 = vmatprep.subr.mxu0 0.0
      %2331 = vmatpush2.xpose.msra.mxu0 0.0
      %2332 = vmatprep.subr.mxu0 0.0
      %2333 = vmatpush2.xpose.msra.mxu0 0.0
      %2334 = vmatprep.subr.mxu0 0.0
      %2335 = vmatpush2.xpose.msra.mxu0 0.0
      %2336 = vmatprep.subr.mxu0 0.0
      %2337 = vmatpush2.xpose.msra.mxu0 0.0
      %2338 = vmatprep.subr.mxu0 0.0
      %2339 = vmatpush2.xpose.msra.mxu0 0.0
      %2340 = vmatprep.mubr.f32.mxu0 0.0
      %2341 = vmatmul.mubr.f32.gmra.mxu0 %v2268
      %v2342 = vpop.f32.mrf.mxu0
      %v2343 = vadd.f32 0.0, %v2342
      %v2344 = vpop.f32.mrf.mxu0
      %2345 = vdwg.mxu0
      %v2347 = vsel %vm247, %v2260, 0
      %v2350 = vsel %vm247, %v1081, 0
      %v2353 = vsel %vm247, %v1086, 0
      %2355 = vmatprep.subr.mxu0 0.0
      %2356 = vmatpush1.xpose.msra.mxu0 0.0
      %2357 = vmatprep.subr.mxu0 0.0
      %2358 = vmatpush1.xpose.msra.mxu0 0.0
      %2359 = vmatprep.subr.mxu0 0.0
      %2360 = vmatpush1.xpose.msra.mxu0 0.0
      %2361 = vmatprep.subr.mxu0 0.0
      %2362 = vmatpush1.xpose.msra.mxu0 0.0
      %2363 = vmatprep.subr.mxu0 0.0
      %2364 = vmatpush1.xpose.msra.mxu0 0.0
      %2365 = vmatprep.subr.mxu0 0.0
      %2366 = vmatpush1.xpose.msra.mxu0 0.0
      %2367 = vmatprep.subr.mxu0 0.0
      %2368 = vmatpush1.xpose.msra.mxu0 0.0
      %2369 = vmatprep.subr.mxu0 0.0
      %2370 = vmatpush1.xpose.msra.mxu0 0.0
      %2371 = vmatprep.subr.mxu0 0.0
      %2372 = vmatpush1.xpose.msra.mxu0 0.0
      %2373 = vmatprep.subr.mxu0 0.0
      %2374 = vmatpush1.xpose.msra.mxu0 0.0
      %2375 = vmatprep.subr.mxu0 0.0
      %2376 = vmatpush1.xpose.msra.mxu0 0.0
      %2377 = vmatprep.subr.mxu0 0.0
      %2378 = vmatpush1.xpose.msra.mxu0 0.0
      %2379 = vmatprep.subr.mxu0 0.0
      %2380 = vmatpush1.xpose.msra.mxu0 0.0
      %2381 = vmatprep.subr.mxu0 0.0
      %2382 = vmatpush1.xpose.msra.mxu0 0.0
      %2383 = vmatprep.subr.mxu0 0.0
      %2384 = vmatpush1.xpose.msra.mxu0 %v2353
      %2385 = vmatprep.subr.mxu0 0.0
      %2386 = vmatpush1.xpose.msra.mxu0 %v2350
      %2387 = vmatprep.subr.mxu0 0.0
      %2388 = vmatpush2.xpose.msra.mxu0 0.0
      %2389 = vmatprep.subr.mxu0 0.0
      %2390 = vmatpush2.xpose.msra.mxu0 0.0
      %2391 = vmatprep.subr.mxu0 0.0
      %2392 = vmatpush2.xpose.msra.mxu0 0.0
      %2393 = vmatprep.subr.mxu0 0.0
      %2394 = vmatpush2.xpose.msra.mxu0 0.0
      %2395 = vmatprep.subr.mxu0 0.0
      %2396 = vmatpush2.xpose.msra.mxu0 0.0
      %2397 = vmatprep.subr.mxu0 0.0
      %2398 = vmatpush2.xpose.msra.mxu0 0.0
      %2399 = vmatprep.subr.mxu0 0.0
      %2400 = vmatpush2.xpose.msra.mxu0 0.0
      %2401 = vmatprep.subr.mxu0 0.0
      %2402 = vmatpush2.xpose.msra.mxu0 0.0
      %2403 = vmatprep.subr.mxu0 0.0
      %2404 = vmatpush2.xpose.msra.mxu0 0.0
      %2405 = vmatprep.subr.mxu0 0.0
      %2406 = vmatpush2.xpose.msra.mxu0 0.0
      %2407 = vmatprep.subr.mxu0 0.0
      %2408 = vmatpush2.xpose.msra.mxu0 0.0
      %2409 = vmatprep.subr.mxu0 0.0
      %2410 = vmatpush2.xpose.msra.mxu0 0.0
      %2411 = vmatprep.subr.mxu0 0.0
      %2412 = vmatpush2.xpose.msra.mxu0 0.0
      %2413 = vmatprep.subr.mxu0 0.0
      %2414 = vmatpush2.xpose.msra.mxu0 0.0
      %2415 = vmatprep.subr.mxu0 0.0
      %2416 = vmatpush2.xpose.msra.mxu0 0.0
      %2417 = vmatprep.subr.mxu0 0.0
      %2418 = vmatpush2.xpose.msra.mxu0 0.0
      %2419 = vmatprep.mubr.f32.mxu0 0.0
      %2420 = vmatmul.mubr.f32.gmra.mxu0 %v2347
      %v2421 = vpop.f32.mrf.mxu0
      %v2422 = vadd.f32 0.0, %v2421
      %v2423 = vpop.f32.mrf.mxu0
      %2424 = vdwg.mxu0
      %v2426 = vsel %vm247, %v2261, 0
      %v2429 = vsel %vm247, %v1165, 0
      %v2432 = vsel %vm247, %v1170, 0
      %2434 = vmatprep.subr.mxu0 0.0
      %2435 = vmatpush1.xpose.msra.mxu0 0.0
      %2436 = vmatprep.subr.mxu0 0.0
      %2437 = vmatpush1.xpose.msra.mxu0 0.0
      %2438 = vmatprep.subr.mxu0 0.0
      %2439 = vmatpush1.xpose.msra.mxu0 0.0
      %2440 = vmatprep.subr.mxu0 0.0
      %2441 = vmatpush1.xpose.msra.mxu0 0.0
      %2442 = vmatprep.subr.mxu0 0.0
      %2443 = vmatpush1.xpose.msra.mxu0 0.0
      %2444 = vmatprep.subr.mxu0 0.0
      %2445 = vmatpush1.xpose.msra.mxu0 0.0
      %2446 = vmatprep.subr.mxu0 0.0
      %2447 = vmatpush1.xpose.msra.mxu0 0.0
      %2448 = vmatprep.subr.mxu0 0.0
      %2449 = vmatpush1.xpose.msra.mxu0 0.0
      %2450 = vmatprep.subr.mxu0 0.0
      %2451 = vmatpush1.xpose.msra.mxu0 0.0
      %2452 = vmatprep.subr.mxu0 0.0
      %2453 = vmatpush1.xpose.msra.mxu0 0.0
      %2454 = vmatprep.subr.mxu0 0.0
      %2455 = vmatpush1.xpose.msra.mxu0 0.0
      %2456 = vmatprep.subr.mxu0 0.0
      %2457 = vmatpush1.xpose.msra.mxu0 0.0
      %2458 = vmatprep.subr.mxu0 0.0
      %2459 = vmatpush1.xpose.msra.mxu0 0.0
      %2460 = vmatprep.subr.mxu0 0.0
      %2461 = vmatpush1.xpose.msra.mxu0 0.0
      %2462 = vmatprep.subr.mxu0 0.0
      %2463 = vmatpush1.xpose.msra.mxu0 %v2432
      %2464 = vmatprep.subr.mxu0 0.0
      %2465 = vmatpush1.xpose.msra.mxu0 %v2429
      %2466 = vmatprep.subr.mxu0 0.0
      %2467 = vmatpush2.xpose.msra.mxu0 0.0
      %2468 = vmatprep.subr.mxu0 0.0
      %2469 = vmatpush2.xpose.msra.mxu0 0.0
      %2470 = vmatprep.subr.mxu0 0.0
      %2471 = vmatpush2.xpose.msra.mxu0 0.0
      %2472 = vmatprep.subr.mxu0 0.0
      %2473 = vmatpush2.xpose.msra.mxu0 0.0
      %2474 = vmatprep.subr.mxu0 0.0
      %2475 = vmatpush2.xpose.msra.mxu0 0.0
      %2476 = vmatprep.subr.mxu0 0.0
      %2477 = vmatpush2.xpose.msra.mxu0 0.0
      %2478 = vmatprep.subr.mxu0 0.0
      %2479 = vmatpush2.xpose.msra.mxu0 0.0
      %2480 = vmatprep.subr.mxu0 0.0
      %2481 = vmatpush2.xpose.msra.mxu0 0.0
      %2482 = vmatprep.subr.mxu0 0.0
      %2483 = vmatpush2.xpose.msra.mxu0 0.0
      %2484 = vmatprep.subr.mxu0 0.0
      %2485 = vmatpush2.xpose.msra.mxu0 0.0
      %2486 = vmatprep.subr.mxu0 0.0
      %2487 = vmatpush2.xpose.msra.mxu0 0.0
      %2488 = vmatprep.subr.mxu0 0.0
      %2489 = vmatpush2.xpose.msra.mxu0 0.0
      %2490 = vmatprep.subr.mxu0 0.0
      %2491 = vmatpush2.xpose.msra.mxu0 0.0
      %2492 = vmatprep.subr.mxu0 0.0
      %2493 = vmatpush2.xpose.msra.mxu0 0.0
      %2494 = vmatprep.subr.mxu0 0.0
      %2495 = vmatpush2.xpose.msra.mxu0 0.0
      %2496 = vmatprep.subr.mxu0 0.0
      %2497 = vmatpush2.xpose.msra.mxu0 0.0
      %2498 = vmatprep.mubr.f32.mxu0 0.0
      %2499 = vmatmul.mubr.f32.gmra.mxu0 %v2426
      %v2500 = vpop.f32.mrf.mxu0
      %v2501 = vadd.f32 0.0, %v2500
      %v2502 = vpop.f32.mrf.mxu0
      %2503 = vdwg.mxu0
      %v2505 = vsel %vm247, %v2262, 0
      %v2508 = vsel %vm247, %v1249, 0
      %v2511 = vsel %vm247, %v1254, 0
      %2513 = vmatprep.subr.mxu0 0.0
      %2514 = vmatpush1.xpose.msra.mxu0 0.0
      %2515 = vmatprep.subr.mxu0 0.0
      %2516 = vmatpush1.xpose.msra.mxu0 0.0
      %2517 = vmatprep.subr.mxu0 0.0
      %2518 = vmatpush1.xpose.msra.mxu0 0.0
      %2519 = vmatprep.subr.mxu0 0.0
      %2520 = vmatpush1.xpose.msra.mxu0 0.0
      %2521 = vmatprep.subr.mxu0 0.0
      %2522 = vmatpush1.xpose.msra.mxu0 0.0
      %2523 = vmatprep.subr.mxu0 0.0
      %2524 = vmatpush1.xpose.msra.mxu0 0.0
      %2525 = vmatprep.subr.mxu0 0.0
      %2526 = vmatpush1.xpose.msra.mxu0 0.0
      %2527 = vmatprep.subr.mxu0 0.0
      %2528 = vmatpush1.xpose.msra.mxu0 0.0
      %2529 = vmatprep.subr.mxu0 0.0
      %2530 = vmatpush1.xpose.msra.mxu0 0.0
      %2531 = vmatprep.subr.mxu0 0.0
      %2532 = vmatpush1.xpose.msra.mxu0 0.0
      %2533 = vmatprep.subr.mxu0 0.0
      %2534 = vmatpush1.xpose.msra.mxu0 0.0
      %2535 = vmatprep.subr.mxu0 0.0
      %2536 = vmatpush1.xpose.msra.mxu0 0.0
      %2537 = vmatprep.subr.mxu0 0.0
      %2538 = vmatpush1.xpose.msra.mxu0 0.0
      %2539 = vmatprep.subr.mxu0 0.0
      %2540 = vmatpush1.xpose.msra.mxu0 0.0
      %2541 = vmatprep.subr.mxu0 0.0
      %2542 = vmatpush1.xpose.msra.mxu0 %v2511
      %2543 = vmatprep.subr.mxu0 0.0
      %2544 = vmatpush1.xpose.msra.mxu0 %v2508
      %2545 = vmatprep.subr.mxu0 0.0
      %2546 = vmatpush2.xpose.msra.mxu0 0.0
      %2547 = vmatprep.subr.mxu0 0.0
      %2548 = vmatpush2.xpose.msra.mxu0 0.0
      %2549 = vmatprep.subr.mxu0 0.0
      %2550 = vmatpush2.xpose.msra.mxu0 0.0
      %2551 = vmatprep.subr.mxu0 0.0
      %2552 = vmatpush2.xpose.msra.mxu0 0.0
      %2553 = vmatprep.subr.mxu0 0.0
      %2554 = vmatpush2.xpose.msra.mxu0 0.0
      %2555 = vmatprep.subr.mxu0 0.0
      %2556 = vmatpush2.xpose.msra.mxu0 0.0
      %2557 = vmatprep.subr.mxu0 0.0
      %2558 = vmatpush2.xpose.msra.mxu0 0.0
      %2559 = vmatprep.subr.mxu0 0.0
      %2560 = vmatpush2.xpose.msra.mxu0 0.0
      %2561 = vmatprep.subr.mxu0 0.0
      %2562 = vmatpush2.xpose.msra.mxu0 0.0
      %2563 = vmatprep.subr.mxu0 0.0
      %2564 = vmatpush2.xpose.msra.mxu0 0.0
      %2565 = vmatprep.subr.mxu0 0.0
      %2566 = vmatpush2.xpose.msra.mxu0 0.0
      %2567 = vmatprep.subr.mxu0 0.0
      %2568 = vmatpush2.xpose.msra.mxu0 0.0
      %2569 = vmatprep.subr.mxu0 0.0
      %2570 = vmatpush2.xpose.msra.mxu0 0.0
      %2571 = vmatprep.subr.mxu0 0.0
      %2572 = vmatpush2.xpose.msra.mxu0 0.0
      %2573 = vmatprep.subr.mxu0 0.0
      %2574 = vmatpush2.xpose.msra.mxu0 0.0
      %2575 = vmatprep.subr.mxu0 0.0
      %2576 = vmatpush2.xpose.msra.mxu0 0.0
      %2577 = vmatprep.mubr.f32.mxu0 0.0
      %2578 = vmatmul.mubr.f32.gmra.mxu0 %v2505
      %v2579 = vpop.f32.mrf.mxu0
      %v2580 = vadd.f32 0.0, %v2579
      %v2581 = vpop.f32.mrf.mxu0
      %2582 = vdwg.mxu0
      %v2584 = vsel %vm247, %v2263, 0
      %v2587 = vsel %vm247, %v1333, 0
      %v2590 = vsel %vm247, %v1338, 0
      %2592 = vmatprep.subr.mxu0 0.0
      %2593 = vmatpush1.xpose.msra.mxu0 0.0
      %2594 = vmatprep.subr.mxu0 0.0
      %2595 = vmatpush1.xpose.msra.mxu0 0.0
      %2596 = vmatprep.subr.mxu0 0.0
      %2597 = vmatpush1.xpose.msra.mxu0 0.0
      %2598 = vmatprep.subr.mxu0 0.0
      %2599 = vmatpush1.xpose.msra.mxu0 0.0
      %2600 = vmatprep.subr.mxu0 0.0
      %2601 = vmatpush1.xpose.msra.mxu0 0.0
      %2602 = vmatprep.subr.mxu0 0.0
      %2603 = vmatpush1.xpose.msra.mxu0 0.0
      %2604 = vmatprep.subr.mxu0 0.0
      %2605 = vmatpush1.xpose.msra.mxu0 0.0
      %2606 = vmatprep.subr.mxu0 0.0
      %2607 = vmatpush1.xpose.msra.mxu0 0.0
      %2608 = vmatprep.subr.mxu0 0.0
      %2609 = vmatpush1.xpose.msra.mxu0 0.0
      %2610 = vmatprep.subr.mxu0 0.0
      %2611 = vmatpush1.xpose.msra.mxu0 0.0
      %2612 = vmatprep.subr.mxu0 0.0
      %2613 = vmatpush1.xpose.msra.mxu0 0.0
      %2614 = vmatprep.subr.mxu0 0.0
      %2615 = vmatpush1.xpose.msra.mxu0 0.0
      %2616 = vmatprep.subr.mxu0 0.0
      %2617 = vmatpush1.xpose.msra.mxu0 0.0
      %2618 = vmatprep.subr.mxu0 0.0
      %2619 = vmatpush1.xpose.msra.mxu0 0.0
      %2620 = vmatprep.subr.mxu0 0.0
      %2621 = vmatpush1.xpose.msra.mxu0 %v2590
      %2622 = vmatprep.subr.mxu0 0.0
      %2623 = vmatpush1.xpose.msra.mxu0 %v2587
      %2624 = vmatprep.subr.mxu0 0.0
      %2625 = vmatpush2.xpose.msra.mxu0 0.0
      %2626 = vmatprep.subr.mxu0 0.0
      %2627 = vmatpush2.xpose.msra.mxu0 0.0
      %2628 = vmatprep.subr.mxu0 0.0
      %2629 = vmatpush2.xpose.msra.mxu0 0.0
      %2630 = vmatprep.subr.mxu0 0.0
      %2631 = vmatpush2.xpose.msra.mxu0 0.0
      %2632 = vmatprep.subr.mxu0 0.0
      %2633 = vmatpush2.xpose.msra.mxu0 0.0
      %2634 = vmatprep.subr.mxu0 0.0
      %2635 = vmatpush2.xpose.msra.mxu0 0.0
      %2636 = vmatprep.subr.mxu0 0.0
      %2637 = vmatpush2.xpose.msra.mxu0 0.0
      %2638 = vmatprep.subr.mxu0 0.0
      %2639 = vmatpush2.xpose.msra.mxu0 0.0
      %2640 = vmatprep.subr.mxu0 0.0
      %2641 = vmatpush2.xpose.msra.mxu0 0.0
      %2642 = vmatprep.subr.mxu0 0.0
      %2643 = vmatpush2.xpose.msra.mxu0 0.0
      %2644 = vmatprep.subr.mxu0 0.0
      %2645 = vmatpush2.xpose.msra.mxu0 0.0
      %2646 = vmatprep.subr.mxu0 0.0
      %2647 = vmatpush2.xpose.msra.mxu0 0.0
      %2648 = vmatprep.subr.mxu0 0.0
      %2649 = vmatpush2.xpose.msra.mxu0 0.0
      %2650 = vmatprep.subr.mxu0 0.0
      %2651 = vmatpush2.xpose.msra.mxu0 0.0
      %2652 = vmatprep.subr.mxu0 0.0
      %2653 = vmatpush2.xpose.msra.mxu0 0.0
      %2654 = vmatprep.subr.mxu0 0.0
      %2655 = vmatpush2.xpose.msra.mxu0 0.0
      %2656 = vmatprep.mubr.f32.mxu0 0.0
      %2657 = vmatmul.mubr.f32.gmra.mxu0 %v2584
      %v2658 = vpop.f32.mrf.mxu0
      %v2659 = vadd.f32 0.0, %v2658
      %v2660 = vpop.f32.mrf.mxu0
      %2661 = vdwg.mxu0
      %v2663 = vsel %vm247, %v2264, 0
      %v2666 = vsel %vm247, %v1417, 0
      %v2669 = vsel %vm247, %v1422, 0
      %2671 = vmatprep.subr.mxu0 0.0
      %2672 = vmatpush1.xpose.msra.mxu0 0.0
      %2673 = vmatprep.subr.mxu0 0.0
      %2674 = vmatpush1.xpose.msra.mxu0 0.0
      %2675 = vmatprep.subr.mxu0 0.0
      %2676 = vmatpush1.xpose.msra.mxu0 0.0
      %2677 = vmatprep.subr.mxu0 0.0
      %2678 = vmatpush1.xpose.msra.mxu0 0.0
      %2679 = vmatprep.subr.mxu0 0.0
      %2680 = vmatpush1.xpose.msra.mxu0 0.0
      %2681 = vmatprep.subr.mxu0 0.0
      %2682 = vmatpush1.xpose.msra.mxu0 0.0
      %2683 = vmatprep.subr.mxu0 0.0
      %2684 = vmatpush1.xpose.msra.mxu0 0.0
      %2685 = vmatprep.subr.mxu0 0.0
      %2686 = vmatpush1.xpose.msra.mxu0 0.0
      %2687 = vmatprep.subr.mxu0 0.0
      %2688 = vmatpush1.xpose.msra.mxu0 0.0
      %2689 = vmatprep.subr.mxu0 0.0
      %2690 = vmatpush1.xpose.msra.mxu0 0.0
      %2691 = vmatprep.subr.mxu0 0.0
      %2692 = vmatpush1.xpose.msra.mxu0 0.0
      %2693 = vmatprep.subr.mxu0 0.0
      %2694 = vmatpush1.xpose.msra.mxu0 0.0
      %2695 = vmatprep.subr.mxu0 0.0
      %2696 = vmatpush1.xpose.msra.mxu0 0.0
      %2697 = vmatprep.subr.mxu0 0.0
      %2698 = vmatpush1.xpose.msra.mxu0 0.0
      %2699 = vmatprep.subr.mxu0 0.0
      %2700 = vmatpush1.xpose.msra.mxu0 %v2669
      %2701 = vmatprep.subr.mxu0 0.0
      %2702 = vmatpush1.xpose.msra.mxu0 %v2666
      %2703 = vmatprep.subr.mxu0 0.0
      %2704 = vmatpush2.xpose.msra.mxu0 0.0
      %2705 = vmatprep.subr.mxu0 0.0
      %2706 = vmatpush2.xpose.msra.mxu0 0.0
      %2707 = vmatprep.subr.mxu0 0.0
      %2708 = vmatpush2.xpose.msra.mxu0 0.0
      %2709 = vmatprep.subr.mxu0 0.0
      %2710 = vmatpush2.xpose.msra.mxu0 0.0
      %2711 = vmatprep.subr.mxu0 0.0
      %2712 = vmatpush2.xpose.msra.mxu0 0.0
      %2713 = vmatprep.subr.mxu0 0.0
      %2714 = vmatpush2.xpose.msra.mxu0 0.0
      %2715 = vmatprep.subr.mxu0 0.0
      %2716 = vmatpush2.xpose.msra.mxu0 0.0
      %2717 = vmatprep.subr.mxu0 0.0
      %2718 = vmatpush2.xpose.msra.mxu0 0.0
      %2719 = vmatprep.subr.mxu0 0.0
      %2720 = vmatpush2.xpose.msra.mxu0 0.0
      %2721 = vmatprep.subr.mxu0 0.0
      %2722 = vmatpush2.xpose.msra.mxu0 0.0
      %2723 = vmatprep.subr.mxu0 0.0
      %2724 = vmatpush2.xpose.msra.mxu0 0.0
      %2725 = vmatprep.subr.mxu0 0.0
      %2726 = vmatpush2.xpose.msra.mxu0 0.0
      %2727 = vmatprep.subr.mxu0 0.0
      %2728 = vmatpush2.xpose.msra.mxu0 0.0
      %2729 = vmatprep.subr.mxu0 0.0
      %2730 = vmatpush2.xpose.msra.mxu0 0.0
      %2731 = vmatprep.subr.mxu0 0.0
      %2732 = vmatpush2.xpose.msra.mxu0 0.0
      %2733 = vmatprep.subr.mxu0 0.0
      %2734 = vmatpush2.xpose.msra.mxu0 0.0
      %2735 = vmatprep.mubr.f32.mxu0 0.0
      %2736 = vmatmul.mubr.f32.gmra.mxu0 %v2663
      %v2737 = vpop.f32.mrf.mxu0
      %v2738 = vadd.f32 0.0, %v2737
      %v2739 = vpop.f32.mrf.mxu0
      %2740 = vdwg.mxu0
      %v2742 = vsel %vm247, %v2265, 0
      %v2745 = vsel %vm247, %v1501, 0
      %v2748 = vsel %vm247, %v1506, 0
      %2750 = vmatprep.subr.mxu0 0.0
      %2751 = vmatpush1.xpose.msra.mxu0 0.0
      %2752 = vmatprep.subr.mxu0 0.0
      %2753 = vmatpush1.xpose.msra.mxu0 0.0
      %2754 = vmatprep.subr.mxu0 0.0
      %2755 = vmatpush1.xpose.msra.mxu0 0.0
      %2756 = vmatprep.subr.mxu0 0.0
      %2757 = vmatpush1.xpose.msra.mxu0 0.0
      %2758 = vmatprep.subr.mxu0 0.0
      %2759 = vmatpush1.xpose.msra.mxu0 0.0
      %2760 = vmatprep.subr.mxu0 0.0
      %2761 = vmatpush1.xpose.msra.mxu0 0.0
      %2762 = vmatprep.subr.mxu0 0.0
      %2763 = vmatpush1.xpose.msra.mxu0 0.0
      %2764 = vmatprep.subr.mxu0 0.0
      %2765 = vmatpush1.xpose.msra.mxu0 0.0
      %2766 = vmatprep.subr.mxu0 0.0
      %2767 = vmatpush1.xpose.msra.mxu0 0.0
      %2768 = vmatprep.subr.mxu0 0.0
      %2769 = vmatpush1.xpose.msra.mxu0 0.0
      %2770 = vmatprep.subr.mxu0 0.0
      %2771 = vmatpush1.xpose.msra.mxu0 0.0
      %2772 = vmatprep.subr.mxu0 0.0
      %2773 = vmatpush1.xpose.msra.mxu0 0.0
      %2774 = vmatprep.subr.mxu0 0.0
      %2775 = vmatpush1.xpose.msra.mxu0 0.0
      %2776 = vmatprep.subr.mxu0 0.0
      %2777 = vmatpush1.xpose.msra.mxu0 0.0
      %2778 = vmatprep.subr.mxu0 0.0
      %2779 = vmatpush1.xpose.msra.mxu0 %v2748
      %2780 = vmatprep.subr.mxu0 0.0
      %2781 = vmatpush1.xpose.msra.mxu0 %v2745
      %2782 = vmatprep.subr.mxu0 0.0
      %2783 = vmatpush2.xpose.msra.mxu0 0.0
      %2784 = vmatprep.subr.mxu0 0.0
      %2785 = vmatpush2.xpose.msra.mxu0 0.0
      %2786 = vmatprep.subr.mxu0 0.0
      %2787 = vmatpush2.xpose.msra.mxu0 0.0
      %2788 = vmatprep.subr.mxu0 0.0
      %2789 = vmatpush2.xpose.msra.mxu0 0.0
      %2790 = vmatprep.subr.mxu0 0.0
      %2791 = vmatpush2.xpose.msra.mxu0 0.0
      %2792 = vmatprep.subr.mxu0 0.0
      %2793 = vmatpush2.xpose.msra.mxu0 0.0
      %2794 = vmatprep.subr.mxu0 0.0
      %2795 = vmatpush2.xpose.msra.mxu0 0.0
      %2796 = vmatprep.subr.mxu0 0.0
      %2797 = vmatpush2.xpose.msra.mxu0 0.0
      %2798 = vmatprep.subr.mxu0 0.0
      %2799 = vmatpush2.xpose.msra.mxu0 0.0
      %2800 = vmatprep.subr.mxu0 0.0
      %2801 = vmatpush2.xpose.msra.mxu0 0.0
      %2802 = vmatprep.subr.mxu0 0.0
      %2803 = vmatpush2.xpose.msra.mxu0 0.0
      %2804 = vmatprep.subr.mxu0 0.0
      %2805 = vmatpush2.xpose.msra.mxu0 0.0
      %2806 = vmatprep.subr.mxu0 0.0
      %2807 = vmatpush2.xpose.msra.mxu0 0.0
      %2808 = vmatprep.subr.mxu0 0.0
      %2809 = vmatpush2.xpose.msra.mxu0 0.0
      %2810 = vmatprep.subr.mxu0 0.0
      %2811 = vmatpush2.xpose.msra.mxu0 0.0
      %2812 = vmatprep.subr.mxu0 0.0
      %2813 = vmatpush2.xpose.msra.mxu0 0.0
      %2814 = vmatprep.mubr.f32.mxu0 0.0
      %2815 = vmatmul.mubr.f32.gmra.mxu0 %v2742
      %v2816 = vpop.f32.mrf.mxu0
      %v2817 = vadd.f32 0.0, %v2816
      %v2818 = vpop.f32.mrf.mxu0
      %2819 = vdwg.mxu0
      %v2821 = vsel %vm247, %v2266, 0
      %v2824 = vsel %vm247, %v1585, 0
      %v2827 = vsel %vm247, %v1590, 0
      %2829 = vmatprep.subr.mxu0 0.0
      %2830 = vmatpush1.xpose.msra.mxu0 0.0
      %2831 = vmatprep.subr.mxu0 0.0
      %2832 = vmatpush1.xpose.msra.mxu0 0.0
      %2833 = vmatprep.subr.mxu0 0.0
      %2834 = vmatpush1.xpose.msra.mxu0 0.0
      %2835 = vmatprep.subr.mxu0 0.0
      %2836 = vmatpush1.xpose.msra.mxu0 0.0
      %2837 = vmatprep.subr.mxu0 0.0
      %2838 = vmatpush1.xpose.msra.mxu0 0.0
      %2839 = vmatprep.subr.mxu0 0.0
      %2840 = vmatpush1.xpose.msra.mxu0 0.0
      %2841 = vmatprep.subr.mxu0 0.0
      %2842 = vmatpush1.xpose.msra.mxu0 0.0
      %2843 = vmatprep.subr.mxu0 0.0
      %2844 = vmatpush1.xpose.msra.mxu0 0.0
      %2845 = vmatprep.subr.mxu0 0.0
      %2846 = vmatpush1.xpose.msra.mxu0 0.0
      %2847 = vmatprep.subr.mxu0 0.0
      %2848 = vmatpush1.xpose.msra.mxu0 0.0
      %2849 = vmatprep.subr.mxu0 0.0
      %2850 = vmatpush1.xpose.msra.mxu0 0.0
      %2851 = vmatprep.subr.mxu0 0.0
      %2852 = vmatpush1.xpose.msra.mxu0 0.0
      %2853 = vmatprep.subr.mxu0 0.0
      %2854 = vmatpush1.xpose.msra.mxu0 0.0
      %2855 = vmatprep.subr.mxu0 0.0
      %2856 = vmatpush1.xpose.msra.mxu0 0.0
      %2857 = vmatprep.subr.mxu0 0.0
      %2858 = vmatpush1.xpose.msra.mxu0 %v2827
      %2859 = vmatprep.subr.mxu0 0.0
      %2860 = vmatpush1.xpose.msra.mxu0 %v2824
      %2861 = vmatprep.subr.mxu0 0.0
      %2862 = vmatpush2.xpose.msra.mxu0 0.0
      %2863 = vmatprep.subr.mxu0 0.0
      %2864 = vmatpush2.xpose.msra.mxu0 0.0
      %2865 = vmatprep.subr.mxu0 0.0
      %2866 = vmatpush2.xpose.msra.mxu0 0.0
      %2867 = vmatprep.subr.mxu0 0.0
      %2868 = vmatpush2.xpose.msra.mxu0 0.0
      %2869 = vmatprep.subr.mxu0 0.0
      %2870 = vmatpush2.xpose.msra.mxu0 0.0
      %2871 = vmatprep.subr.mxu0 0.0
      %2872 = vmatpush2.xpose.msra.mxu0 0.0
      %2873 = vmatprep.subr.mxu0 0.0
      %2874 = vmatpush2.xpose.msra.mxu0 0.0
      %2875 = vmatprep.subr.mxu0 0.0
      %2876 = vmatpush2.xpose.msra.mxu0 0.0
      %2877 = vmatprep.subr.mxu0 0.0
      %2878 = vmatpush2.xpose.msra.mxu0 0.0
      %2879 = vmatprep.subr.mxu0 0.0
      %2880 = vmatpush2.xpose.msra.mxu0 0.0
      %2881 = vmatprep.subr.mxu0 0.0
      %2882 = vmatpush2.xpose.msra.mxu0 0.0
      %2883 = vmatprep.subr.mxu0 0.0
      %2884 = vmatpush2.xpose.msra.mxu0 0.0
      %2885 = vmatprep.subr.mxu0 0.0
      %2886 = vmatpush2.xpose.msra.mxu0 0.0
      %2887 = vmatprep.subr.mxu0 0.0
      %2888 = vmatpush2.xpose.msra.mxu0 0.0
      %2889 = vmatprep.subr.mxu0 0.0
      %2890 = vmatpush2.xpose.msra.mxu0 0.0
      %2891 = vmatprep.subr.mxu0 0.0
      %2892 = vmatpush2.xpose.msra.mxu0 0.0
      %2893 = vmatprep.mubr.f32.mxu0 0.0
      %2894 = vmatmul.mubr.f32.gmra.mxu0 %v2821
      %v2895 = vpop.f32.mrf.mxu0
      %v2896 = vadd.f32 0.0, %v2895
      %v2897 = vpop.f32.mrf.mxu0
      %2898 = vdwg.mxu0
      %vm2899 = vcmask 123904
      %2900 = vst.msk [vmem:[%s190] sm:$0x3] %vm2899, %v2343
      %2901 = vst.msk [vmem:[%s190 + $0x2] sm:$0x3] %vm2899, %v2422
      %2902 = vst.msk [vmem:[%s190 + $0x4] sm:$0x3] %vm2899, %v2501
      %2903 = vst.msk [vmem:[%s190 + $0x6] sm:$0x3] %vm2899, %v2580
      %2904 = vst.msk [vmem:[%s190 + $0x8] sm:$0x3] %vm2899, %v2659
      %2905 = vst.msk [vmem:[%s190 + $0xa] sm:$0x3] %vm2899, %v2738
      %2906 = vst.msk [vmem:[%s190 + $0xc] sm:$0x3] %vm2899, %v2817
      %2907 = vst.msk [vmem:[%s190 + $0xe] sm:$0x3] %vm2899, %v2896
      %p2908 = scmp.lt.s32.totalorder %s14, 1
      %s2909 = scalar_select %p2908, %s14, 1
      %s2910 = smul.addr %s2909, 8
      %s2911 = smul.addr %s2910, 2
      %s2912 = scalar_lea.vmem %s3, %s2911
      // Predicated region
      $region33: #{block_cross_forward.4} parent=31 // pred_check
        %p2913 = pneg %p105
      $region34: #{block_cross_forward.4} parent=31 // pred_check_branch
        %2915 = sbr.rel (%p2913) target = $region36
      $region35: #{block_cross_forward.4} parent=31 // pred_region
        _
      $region36: #{block_cross_forward.4} parent=31 // pred_fallthru
        _
    $region32: #{block_cross_forward.4} parent=5 // pred_fallthru
      _
    %p2916 = scmp.le.s32.totalorder 2, %s9
    // Predicated region
    $region37: #{block_cross_forward.4} parent=5 // pred_check
      %p2917 = pneg %p2916
    $region38: #{block_cross_forward.4} parent=5 // pred_check_branch
      %2919 = sbr.rel (%p2917) target = $region40
    $region39: #{block_cross_forward.4} parent=5 // pred_region
      %s2920 = ssub.s32 %s9, 2
      // Predicated region
      $region41: #{block_cross_forward.4} parent=39 // pred_check
        %p2921 = pneg %p111
      $region42: #{block_cross_forward.4} parent=39 // pred_check_branch
        %2923 = sbr.rel (%p2921) target = $region44
      $region43: #{block_cross_forward.4} parent=39 // pred_region
        %p2924 = scmp.lt.s32.totalorder %s15, 1
        %s2925 = scalar_select %p2924, %s15, 1
        %s2926 = smul.addr %s2925, 8
        %s2927 = smul.addr %s2926, 2
        %s2928 = scalar_lea.vmem %s3, %s2927
      $region44: #{block_cross_forward.4} parent=39 // pred_fallthru
        _
    $region40: #{block_cross_forward.4} parent=5 // pred_fallthru
      _
  $region6: #{block_cross_forward.4} parent=0 // loop_footer
    %s13 = sadd.s32 1, %s9
  $region7: #{block_cross_forward.4} parent=0 // loop_footer_branch
    %8 = sbr.rel target = $region3
  $region8: #{block_cross_forward.4} parent=0 // loop_exit
    _

</llo_original>
